<compile_context>
chip_gen: v6e
topology: v6e:2x2x1
jax: 0.10.0
libtpu: 0.0.40
codegen_flags: <defaults>
</compile_context>

<pallas_src>
import functools

import jax
import jax.numpy as jnp
from jax import lax
from jax.experimental import pallas as pl
from jax.experimental.pallas import tpu as pltpu


def _vmem_limit_bytes() -> int:
    """~75% of the device's VMEM, capped at 96 MiB; safe 48 MiB fallback."""
    try:
        cap = int(pltpu.get_tpu_info().vmem_capacity_bytes)
    except Exception:
        cap = 64 * 1024 * 1024
    return min((cap * 3) // 4, 96 * 1024 * 1024)


_VMEM_LIMIT = _vmem_limit_bytes()
_TILE_H = 16     # good default for v5e/v6e (128 MiB VMEM); prefer 8 on v7x (64 MiB)


def _rcu_kernel(x_hbm, w1_ref, b1_ref, w2_ref, b2_ref, o_ref,
                x_tile, inter, dma_sem, *, h_valid_last):
    """One (batch, row-tile) step of the residual conv unit.

    x_hbm  : (B, Hp+4, W+2, C) f32   zero-padded input, left in HBM (pl.ANY)
    w*_ref : (3, 3, C, C)      bf16  conv weights (HWIO), resident in VMEM
    b*_ref : (1, C)            f32   conv biases
    o_ref  : (T, W, C)         f32   output row tile (batch dim squeezed)
    x_tile : (2, T+4, W+2, C)  f32   double-buffered halo'd input row tiles
    inter  : (T+2, W+2, C)     bf16  relu(conv1) staged with a 1-pixel halo
    dma_sem: (2,)                    DMA completion semaphores, one per slot
    h_valid_last : number of real image rows in the last row tile (ragged H)
    """
    T, W, C = o_ref.shape
    b = pl.program_id(0)
    r = pl.program_id(1)
    nr = pl.num_programs(1)
    slot = r % 2

    # ---------------- double-buffered fetch of the halo'd input row tile ----------
    def start_fetch(row_start, slot_idx):
        pltpu.make_async_copy(
            x_hbm.at[b, pl.ds(row_start, T + 4)],
            x_tile.at[slot_idx],
            dma_sem.at[slot_idx],
        ).start()

    @pl.when(r == 0)                       # first tile of this batch: nothing was
    def _():                               # prefetched for it, issue the DMA now.
        start_fetch(0, slot)

    pltpu.make_async_copy(                 # wait for this step's tile (started just
        x_hbm.at[b, pl.ds(pl.multiple_of(r * T, T), T + 4)],   # above, or prefetched
        x_tile.at[slot],                   # by the previous row-tile step).
        dma_sem.at[slot],
    ).wait()

    @pl.when(r + 1 < nr)                   # hide the next tile's HBM read behind the
    def _():                               # MXU work of this step (same batch only,
        start_fetch(pl.multiple_of((r + 1) * T, T), 1 - slot)   # so always awaited).

    # ---------------- conv1 over relu(x): 9 MXU taps, bf16 operands ---------------
    # Only 3 column-shifted (sublane-offset) copies are built; the 3 dy taps per dx
    # are cheap leading-dim row slices.  relu + bf16 cast happen per shifted copy so
    # no full-tile f32 relu(x) value stays live across all taps.
    m1 = (T + 2) * W
    acc1 = None
    for dx in range(3):
        shifted = jnp.maximum(
            x_tile[slot, :, dx:dx + W, :], 0.0).astype(jnp.bfloat16)   # (T+4, W, C)
        for dy in range(3):
            patch = shifted[dy:dy + T + 2].reshape(m1, C)
            tap = jnp.dot(patch, w1_ref[dy, dx],
                          preferred_element_type=jnp.float32)
            acc1 = tap if acc1 is None else acc1 + tap
    a2 = jnp.maximum(acc1 + b1_ref[...], 0.0)                 # bias + relu in f32
    a2 = a2.astype(jnp.bfloat16).reshape(T + 2, W, C)

    # ---------------- stage relu(conv1) with a 1-pixel zero halo -------------------
    inter[:, 1:W + 1, :] = a2
    zero_col = jnp.zeros((T + 2, 1, C), jnp.bfloat16)
    inter[:, 0:1, :] = zero_col
    inter[:, W + 1:W + 2, :] = zero_col

    @pl.when(r == 0)                        # halo row above the image (SAME padding)
    def _():
        inter[0:1, :, :] = jnp.zeros((1, W + 2, C), jnp.bfloat16)

    @pl.when(r == nr - 1)                   # everything at/below the true image
    def _():                                # bottom: conv halo row + ragged-H rows
        inter[h_valid_last + 1:T + 2, :, :] = jnp.zeros(
            (T + 1 - h_valid_last, W + 2, C), jnp.bfloat16)

    # ---------------- conv2: 9 MXU taps over the staged bf16 intermediate ----------
    m2 = T * W
    acc2 = None
    for dx in range(3):
        shifted = inter[:, dx:dx + W, :]                               # (T+2, W, C)
        for dy in range(3):
            patch = shifted[dy:dy + T].reshape(m2, C)
            tap = jnp.dot(patch, w2_ref[dy, dx],
                          preferred_element_type=jnp.float32)
            acc2 = tap if acc2 is None else acc2 + tap
    y = (acc2 + b2_ref[...]).reshape(T, W, C)                          # f32 bias add

    # ---------------- residual add with the exact f32 pre-activation input ---------
    # TODO(synk): this is a sublane-offset-1 slice (one relayout per step); only worth
    # removing if vld/vst turns out to be the binding slot after the dx-shift fix.
    x_res = x_tile[slot, 2:T + 2, 1:W + 1, :]
    o_ref[...] = (y + x_res).astype(o_ref.dtype)


def residual_conv_unit_nhwc(x, w1, b1, w2, b2, *, tile_h=_TILE_H):
    """NHWC fast path (no full-tensor layout transposes).

    x: (B, H, W, C) f32;  w1/w2: (3, 3, C, C) HWIO;  b1/b2: (C,).
    """
    B, H, W, C = x.shape

    Hp = pl.cdiv(H, tile_h) * tile_h            # pad H so every row tile is full-size
    num_r = Hp // tile_h
    h_valid_last = H - (num_r - 1) * tile_h

    # Channels padded to a multiple of 128: lane-dense stores and aligned MXU K/N.
    # No-op for real DPT feature counts (e.g. 256); padded channels stay exactly zero.
    cpad = pl.cdiv(C, 128) * 128
    pc = cpad - C

    x = x.astype(jnp.float32)
    # 2-row / 1-col conv halo plus ragged-H padding rows at the bottom (all zeros).
    xp = jnp.pad(x, ((0, 0), (2, 2 + Hp - H), (1, 1), (0, pc)))
    # Weights go to bf16 for the MXU taps; biases stay f32 (added after accumulation).
    w1p = jnp.pad(w1.astype(jnp.float32),
                  ((0, 0), (0, 0), (0, pc), (0, pc))).astype(jnp.bfloat16)
    w2p = jnp.pad(w2.astype(jnp.float32),
                  ((0, 0), (0, 0), (0, pc), (0, pc))).astype(jnp.bfloat16)
    b1p = jnp.pad(b1.astype(jnp.float32), ((0, pc),)).reshape(1, cpad)
    b2p = jnp.pad(b2.astype(jnp.float32), ((0, pc),)).reshape(1, cpad)

    kernel = functools.partial(_rcu_kernel, h_valid_last=h_valid_last)

    out = pl.pallas_call(
        kernel,
        out_shape=jax.ShapeDtypeStruct((B, Hp, W, cpad), jnp.float32),
        grid_spec=pltpu.PrefetchScalarGridSpec(
            num_scalar_prefetch=0,
            grid=(B, num_r),
            in_specs=[
                pl.BlockSpec(memory_space=pl.ANY),            # padded x stays in HBM
                # Constant-index weight/bias blocks are only DMA'd once (block index
                # never changes).  TODO(synk): single-buffer them (pl.Buffered(1) or a
                # whole-array VMEM spec) to reclaim the ~2.4 MiB bf16 second buffer.
                pl.BlockSpec((3, 3, cpad, cpad), lambda b, r: (0, 0, 0, 0)),
                pl.BlockSpec((1, cpad), lambda b, r: (0, 0)),
                pl.BlockSpec((3, 3, cpad, cpad), lambda b, r: (0, 0, 0, 0)),
                pl.BlockSpec((1, cpad), lambda b, r: (0, 0)),
            ],
            out_specs=pl.BlockSpec((None, tile_h, W, cpad),
                                   lambda b, r: (b, r, 0, 0)),
            scratch_shapes=[
                pltpu.VMEM((2, tile_h + 4, W + 2, cpad), jnp.float32),  # 2-slot input
                pltpu.VMEM((tile_h + 2, W + 2, cpad), jnp.bfloat16),    # relu(conv1)
                pltpu.SemaphoreType.DMA((2,)),
            ],
        ),
        compiler_params=pltpu.CompilerParams(
            # Batch axis can split across v7x's two TensorCores; the row axis stays
            # sequential per core so the cross-step input prefetch is always awaited.
            dimension_semantics=("parallel", "arbitrary"),
            vmem_limit_bytes=_VMEM_LIMIT,
        ),
    )(xp, w1p, b1p, w2p, b2p)

    return out[:, :H, :, :C]


@functools.partial(jax.jit, static_argnames=("tile_h",))
def residual_conv_unit(x_nchw, w1, b1, w2, b2, *, tile_h=_TILE_H):
    """Forward pass matching ResidualConvUnit_custom(features, ReLU, bn=False).

    x_nchw: (B, C, H, W);  w1/w2: (3, 3, C, C) HWIO;  b1/b2: (C,).
    NCHW adapter around the NHWC fast path (PyTorch layout kept at the boundary only).
    """
    x = jnp.transpose(x_nchw, (0, 2, 3, 1))
    out = residual_conv_unit_nhwc(x, w1, b1, w2, b2, tile_h=tile_h)
    return jnp.transpose(out, (0, 3, 1, 2))


def _reference_forward(x_nchw, w1, b1, w2, b2):
    """Plain-JAX reference (lax conv) for correctness checking."""
    x = jnp.transpose(x_nchw, (0, 2, 3, 1))                          # NHWC
    dn = ('NHWC', 'HWIO', 'NHWC')

    def conv(a, w, b):
        y = lax.conv_general_dilated(a, w, window_strides=(1, 1),
                                     padding='SAME', dimension_numbers=dn)
        return y + b

    a = jnp.maximum(x, 0.0)
    y = conv(a, w1, b1)
    y = jnp.maximum(y, 0.0)
    y = conv(y, w2, b2)
    out = y + x
    return jnp.transpose(out, (0, 3, 1, 2))


if __name__ == "__main__":
    # Module config: features=C, activation=ReLU, bn=False, groups=1.
    # H is deliberately not a multiple of tile_h to exercise the ragged-H path, and
    # tile_h=8 (< H) exercises multi-row-tile halos and the cross-step DMA prefetch.
    B, C, H, W = 2, 4, 20, 16

    key = jax.random.PRNGKey(0)
    kx, k1, k2, k3, k4 = jax.random.split(key, 5)

    x = jax.random.normal(kx, (B, C, H, W), dtype=jnp.float32)
    # Conv2d weights: PyTorch stores (Cout, Cin, 3, 3); we keep HWIO = (3, 3, Cin, Cout).
    w1 = 0.1 * jax.random.normal(k1, (3, 3, C, C), dtype=jnp.float32)
    b1 = 0.1 * jax.random.normal(k2, (C,), dtype=jnp.float32)
    w2 = 0.1 * jax.random.normal(k3, (3, 3, C, C), dtype=jnp.float32)
    b2 = 0.1 * jax.random.normal(k4, (C,), dtype=jnp.float32)

    out = residual_conv_unit(x, w1, b1, w2, b2, tile_h=8)
    jax.block_until_ready(out)

    ref = _reference_forward(x, w1, b1, w2, b2)
    assert out.shape == (B, C, H, W)
    # Tolerance covers bf16 matmul operands (f32 accumulation, f32 bias + residual).
    assert jnp.allclose(out, ref, atol=2e-2, rtol=2e-2), "mismatch vs reference"

    print("KERNEL_OK")
</pallas_src>

<mosaic_0001>
module attributes {stable_mosaic.version = 11 : i64} {
  func.func @_rcu_kernel(%arg0: i32, %arg1: i32, %arg2: memref<2x28x18x128xf32, #tpu.memory_space<any>>, %arg3: memref<3x3x128x128xbf16, #tpu.memory_space<vmem>>, %arg4: memref<1x128xf32, #tpu.memory_space<vmem>>, %arg5: memref<3x3x128x128xbf16, #tpu.memory_space<vmem>>, %arg6: memref<1x128xf32, #tpu.memory_space<vmem>>, %arg7: memref<1x8x16x128xf32, #tpu.memory_space<vmem>>, %arg8: memref<2x12x18x128xf32, #tpu.memory_space<vmem>>, %arg9: memref<10x18x128xbf16, #tpu.memory_space<vmem>>, %arg10: memref<2x!tpu.dma_semaphore, #tpu.memory_space<semaphore_mem>>) attributes {dimension_semantics = [#tpu.dimension_semantics<parallel>, #tpu.dimension_semantics<arbitrary>], iteration_bounds = array<i64: 2, 3>, scalar_prefetch = 0 : i64, scratch_operands = 3 : i64, tpu.core_type = #tpu.core_type<tc>, window_params = [{}, {pipeline_mode = #tpu.pipeline_mode<synchronous>, transform_indices = @transform_1, window_bounds = array<i64: 3, 3, 128, 128>}, {pipeline_mode = #tpu.pipeline_mode<synchronous>, transform_indices = @transform_2, window_bounds = array<i64: 1, 128>}, {pipeline_mode = #tpu.pipeline_mode<synchronous>, transform_indices = @transform_3, window_bounds = array<i64: 3, 3, 128, 128>}, {pipeline_mode = #tpu.pipeline_mode<synchronous>, transform_indices = @transform_4, window_bounds = array<i64: 1, 128>}, {transform_indices = @transform_5, window_bounds = array<i64: 1, 8, 16, 128>}]} {
    %c2_i32 = arith.constant 2 : i32
    %c0_i32 = arith.constant 0 : i32
    %0 = arith.cmpi eq, %c2_i32, %c0_i32 : i32
    %c1_i32 = arith.constant 1 : i32
    %1 = arith.select %0, %c1_i32, %c2_i32 : i32
    %2 = arith.remsi %arg1, %1 : i32
    %c0_i32_0 = arith.constant 0 : i32
    %3 = arith.cmpi ne, %2, %c0_i32_0 : i32
    %c0_i32_1 = arith.constant 0 : i32
    %4 = arith.cmpi slt, %2, %c0_i32_1 : i32
    %c0_i32_2 = arith.constant 0 : i32
    %5 = arith.cmpi slt, %1, %c0_i32_2 : i32
    %6 = arith.xori %4, %5 : i1
    %7 = arith.andi %6, %3 : i1
    %8 = arith.addi %2, %1 : i32
    %9 = arith.select %7, %8, %2 : i32
    %c0_i32_3 = arith.constant 0 : i32
    %10 = arith.cmpi eq, %arg1, %c0_i32_3 : i32
    %11 = arith.extui %10 : i1 to i32
    %c0_i32_4 = arith.constant 0 : i32
    %12 = arith.cmpi ne, %11, %c0_i32_4 : i32
    scf.if %12 {
      %c0_i32_144 = arith.constant 0 : i32
      %c0_i32_145 = arith.constant 0 : i32
      %c0_i32_146 = arith.constant 0 : i32
      %180 = tpu.memref_slice %arg2[%arg0, %c0_i32_144, %c0_i32_145, %c0_i32_146] : memref<2x28x18x128xf32, #tpu.memory_space<any>> -> memref<1x12x18x128xf32, #tpu.memory_space<any>>
      %181 = tpu.memref_squeeze %180 : memref<1x12x18x128xf32, #tpu.memory_space<any>> -> memref<12x18x128xf32, #tpu.memory_space<any>>
      %c0_i32_147 = arith.constant 0 : i32
      %c0_i32_148 = arith.constant 0 : i32
      %c0_i32_149 = arith.constant 0 : i32
      %182 = tpu.memref_slice %arg8[%9, %c0_i32_147, %c0_i32_148, %c0_i32_149] : memref<2x12x18x128xf32, #tpu.memory_space<vmem>> -> memref<1x12x18x128xf32, #tpu.memory_space<vmem>>
      %183 = tpu.memref_squeeze %182 : memref<1x12x18x128xf32, #tpu.memory_space<vmem>> -> memref<12x18x128xf32, #tpu.memory_space<vmem>>
      %184 = tpu.memref_slice %arg10[%9] : memref<2x!tpu.dma_semaphore, #tpu.memory_space<semaphore_mem>> -> memref<1x!tpu.dma_semaphore, #tpu.memory_space<semaphore_mem>>
      %185 = tpu.memref_squeeze %184 : memref<1x!tpu.dma_semaphore, #tpu.memory_space<semaphore_mem>> -> memref<!tpu.dma_semaphore, #tpu.memory_space<semaphore_mem>>
      tpu.enqueue_dma source(%181 : memref<12x18x128xf32, #tpu.memory_space<any>>) target(%183 : memref<12x18x128xf32, #tpu.memory_space<vmem>>) target_semaphore(%185 : memref<!tpu.dma_semaphore, #tpu.memory_space<semaphore_mem>>)
    } else {
    }
    %c8_i32 = arith.constant 8 : i32
    %13 = arith.muli %arg1, %c8_i32 : i32
    %14 = tpu.assume_multiple %13, 8 : i32
    %c0_i32_5 = arith.constant 0 : i32
    %c0_i32_6 = arith.constant 0 : i32
    %15 = tpu.memref_slice %arg2[%arg0, %14, %c0_i32_5, %c0_i32_6] : memref<2x28x18x128xf32, #tpu.memory_space<any>> -> memref<1x12x18x128xf32, #tpu.memory_space<any>>
    %16 = tpu.memref_squeeze %15 : memref<1x12x18x128xf32, #tpu.memory_space<any>> -> memref<12x18x128xf32, #tpu.memory_space<any>>
    %c0_i32_7 = arith.constant 0 : i32
    %c0_i32_8 = arith.constant 0 : i32
    %c0_i32_9 = arith.constant 0 : i32
    %17 = tpu.memref_slice %arg8[%9, %c0_i32_7, %c0_i32_8, %c0_i32_9] : memref<2x12x18x128xf32, #tpu.memory_space<vmem>> -> memref<1x12x18x128xf32, #tpu.memory_space<vmem>>
    %18 = tpu.memref_squeeze %17 : memref<1x12x18x128xf32, #tpu.memory_space<vmem>> -> memref<12x18x128xf32, #tpu.memory_space<vmem>>
    %19 = tpu.memref_slice %arg10[%9] : memref<2x!tpu.dma_semaphore, #tpu.memory_space<semaphore_mem>> -> memref<1x!tpu.dma_semaphore, #tpu.memory_space<semaphore_mem>>
    %20 = tpu.memref_squeeze %19 : memref<1x!tpu.dma_semaphore, #tpu.memory_space<semaphore_mem>> -> memref<!tpu.dma_semaphore, #tpu.memory_space<semaphore_mem>>
    tpu.wait_dma2 semaphore(%20 : memref<!tpu.dma_semaphore, #tpu.memory_space<semaphore_mem>>) src(%16 : memref<12x18x128xf32, #tpu.memory_space<any>>) dst(%18 : memref<12x18x128xf32, #tpu.memory_space<vmem>>)
    %c1_i32_10 = arith.constant 1 : i32
    %21 = arith.addi %arg1, %c1_i32_10 : i32
    %c3_i32 = arith.constant 3 : i32
    %22 = arith.cmpi slt, %21, %c3_i32 : i32
    %23 = arith.extui %22 : i1 to i32
    %c0_i32_11 = arith.constant 0 : i32
    %24 = arith.cmpi ne, %23, %c0_i32_11 : i32
    scf.if %24 {
      %c1_i32_144 = arith.constant 1 : i32
      %180 = arith.addi %arg1, %c1_i32_144 : i32
      %c8_i32_145 = arith.constant 8 : i32
      %181 = arith.muli %180, %c8_i32_145 : i32
      %182 = tpu.assume_multiple %181, 8 : i32
      %c1_i32_146 = arith.constant 1 : i32
      %183 = arith.subi %c1_i32_146, %9 : i32
      %c0_i32_147 = arith.constant 0 : i32
      %c0_i32_148 = arith.constant 0 : i32
      %184 = tpu.memref_slice %arg2[%arg0, %182, %c0_i32_147, %c0_i32_148] : memref<2x28x18x128xf32, #tpu.memory_space<any>> -> memref<1x12x18x128xf32, #tpu.memory_space<any>>
      %185 = tpu.memref_squeeze %184 : memref<1x12x18x128xf32, #tpu.memory_space<any>> -> memref<12x18x128xf32, #tpu.memory_space<any>>
      %c0_i32_149 = arith.constant 0 : i32
      %c0_i32_150 = arith.constant 0 : i32
      %c0_i32_151 = arith.constant 0 : i32
      %186 = tpu.memref_slice %arg8[%183, %c0_i32_149, %c0_i32_150, %c0_i32_151] : memref<2x12x18x128xf32, #tpu.memory_space<vmem>> -> memref<1x12x18x128xf32, #tpu.memory_space<vmem>>
      %187 = tpu.memref_squeeze %186 : memref<1x12x18x128xf32, #tpu.memory_space<vmem>> -> memref<12x18x128xf32, #tpu.memory_space<vmem>>
      %188 = tpu.memref_slice %arg10[%183] : memref<2x!tpu.dma_semaphore, #tpu.memory_space<semaphore_mem>> -> memref<1x!tpu.dma_semaphore, #tpu.memory_space<semaphore_mem>>
      %189 = tpu.memref_squeeze %188 : memref<1x!tpu.dma_semaphore, #tpu.memory_space<semaphore_mem>> -> memref<!tpu.dma_semaphore, #tpu.memory_space<semaphore_mem>>
      tpu.enqueue_dma source(%185 : memref<12x18x128xf32, #tpu.memory_space<any>>) target(%187 : memref<12x18x128xf32, #tpu.memory_space<vmem>>) target_semaphore(%189 : memref<!tpu.dma_semaphore, #tpu.memory_space<semaphore_mem>>)
    } else {
    }
    %25 = arith.index_cast %9 : i32 to index
    %c0 = arith.constant 0 : index
    %c0_12 = arith.constant 0 : index
    %c0_13 = arith.constant 0 : index
    %26 = vector.load %arg8[%25, %c0, %c0_12, %c0_13] : memref<2x12x18x128xf32, #tpu.memory_space<vmem>>, vector<1x12x16x128xf32>
    %27 = vector.shape_cast %26 : vector<1x12x16x128xf32> to vector<12x16x128xf32>
    %cst = arith.constant 0.000000e+00 : f32
    %28 = vector.broadcast %cst : f32 to vector<12x16x128xf32>
    %29 = arith.maximumf %27, %28 : vector<12x16x128xf32>
    %30 = arith.truncf %29 : vector<12x16x128xf32> to vector<12x16x128xbf16>
    %31 = vector.extract_strided_slice %30 {offsets = [0, 0, 0], sizes = [10, 16, 128], strides = [1, 1, 1]} : vector<12x16x128xbf16> to vector<10x16x128xbf16>
    %32 = vector.shape_cast %31 : vector<10x16x128xbf16> to vector<160x128xbf16>
    %c0_14 = arith.constant 0 : index
    %c0_15 = arith.constant 0 : index
    %c0_16 = arith.constant 0 : index
    %c0_17 = arith.constant 0 : index
    %33 = vector.load %arg3[%c0_14, %c0_15, %c0_16, %c0_17] : memref<3x3x128x128xbf16, #tpu.memory_space<vmem>>, vector<1x1x128x128xbf16>
    %34 = vector.shape_cast %33 : vector<1x1x128x128xbf16> to vector<128x128xbf16>
    %cst_18 = arith.constant dense<0.000000e+00> : vector<160x128xf32>
    %35 = tpu.matmul %32, %34, %cst_18 {dimension_numbers = #tpu.dot_dimension_numbers<[1], [0], [0], [1], [0, 0, 1, 1], [], []>} : vector<160x128xbf16>, vector<128x128xbf16>, vector<160x128xf32> -> vector<160x128xf32>
    %36 = vector.extract_strided_slice %30 {offsets = [1, 0, 0], sizes = [10, 16, 128], strides = [1, 1, 1]} : vector<12x16x128xbf16> to vector<10x16x128xbf16>
    %37 = vector.shape_cast %36 : vector<10x16x128xbf16> to vector<160x128xbf16>
    %c1 = arith.constant 1 : index
    %c0_19 = arith.constant 0 : index
    %c0_20 = arith.constant 0 : index
    %c0_21 = arith.constant 0 : index
    %38 = vector.load %arg3[%c1, %c0_19, %c0_20, %c0_21] : memref<3x3x128x128xbf16, #tpu.memory_space<vmem>>, vector<1x1x128x128xbf16>
    %39 = vector.shape_cast %38 : vector<1x1x128x128xbf16> to vector<128x128xbf16>
    %cst_22 = arith.constant dense<0.000000e+00> : vector<160x128xf32>
    %40 = tpu.matmul %37, %39, %cst_22 {dimension_numbers = #tpu.dot_dimension_numbers<[1], [0], [0], [1], [0, 0, 1, 1], [], []>} : vector<160x128xbf16>, vector<128x128xbf16>, vector<160x128xf32> -> vector<160x128xf32>
    %41 = arith.addf %35, %40 : vector<160x128xf32>
    %42 = vector.extract_strided_slice %30 {offsets = [2, 0, 0], sizes = [10, 16, 128], strides = [1, 1, 1]} : vector<12x16x128xbf16> to vector<10x16x128xbf16>
    %43 = vector.shape_cast %42 : vector<10x16x128xbf16> to vector<160x128xbf16>
    %c2 = arith.constant 2 : index
    %c0_23 = arith.constant 0 : index
    %c0_24 = arith.constant 0 : index
    %c0_25 = arith.constant 0 : index
    %44 = vector.load %arg3[%c2, %c0_23, %c0_24, %c0_25] : memref<3x3x128x128xbf16, #tpu.memory_space<vmem>>, vector<1x1x128x128xbf16>
    %45 = vector.shape_cast %44 : vector<1x1x128x128xbf16> to vector<128x128xbf16>
    %cst_26 = arith.constant dense<0.000000e+00> : vector<160x128xf32>
    %46 = tpu.matmul %43, %45, %cst_26 {dimension_numbers = #tpu.dot_dimension_numbers<[1], [0], [0], [1], [0, 0, 1, 1], [], []>} : vector<160x128xbf16>, vector<128x128xbf16>, vector<160x128xf32> -> vector<160x128xf32>
    %47 = arith.addf %41, %46 : vector<160x128xf32>
    %48 = arith.index_cast %9 : i32 to index
    %c0_27 = arith.constant 0 : index
    %c1_28 = arith.constant 1 : index
    %c0_29 = arith.constant 0 : index
    %49 = vector.load %arg8[%48, %c0_27, %c1_28, %c0_29] : memref<2x12x18x128xf32, #tpu.memory_space<vmem>>, vector<1x12x16x128xf32>
    %50 = vector.shape_cast %49 : vector<1x12x16x128xf32> to vector<12x16x128xf32>
    %cst_30 = arith.constant 0.000000e+00 : f32
    %51 = vector.broadcast %cst_30 : f32 to vector<12x16x128xf32>
    %52 = arith.maximumf %50, %51 : vector<12x16x128xf32>
    %53 = arith.truncf %52 : vector<12x16x128xf32> to vector<12x16x128xbf16>
    %54 = vector.extract_strided_slice %53 {offsets = [0, 0, 0], sizes = [10, 16, 128], strides = [1, 1, 1]} : vector<12x16x128xbf16> to vector<10x16x128xbf16>
    %55 = vector.shape_cast %54 : vector<10x16x128xbf16> to vector<160x128xbf16>
    %c0_31 = arith.constant 0 : index
    %c1_32 = arith.constant 1 : index
    %c0_33 = arith.constant 0 : index
    %c0_34 = arith.constant 0 : index
    %56 = vector.load %arg3[%c0_31, %c1_32, %c0_33, %c0_34] : memref<3x3x128x128xbf16, #tpu.memory_space<vmem>>, vector<1x1x128x128xbf16>
    %57 = vector.shape_cast %56 : vector<1x1x128x128xbf16> to vector<128x128xbf16>
    %cst_35 = arith.constant dense<0.000000e+00> : vector<160x128xf32>
    %58 = tpu.matmul %55, %57, %cst_35 {dimension_numbers = #tpu.dot_dimension_numbers<[1], [0], [0], [1], [0, 0, 1, 1], [], []>} : vector<160x128xbf16>, vector<128x128xbf16>, vector<160x128xf32> -> vector<160x128xf32>
    %59 = arith.addf %47, %58 : vector<160x128xf32>
    %60 = vector.extract_strided_slice %53 {offsets = [1, 0, 0], sizes = [10, 16, 128], strides = [1, 1, 1]} : vector<12x16x128xbf16> to vector<10x16x128xbf16>
    %61 = vector.shape_cast %60 : vector<10x16x128xbf16> to vector<160x128xbf16>
    %c1_36 = arith.constant 1 : index
    %c1_37 = arith.constant 1 : index
    %c0_38 = arith.constant 0 : index
    %c0_39 = arith.constant 0 : index
    %62 = vector.load %arg3[%c1_36, %c1_37, %c0_38, %c0_39] : memref<3x3x128x128xbf16, #tpu.memory_space<vmem>>, vector<1x1x128x128xbf16>
    %63 = vector.shape_cast %62 : vector<1x1x128x128xbf16> to vector<128x128xbf16>
    %cst_40 = arith.constant dense<0.000000e+00> : vector<160x128xf32>
    %64 = tpu.matmul %61, %63, %cst_40 {dimension_numbers = #tpu.dot_dimension_numbers<[1], [0], [0], [1], [0, 0, 1, 1], [], []>} : vector<160x128xbf16>, vector<128x128xbf16>, vector<160x128xf32> -> vector<160x128xf32>
    %65 = arith.addf %59, %64 : vector<160x128xf32>
    %66 = vector.extract_strided_slice %53 {offsets = [2, 0, 0], sizes = [10, 16, 128], strides = [1, 1, 1]} : vector<12x16x128xbf16> to vector<10x16x128xbf16>
    %67 = vector.shape_cast %66 : vector<10x16x128xbf16> to vector<160x128xbf16>
    %c2_41 = arith.constant 2 : index
    %c1_42 = arith.constant 1 : index
    %c0_43 = arith.constant 0 : index
    %c0_44 = arith.constant 0 : index
    %68 = vector.load %arg3[%c2_41, %c1_42, %c0_43, %c0_44] : memref<3x3x128x128xbf16, #tpu.memory_space<vmem>>, vector<1x1x128x128xbf16>
    %69 = vector.shape_cast %68 : vector<1x1x128x128xbf16> to vector<128x128xbf16>
    %cst_45 = arith.constant dense<0.000000e+00> : vector<160x128xf32>
    %70 = tpu.matmul %67, %69, %cst_45 {dimension_numbers = #tpu.dot_dimension_numbers<[1], [0], [0], [1], [0, 0, 1, 1], [], []>} : vector<160x128xbf16>, vector<128x128xbf16>, vector<160x128xf32> -> vector<160x128xf32>
    %71 = arith.addf %65, %70 : vector<160x128xf32>
    %72 = arith.index_cast %9 : i32 to index
    %c0_46 = arith.constant 0 : index
    %c2_47 = arith.constant 2 : index
    %c0_48 = arith.constant 0 : index
    %73 = vector.load %arg8[%72, %c0_46, %c2_47, %c0_48] : memref<2x12x18x128xf32, #tpu.memory_space<vmem>>, vector<1x12x16x128xf32>
    %74 = vector.shape_cast %73 : vector<1x12x16x128xf32> to vector<12x16x128xf32>
    %cst_49 = arith.constant 0.000000e+00 : f32
    %75 = vector.broadcast %cst_49 : f32 to vector<12x16x128xf32>
    %76 = arith.maximumf %74, %75 : vector<12x16x128xf32>
    %77 = arith.truncf %76 : vector<12x16x128xf32> to vector<12x16x128xbf16>
    %78 = vector.extract_strided_slice %77 {offsets = [0, 0, 0], sizes = [10, 16, 128], strides = [1, 1, 1]} : vector<12x16x128xbf16> to vector<10x16x128xbf16>
    %79 = vector.shape_cast %78 : vector<10x16x128xbf16> to vector<160x128xbf16>
    %c0_50 = arith.constant 0 : index
    %c2_51 = arith.constant 2 : index
    %c0_52 = arith.constant 0 : index
    %c0_53 = arith.constant 0 : index
    %80 = vector.load %arg3[%c0_50, %c2_51, %c0_52, %c0_53] : memref<3x3x128x128xbf16, #tpu.memory_space<vmem>>, vector<1x1x128x128xbf16>
    %81 = vector.shape_cast %80 : vector<1x1x128x128xbf16> to vector<128x128xbf16>
    %cst_54 = arith.constant dense<0.000000e+00> : vector<160x128xf32>
    %82 = tpu.matmul %79, %81, %cst_54 {dimension_numbers = #tpu.dot_dimension_numbers<[1], [0], [0], [1], [0, 0, 1, 1], [], []>} : vector<160x128xbf16>, vector<128x128xbf16>, vector<160x128xf32> -> vector<160x128xf32>
    %83 = arith.addf %71, %82 : vector<160x128xf32>
    %84 = vector.extract_strided_slice %77 {offsets = [1, 0, 0], sizes = [10, 16, 128], strides = [1, 1, 1]} : vector<12x16x128xbf16> to vector<10x16x128xbf16>
    %85 = vector.shape_cast %84 : vector<10x16x128xbf16> to vector<160x128xbf16>
    %c1_55 = arith.constant 1 : index
    %c2_56 = arith.constant 2 : index
    %c0_57 = arith.constant 0 : index
    %c0_58 = arith.constant 0 : index
    %86 = vector.load %arg3[%c1_55, %c2_56, %c0_57, %c0_58] : memref<3x3x128x128xbf16, #tpu.memory_space<vmem>>, vector<1x1x128x128xbf16>
    %87 = vector.shape_cast %86 : vector<1x1x128x128xbf16> to vector<128x128xbf16>
    %cst_59 = arith.constant dense<0.000000e+00> : vector<160x128xf32>
    %88 = tpu.matmul %85, %87, %cst_59 {dimension_numbers = #tpu.dot_dimension_numbers<[1], [0], [0], [1], [0, 0, 1, 1], [], []>} : vector<160x128xbf16>, vector<128x128xbf16>, vector<160x128xf32> -> vector<160x128xf32>
    %89 = arith.addf %83, %88 : vector<160x128xf32>
    %90 = vector.extract_strided_slice %77 {offsets = [2, 0, 0], sizes = [10, 16, 128], strides = [1, 1, 1]} : vector<12x16x128xbf16> to vector<10x16x128xbf16>
    %91 = vector.shape_cast %90 : vector<10x16x128xbf16> to vector<160x128xbf16>
    %c2_60 = arith.constant 2 : index
    %c2_61 = arith.constant 2 : index
    %c0_62 = arith.constant 0 : index
    %c0_63 = arith.constant 0 : index
    %92 = vector.load %arg3[%c2_60, %c2_61, %c0_62, %c0_63] : memref<3x3x128x128xbf16, #tpu.memory_space<vmem>>, vector<1x1x128x128xbf16>
    %93 = vector.shape_cast %92 : vector<1x1x128x128xbf16> to vector<128x128xbf16>
    %cst_64 = arith.constant dense<0.000000e+00> : vector<160x128xf32>
    %94 = tpu.matmul %91, %93, %cst_64 {dimension_numbers = #tpu.dot_dimension_numbers<[1], [0], [0], [1], [0, 0, 1, 1], [], []>} : vector<160x128xbf16>, vector<128x128xbf16>, vector<160x128xf32> -> vector<160x128xf32>
    %95 = arith.addf %89, %94 : vector<160x128xf32>
    %c0_65 = arith.constant 0 : index
    %c0_66 = arith.constant 0 : index
    %96 = vector.load %arg4[%c0_65, %c0_66] : memref<1x128xf32, #tpu.memory_space<vmem>>, vector<1x128xf32>
    %97 = vector.broadcast %96 : vector<1x128xf32> to vector<160x128xf32>
    %98 = arith.addf %95, %97 : vector<160x128xf32>
    %cst_67 = arith.constant 0.000000e+00 : f32
    %99 = vector.broadcast %cst_67 : f32 to vector<160x128xf32>
    %100 = arith.maximumf %98, %99 : vector<160x128xf32>
    %101 = arith.truncf %100 : vector<160x128xf32> to vector<160x128xbf16>
    %102 = vector.shape_cast %101 : vector<160x128xbf16> to vector<10x16x128xbf16>
    %c0_68 = arith.constant 0 : index
    %c1_69 = arith.constant 1 : index
    %c0_70 = arith.constant 0 : index
    %103 = vector.load %arg9[%c0_68, %c1_69, %c0_70] : memref<10x18x128xbf16, #tpu.memory_space<vmem>>, vector<10x16x128xbf16>
    tpu.vector_store %arg9[%c0_68, %c1_69, %c0_70], %102 {strides = array<i32>} : memref<10x18x128xbf16, #tpu.memory_space<vmem>>, vector<10x16x128xbf16>,
    %cst_71 = arith.constant 0.000000e+00 : bf16
    %104 = vector.broadcast %cst_71 : bf16 to vector<10x1x128xbf16>
    %c0_72 = arith.constant 0 : index
    %c0_73 = arith.constant 0 : index
    %c0_74 = arith.constant 0 : index
    %105 = vector.load %arg9[%c0_72, %c0_73, %c0_74] : memref<10x18x128xbf16, #tpu.memory_space<vmem>>, vector<10x1x128xbf16>
    tpu.vector_store %arg9[%c0_72, %c0_73, %c0_74], %104 {strides = array<i32>} : memref<10x18x128xbf16, #tpu.memory_space<vmem>>, vector<10x1x128xbf16>,
    %c0_75 = arith.constant 0 : index
    %c17 = arith.constant 17 : index
    %c0_76 = arith.constant 0 : index
    %106 = vector.load %arg9[%c0_75, %c17, %c0_76] : memref<10x18x128xbf16, #tpu.memory_space<vmem>>, vector<10x1x128xbf16>
    tpu.vector_store %arg9[%c0_75, %c17, %c0_76], %104 {strides = array<i32>} : memref<10x18x128xbf16, #tpu.memory_space<vmem>>, vector<10x1x128xbf16>,
    %c0_i32_77 = arith.constant 0 : i32
    %107 = arith.cmpi eq, %arg1, %c0_i32_77 : i32
    %108 = arith.extui %107 : i1 to i32
    %c0_i32_78 = arith.constant 0 : i32
    %109 = arith.cmpi ne, %108, %c0_i32_78 : i32
    scf.if %109 {
      %cst_144 = arith.constant 0.000000e+00 : bf16
      %180 = vector.broadcast %cst_144 : bf16 to vector<1x18x128xbf16>
      %c0_145 = arith.constant 0 : index
      %c0_146 = arith.constant 0 : index
      %c0_147 = arith.constant 0 : index
      %181 = vector.load %arg9[%c0_145, %c0_146, %c0_147] : memref<10x18x128xbf16, #tpu.memory_space<vmem>>, vector<1x18x128xbf16>
      tpu.vector_store %arg9[%c0_145, %c0_146, %c0_147], %180 {strides = array<i32>} : memref<10x18x128xbf16, #tpu.memory_space<vmem>>, vector<1x18x128xbf16>,
    } else {
    }
    %c2_i32_79 = arith.constant 2 : i32
    %110 = arith.cmpi eq, %arg1, %c2_i32_79 : i32
    %111 = arith.extui %110 : i1 to i32
    %c0_i32_80 = arith.constant 0 : i32
    %112 = arith.cmpi ne, %111, %c0_i32_80 : i32
    scf.if %112 {
      %cst_144 = arith.constant 0.000000e+00 : bf16
      %180 = vector.broadcast %cst_144 : bf16 to vector<5x18x128xbf16>
      %c5 = arith.constant 5 : index
      %c0_145 = arith.constant 0 : index
      %c0_146 = arith.constant 0 : index
      %181 = vector.load %arg9[%c5, %c0_145, %c0_146] : memref<10x18x128xbf16, #tpu.memory_space<vmem>>, vector<5x18x128xbf16>
      tpu.vector_store %arg9[%c5, %c0_145, %c0_146], %180 {strides = array<i32>} : memref<10x18x128xbf16, #tpu.memory_space<vmem>>, vector<5x18x128xbf16>,
    } else {
    }
    %c0_81 = arith.constant 0 : index
    %c0_82 = arith.constant 0 : index
    %c0_83 = arith.constant 0 : index
    %113 = vector.load %arg9[%c0_81, %c0_82, %c0_83] : memref<10x18x128xbf16, #tpu.memory_space<vmem>>, vector<10x16x128xbf16>
    %114 = vector.extract_strided_slice %113 {offsets = [0, 0, 0], sizes = [8, 16, 128], strides = [1, 1, 1]} : vector<10x16x128xbf16> to vector<8x16x128xbf16>
    %115 = vector.shape_cast %114 : vector<8x16x128xbf16> to vector<128x128xbf16>
    %c0_84 = arith.constant 0 : index
    %c0_85 = arith.constant 0 : index
    %c0_86 = arith.constant 0 : index
    %c0_87 = arith.constant 0 : index
    %116 = vector.load %arg5[%c0_84, %c0_85, %c0_86, %c0_87] : memref<3x3x128x128xbf16, #tpu.memory_space<vmem>>, vector<1x1x128x128xbf16>
    %117 = vector.shape_cast %116 : vector<1x1x128x128xbf16> to vector<128x128xbf16>
    %cst_88 = arith.constant dense<0.000000e+00> : vector<128x128xf32>
    %118 = tpu.matmul %115, %117, %cst_88 {dimension_numbers = #tpu.dot_dimension_numbers<[1], [0], [0], [1], [0, 0, 1, 1], [], []>} : vector<128x128xbf16>, vector<128x128xbf16>, vector<128x128xf32> -> vector<128x128xf32>
    %119 = vector.extract_strided_slice %113 {offsets = [1, 0, 0], sizes = [8, 16, 128], strides = [1, 1, 1]} : vector<10x16x128xbf16> to vector<8x16x128xbf16>
    %120 = vector.shape_cast %119 : vector<8x16x128xbf16> to vector<128x128xbf16>
    %c1_89 = arith.constant 1 : index
    %c0_90 = arith.constant 0 : index
    %c0_91 = arith.constant 0 : index
    %c0_92 = arith.constant 0 : index
    %121 = vector.load %arg5[%c1_89, %c0_90, %c0_91, %c0_92] : memref<3x3x128x128xbf16, #tpu.memory_space<vmem>>, vector<1x1x128x128xbf16>
    %122 = vector.shape_cast %121 : vector<1x1x128x128xbf16> to vector<128x128xbf16>
    %cst_93 = arith.constant dense<0.000000e+00> : vector<128x128xf32>
    %123 = tpu.matmul %120, %122, %cst_93 {dimension_numbers = #tpu.dot_dimension_numbers<[1], [0], [0], [1], [0, 0, 1, 1], [], []>} : vector<128x128xbf16>, vector<128x128xbf16>, vector<128x128xf32> -> vector<128x128xf32>
    %124 = arith.addf %118, %123 : vector<128x128xf32>
    %125 = vector.extract_strided_slice %113 {offsets = [2, 0, 0], sizes = [8, 16, 128], strides = [1, 1, 1]} : vector<10x16x128xbf16> to vector<8x16x128xbf16>
    %126 = vector.shape_cast %125 : vector<8x16x128xbf16> to vector<128x128xbf16>
    %c2_94 = arith.constant 2 : index
    %c0_95 = arith.constant 0 : index
    %c0_96 = arith.constant 0 : index
    %c0_97 = arith.constant 0 : index
    %127 = vector.load %arg5[%c2_94, %c0_95, %c0_96, %c0_97] : memref<3x3x128x128xbf16, #tpu.memory_space<vmem>>, vector<1x1x128x128xbf16>
    %128 = vector.shape_cast %127 : vector<1x1x128x128xbf16> to vector<128x128xbf16>
    %cst_98 = arith.constant dense<0.000000e+00> : vector<128x128xf32>
    %129 = tpu.matmul %126, %128, %cst_98 {dimension_numbers = #tpu.dot_dimension_numbers<[1], [0], [0], [1], [0, 0, 1, 1], [], []>} : vector<128x128xbf16>, vector<128x128xbf16>, vector<128x128xf32> -> vector<128x128xf32>
    %130 = arith.addf %124, %129 : vector<128x128xf32>
    %c0_99 = arith.constant 0 : index
    %c1_100 = arith.constant 1 : index
    %c0_101 = arith.constant 0 : index
    %131 = vector.load %arg9[%c0_99, %c1_100, %c0_101] : memref<10x18x128xbf16, #tpu.memory_space<vmem>>, vector<10x16x128xbf16>
    %132 = vector.extract_strided_slice %131 {offsets = [0, 0, 0], sizes = [8, 16, 128], strides = [1, 1, 1]} : vector<10x16x128xbf16> to vector<8x16x128xbf16>
    %133 = vector.shape_cast %132 : vector<8x16x128xbf16> to vector<128x128xbf16>
    %c0_102 = arith.constant 0 : index
    %c1_103 = arith.constant 1 : index
    %c0_104 = arith.constant 0 : index
    %c0_105 = arith.constant 0 : index
    %134 = vector.load %arg5[%c0_102, %c1_103, %c0_104, %c0_105] : memref<3x3x128x128xbf16, #tpu.memory_space<vmem>>, vector<1x1x128x128xbf16>
    %135 = vector.shape_cast %134 : vector<1x1x128x128xbf16> to vector<128x128xbf16>
    %cst_106 = arith.constant dense<0.000000e+00> : vector<128x128xf32>
    %136 = tpu.matmul %133, %135, %cst_106 {dimension_numbers = #tpu.dot_dimension_numbers<[1], [0], [0], [1], [0, 0, 1, 1], [], []>} : vector<128x128xbf16>, vector<128x128xbf16>, vector<128x128xf32> -> vector<128x128xf32>
    %137 = arith.addf %130, %136 : vector<128x128xf32>
    %138 = vector.extract_strided_slice %131 {offsets = [1, 0, 0], sizes = [8, 16, 128], strides = [1, 1, 1]} : vector<10x16x128xbf16> to vector<8x16x128xbf16>
    %139 = vector.shape_cast %138 : vector<8x16x128xbf16> to vector<128x128xbf16>
    %c1_107 = arith.constant 1 : index
    %c1_108 = arith.constant 1 : index
    %c0_109 = arith.constant 0 : index
    %c0_110 = arith.constant 0 : index
    %140 = vector.load %arg5[%c1_107, %c1_108, %c0_109, %c0_110] : memref<3x3x128x128xbf16, #tpu.memory_space<vmem>>, vector<1x1x128x128xbf16>
    %141 = vector.shape_cast %140 : vector<1x1x128x128xbf16> to vector<128x128xbf16>
    %cst_111 = arith.constant dense<0.000000e+00> : vector<128x128xf32>
    %142 = tpu.matmul %139, %141, %cst_111 {dimension_numbers = #tpu.dot_dimension_numbers<[1], [0], [0], [1], [0, 0, 1, 1], [], []>} : vector<128x128xbf16>, vector<128x128xbf16>, vector<128x128xf32> -> vector<128x128xf32>
    %143 = arith.addf %137, %142 : vector<128x128xf32>
    %144 = vector.extract_strided_slice %131 {offsets = [2, 0, 0], sizes = [8, 16, 128], strides = [1, 1, 1]} : vector<10x16x128xbf16> to vector<8x16x128xbf16>
    %145 = vector.shape_cast %144 : vector<8x16x128xbf16> to vector<128x128xbf16>
    %c2_112 = arith.constant 2 : index
    %c1_113 = arith.constant 1 : index
    %c0_114 = arith.constant 0 : index
    %c0_115 = arith.constant 0 : index
    %146 = vector.load %arg5[%c2_112, %c1_113, %c0_114, %c0_115] : memref<3x3x128x128xbf16, #tpu.memory_space<vmem>>, vector<1x1x128x128xbf16>
    %147 = vector.shape_cast %146 : vector<1x1x128x128xbf16> to vector<128x128xbf16>
    %cst_116 = arith.constant dense<0.000000e+00> : vector<128x128xf32>
    %148 = tpu.matmul %145, %147, %cst_116 {dimension_numbers = #tpu.dot_dimension_numbers<[1], [0], [0], [1], [0, 0, 1, 1], [], []>} : vector<128x128xbf16>, vector<128x128xbf16>, vector<128x128xf32> -> vector<128x128xf32>
    %149 = arith.addf %143, %148 : vector<128x128xf32>
    %c0_117 = arith.constant 0 : index
    %c2_118 = arith.constant 2 : index
    %c0_119 = arith.constant 0 : index
    %150 = vector.load %arg9[%c0_117, %c2_118, %c0_119] : memref<10x18x128xbf16, #tpu.memory_space<vmem>>, vector<10x16x128xbf16>
    %151 = vector.extract_strided_slice %150 {offsets = [0, 0, 0], sizes = [8, 16, 128], strides = [1, 1, 1]} : vector<10x16x128xbf16> to vector<8x16x128xbf16>
    %152 = vector.shape_cast %151 : vector<8x16x128xbf16> to vector<128x128xbf16>
    %c0_120 = arith.constant 0 : index
    %c2_121 = arith.constant 2 : index
    %c0_122 = arith.constant 0 : index
    %c0_123 = arith.constant 0 : index
    %153 = vector.load %arg5[%c0_120, %c2_121, %c0_122, %c0_123] : memref<3x3x128x128xbf16, #tpu.memory_space<vmem>>, vector<1x1x128x128xbf16>
    %154 = vector.shape_cast %153 : vector<1x1x128x128xbf16> to vector<128x128xbf16>
    %cst_124 = arith.constant dense<0.000000e+00> : vector<128x128xf32>
    %155 = tpu.matmul %152, %154, %cst_124 {dimension_numbers = #tpu.dot_dimension_numbers<[1], [0], [0], [1], [0, 0, 1, 1], [], []>} : vector<128x128xbf16>, vector<128x128xbf16>, vector<128x128xf32> -> vector<128x128xf32>
    %156 = arith.addf %149, %155 : vector<128x128xf32>
    %157 = vector.extract_strided_slice %150 {offsets = [1, 0, 0], sizes = [8, 16, 128], strides = [1, 1, 1]} : vector<10x16x128xbf16> to vector<8x16x128xbf16>
    %158 = vector.shape_cast %157 : vector<8x16x128xbf16> to vector<128x128xbf16>
    %c1_125 = arith.constant 1 : index
    %c2_126 = arith.constant 2 : index
    %c0_127 = arith.constant 0 : index
    %c0_128 = arith.constant 0 : index
    %159 = vector.load %arg5[%c1_125, %c2_126, %c0_127, %c0_128] : memref<3x3x128x128xbf16, #tpu.memory_space<vmem>>, vector<1x1x128x128xbf16>
    %160 = vector.shape_cast %159 : vector<1x1x128x128xbf16> to vector<128x128xbf16>
    %cst_129 = arith.constant dense<0.000000e+00> : vector<128x128xf32>
    %161 = tpu.matmul %158, %160, %cst_129 {dimension_numbers = #tpu.dot_dimension_numbers<[1], [0], [0], [1], [0, 0, 1, 1], [], []>} : vector<128x128xbf16>, vector<128x128xbf16>, vector<128x128xf32> -> vector<128x128xf32>
    %162 = arith.addf %156, %161 : vector<128x128xf32>
    %163 = vector.extract_strided_slice %150 {offsets = [2, 0, 0], sizes = [8, 16, 128], strides = [1, 1, 1]} : vector<10x16x128xbf16> to vector<8x16x128xbf16>
    %164 = vector.shape_cast %163 : vector<8x16x128xbf16> to vector<128x128xbf16>
    %c2_130 = arith.constant 2 : index
    %c2_131 = arith.constant 2 : index
    %c0_132 = arith.constant 0 : index
    %c0_133 = arith.constant 0 : index
    %165 = vector.load %arg5[%c2_130, %c2_131, %c0_132, %c0_133] : memref<3x3x128x128xbf16, #tpu.memory_space<vmem>>, vector<1x1x128x128xbf16>
    %166 = vector.shape_cast %165 : vector<1x1x128x128xbf16> to vector<128x128xbf16>
    %cst_134 = arith.constant dense<0.000000e+00> : vector<128x128xf32>
    %167 = tpu.matmul %164, %166, %cst_134 {dimension_numbers = #tpu.dot_dimension_numbers<[1], [0], [0], [1], [0, 0, 1, 1], [], []>} : vector<128x128xbf16>, vector<128x128xbf16>, vector<128x128xf32> -> vector<128x128xf32>
    %168 = arith.addf %162, %167 : vector<128x128xf32>
    %c0_135 = arith.constant 0 : index
    %c0_136 = arith.constant 0 : index
    %169 = vector.load %arg6[%c0_135, %c0_136] : memref<1x128xf32, #tpu.memory_space<vmem>>, vector<1x128xf32>
    %170 = vector.broadcast %169 : vector<1x128xf32> to vector<128x128xf32>
    %171 = arith.addf %168, %170 : vector<128x128xf32>
    %172 = vector.shape_cast %171 : vector<128x128xf32> to vector<8x16x128xf32>
    %173 = arith.index_cast %9 : i32 to index
    %c2_137 = arith.constant 2 : index
    %c1_138 = arith.constant 1 : index
    %c0_139 = arith.constant 0 : index
    %174 = vector.load %arg8[%173, %c2_137, %c1_138, %c0_139] : memref<2x12x18x128xf32, #tpu.memory_space<vmem>>, vector<1x8x16x128xf32>
    %175 = vector.shape_cast %174 : vector<1x8x16x128xf32> to vector<8x16x128xf32>
    %176 = arith.addf %172, %175 : vector<8x16x128xf32>
    %c0_140 = arith.constant 0 : index
    %c0_141 = arith.constant 0 : index
    %c0_142 = arith.constant 0 : index
    %c0_143 = arith.constant 0 : index
    %177 = vector.load %arg7[%c0_140, %c0_141, %c0_142, %c0_143] : memref<1x8x16x128xf32, #tpu.memory_space<vmem>>, vector<1x8x16x128xf32>
    %178 = vector.shape_cast %177 : vector<1x8x16x128xf32> to vector<8x16x128xf32>
    %179 = vector.shape_cast %176 : vector<8x16x128xf32> to vector<1x8x16x128xf32>
    tpu.vector_store %arg7[%c0_140, %c0_141, %c0_142, %c0_143], %179 {strides = array<i32>} : memref<1x8x16x128xf32, #tpu.memory_space<vmem>>, vector<1x8x16x128xf32>,
    return
  }
  func.func @transform_1(%arg0: i32, %arg1: i32) -> (i32, i32, i32, i32) {
    %c0_i32 = arith.constant 0 : i32
    %c0_i32_0 = arith.constant 0 : i32
    %c0_i32_1 = arith.constant 0 : i32
    %c0_i32_2 = arith.constant 0 : i32
    %c0_i32_3 = arith.constant 0 : i32
    return %c0_i32, %c0_i32_0, %c0_i32_1, %c0_i32_2 : i32, i32, i32, i32
  }
  func.func @transform_2(%arg0: i32, %arg1: i32) -> (i32, i32) {
    %c0_i32 = arith.constant 0 : i32
    %c0_i32_0 = arith.constant 0 : i32
    %c0_i32_1 = arith.constant 0 : i32
    return %c0_i32, %c0_i32_0 : i32, i32
  }
  func.func @transform_3(%arg0: i32, %arg1: i32) -> (i32, i32, i32, i32) {
    %c0_i32 = arith.constant 0 : i32
    %c0_i32_0 = arith.constant 0 : i32
    %c0_i32_1 = arith.constant 0 : i32
    %c0_i32_2 = arith.constant 0 : i32
    %c0_i32_3 = arith.constant 0 : i32
    return %c0_i32, %c0_i32_0, %c0_i32_1, %c0_i32_2 : i32, i32, i32, i32
  }
  func.func @transform_4(%arg0: i32, %arg1: i32) -> (i32, i32) {
    %c0_i32 = arith.constant 0 : i32
    %c0_i32_0 = arith.constant 0 : i32
    %c0_i32_1 = arith.constant 0 : i32
    return %c0_i32, %c0_i32_0 : i32, i32
  }
  func.func @transform_5(%arg0: i32, %arg1: i32) -> (i32, i32, i32, i32) {
    %c0_i32 = arith.constant 0 : i32
    %c0_i32_0 = arith.constant 0 : i32
    %c0_i32_1 = arith.constant 0 : i32
    return %arg0, %arg1, %c0_i32, %c0_i32_0 : i32, i32, i32, i32
  }
}

</mosaic_0001>

<llo_original>
// kernel: residual_conv_unit.1
$region0: #{residual_conv_unit.1}
  #allocation0 [shape = 'u32[]', space=smem, size = 0x4, offset = 0x4, fixed_abs, tag = 'smem constant byte address 0x4 - core index']
  #allocation1 [shape = 'u32[144,128]{1,0:T(1,128)}', space=vmem, size = 0x12000, scoped, tag = 'internal scratch']
  #allocation2 [shape = 'f32[2,12,18,128]{3,2,1,0:T(8,128)}', space=vmem, size = 0x48000, scoped, tag = 'scratch operand']
  #allocation3 [shape = 'bf16[10,18,128]{2,1,0:T(8,128)(2,1)}', space=vmem, size = 0xf000, scoped, tag = 'scratch operand']
  #allocation4 [shape = 's32[2]{0}', space=sflag, size = 0x8, scoped, tag = 'scratch operand']
  #allocation5 [shape = 's32[]', space=sflag, size = 0x4, offset = 0, fixed_abs, tag = 'sflag constant byte address 0x0 - dummy sync flag']
  #allocation6 [shape = 's32[]', space=sflag, size = 0x4, offset = 0, fixed_abs, tag = 'sflag constant byte address 0x0 - dummy sync flag']
  %s0 = inlined_call_operand.vmem [shape: f32[2,28,18,128], index: 0, kind: input, shape index: {}]
  %s1 = inlined_call_operand.vmem [shape: bf16[3,3,128,128], index: 1, kind: input, shape index: {}]
  %s2 = inlined_call_operand.vmem [shape: f32[1,128], index: 2, kind: input, shape index: {}]
  %s3 = inlined_call_operand.vmem [shape: bf16[3,3,128,128], index: 3, kind: input, shape index: {}]
  %s4 = inlined_call_operand.vmem [shape: f32[1,128], index: 4, kind: input, shape index: {}]
  %s5 = inlined_call_operand.vmem [shape: f32[2,24,16,128], index: 5, kind: output, shape index: {}]
  %s6 = sld [smem:[#allocation0]]
  $region139: #{residual_conv_unit.1} parent=0
    _
  %s8 = ssub.s32 1, %s6
  %s9 = scalar_select 0, %s8, %s6
  loop: start=0, step=1, limit=8
  $region2: #{residual_conv_unit.1} parent=0 // loop_pre_header
    _
  $region3: #{residual_conv_unit.1} parent=0 // loop_header
    %s11 = sphi 0, %s15
    %p12 = scmp.ge.s32.totalorder %s11, 8
    %s18 = sphi 0, %s30
    %s19 = sphi 0, %s26
    %s20 = sphi 0, %s18
    %s21 = sphi 0, %s19
    %s22 = sphi 0, %s20
    %s23 = sphi 0, %s21
    %s31 = sphi 0, %s31
    %s33 = sphi 0, %s31
    %s34 = sphi 0, %s33
    %s48 = sphi 0, %s34
    %s52 = sphi 0, %s52
    %s54 = sphi 0, %s52
    %s55 = sphi 0, %s54
    %s69 = sphi 0, %s55
    %s73 = sphi 0, %s73
    %s75 = sphi 0, %s73
    %s76 = sphi 0, %s75
    %s90 = sphi 0, %s76
    %s94 = sphi 0, %s94
    %s96 = sphi 0, %s94
    %s97 = sphi 0, %s96
    %s111 = sphi 0, %s97
    %s119 = sphi 0, %s121
    %s122 = sphi 0, %s119
    %s123 = sphi 0, %s122
    %s139 = sphi 0, %s123
  $region4: #{residual_conv_unit.1} parent=0 // loop_header_branch
    %14 = sbr.rel (%p12) target = $region8
  $region5: #{residual_conv_unit.1} parent=0 // loop_body
    %s16 = ssub.s32 %s11, 1
    %s17 = ssub.s32 %s11, 2
    %s24 = sadd.s32 1, %s19
    %p25 = scmp.ge.s32.totalorder %s24, 3
    %s26 = scalar_select %p25, 0, %s24
    %s27 = sadd.s32 1, %s18
    %s28 = scalar_select %p25, %s27, %s18
    %p29 = scmp.ge.s32.totalorder %s28, 2
    %s30 = scalar_select %p29, 0, %s28
    %s32 = sadd.s32 %s31, 1
    %p35 = scmp.eq.s32.totalorder %s11, 5
    %p36 = scmp.ne.s32.totalorder %s31, %s33
    %p37 = scmp.eq.s32.totalorder %s11, 0
    %p38 = por %p36, %p37
    %p39 = scmp.ne.s32.totalorder %s31, %s33
    %p40 = scmp.eq.s32.totalorder %s16, 5
    %p41 = por %p39, %p40
    %p42 = scmp.ne.s32.totalorder %s33, %s34
    %p43 = scmp.eq.s32.totalorder %s16, 0
    %p44 = por %p42, %p43
    %p45 = scmp.ne.s32.totalorder %s33, %s34
    %p46 = scmp.eq.s32.totalorder %s17, 5
    %p47 = por %p45, %p46
    %p49 = scmp.ne.s32.totalorder %s34, %s48
    %p50 = scmp.eq.s32.totalorder %s17, 0
    %p51 = por %p49, %p50
    %s53 = sadd.s32 %s52, 1
    %p56 = scmp.eq.s32.totalorder %s11, 5
    %p57 = scmp.ne.s32.totalorder %s52, %s54
    %p58 = scmp.eq.s32.totalorder %s11, 0
    %p59 = por %p57, %p58
    %p60 = scmp.ne.s32.totalorder %s52, %s54
    %p61 = scmp.eq.s32.totalorder %s16, 5
    %p62 = por %p60, %p61
    %p63 = scmp.ne.s32.totalorder %s54, %s55
    %p64 = scmp.eq.s32.totalorder %s16, 0
    %p65 = por %p63, %p64
    %p66 = scmp.ne.s32.totalorder %s54, %s55
    %p67 = scmp.eq.s32.totalorder %s17, 5
    %p68 = por %p66, %p67
    %p70 = scmp.ne.s32.totalorder %s55, %s69
    %p71 = scmp.eq.s32.totalorder %s17, 0
    %p72 = por %p70, %p71
    %s74 = sadd.s32 %s73, 1
    %p77 = scmp.eq.s32.totalorder %s11, 5
    %p78 = scmp.ne.s32.totalorder %s73, %s75
    %p79 = scmp.eq.s32.totalorder %s11, 0
    %p80 = por %p78, %p79
    %p81 = scmp.ne.s32.totalorder %s73, %s75
    %p82 = scmp.eq.s32.totalorder %s16, 5
    %p83 = por %p81, %p82
    %p84 = scmp.ne.s32.totalorder %s75, %s76
    %p85 = scmp.eq.s32.totalorder %s16, 0
    %p86 = por %p84, %p85
    %p87 = scmp.ne.s32.totalorder %s75, %s76
    %p88 = scmp.eq.s32.totalorder %s17, 5
    %p89 = por %p87, %p88
    %p91 = scmp.ne.s32.totalorder %s76, %s90
    %p92 = scmp.eq.s32.totalorder %s17, 0
    %p93 = por %p91, %p92
    %s95 = sadd.s32 %s94, 1
    %p98 = scmp.eq.s32.totalorder %s11, 5
    %p99 = scmp.ne.s32.totalorder %s94, %s96
    %p100 = scmp.eq.s32.totalorder %s11, 0
    %p101 = por %p99, %p100
    %p102 = scmp.ne.s32.totalorder %s94, %s96
    %p103 = scmp.eq.s32.totalorder %s16, 5
    %p104 = por %p102, %p103
    %p105 = scmp.ne.s32.totalorder %s96, %s97
    %p106 = scmp.eq.s32.totalorder %s16, 0
    %p107 = por %p105, %p106
    %p108 = scmp.ne.s32.totalorder %s96, %s97
    %p109 = scmp.eq.s32.totalorder %s17, 5
    %p110 = por %p108, %p109
    %p112 = scmp.ne.s32.totalorder %s97, %s111
    %p113 = scmp.eq.s32.totalorder %s17, 0
    %p114 = por %p112, %p113
    %s115 = ssub.s32 %s18, %s30
    %s116 = ssub.s32 %s19, %s26
    %s117 = sor.u32 %s115, %s116
    %p118 = scmp.eq.s32.totalorder %s117, 0
    %s120 = sadd.s32 %s119, 1
    %s121 = scalar_select %p118, %s119, %s120
    %p124 = pneg %p118
    %p125 = scmp.eq.s32.totalorder %s11, 5
    %p126 = por %p124, %p125
    %p127 = scmp.ne.s32.totalorder %s119, %s122
    %p128 = scmp.eq.s32.totalorder %s11, 0
    %p129 = por %p127, %p128
    %p130 = scmp.ne.s32.totalorder %s119, %s122
    %p131 = scmp.eq.s32.totalorder %s16, 5
    %p132 = por %p130, %p131
    %p133 = scmp.ne.s32.totalorder %s122, %s123
    %p134 = scmp.eq.s32.totalorder %s16, 0
    %p135 = por %p133, %p134
    %p136 = scmp.ne.s32.totalorder %s122, %s123
    %p137 = scmp.eq.s32.totalorder %s17, 5
    %p138 = por %p136, %p137
    %p140 = scmp.ne.s32.totalorder %s123, %s139
    %p141 = scmp.eq.s32.totalorder %s17, 0
    %p142 = por %p140, %p141
    %p143 = scmp.le.s32.totalorder 1, %s11
    %p144 = scmp.lt.s32.totalorder %s11, 7
    %p145 = pnand %p143, %p144
    %p146 = pneg %p145
    // Predicated region
    $region9: #{residual_conv_unit.1} parent=5 // pred_check
      _
    $region10: #{residual_conv_unit.1} parent=5 // pred_check_branch
      %148 = sbr.rel (%p145) target = $region12
    $region11: #{residual_conv_unit.1} parent=5 // pred_region
      %s149 = ssub.s32 %s11, 1
      // Predicated region
      $region13: #{residual_conv_unit.1} parent=11 // pred_check
        %p150 = pneg %p44
      $region14: #{residual_conv_unit.1} parent=11 // pred_check_branch
        %152 = sbr.rel (%p150) target = $region16
      $region15: #{residual_conv_unit.1} parent=11 // pred_region
        _
      $region16: #{residual_conv_unit.1} parent=11 // pred_fallthru
        _
      // Predicated region
      $region17: #{residual_conv_unit.1} parent=11 // pred_check
        %p153 = pneg %p65
      $region18: #{residual_conv_unit.1} parent=11 // pred_check_branch
        %155 = sbr.rel (%p153) target = $region20
      $region19: #{residual_conv_unit.1} parent=11 // pred_region
        _
      $region20: #{residual_conv_unit.1} parent=11 // pred_fallthru
        _
      // Predicated region
      $region21: #{residual_conv_unit.1} parent=11 // pred_check
        %p156 = pneg %p86
      $region22: #{residual_conv_unit.1} parent=11 // pred_check_branch
        %158 = sbr.rel (%p156) target = $region24
      $region23: #{residual_conv_unit.1} parent=11 // pred_region
        _
      $region24: #{residual_conv_unit.1} parent=11 // pred_fallthru
        _
      // Predicated region
      $region25: #{residual_conv_unit.1} parent=11 // pred_check
        %p159 = pneg %p107
      $region26: #{residual_conv_unit.1} parent=11 // pred_check_branch
        %161 = sbr.rel (%p159) target = $region28
      $region27: #{residual_conv_unit.1} parent=11 // pred_region
        _
      $region28: #{residual_conv_unit.1} parent=11 // pred_fallthru
        _
    $region12: #{residual_conv_unit.1} parent=5 // pred_fallthru
      _
    %p162 = scmp.lt.s32.totalorder %s11, 6
    // Predicated region
    $region29: #{residual_conv_unit.1} parent=5 // pred_check
      %p163 = pneg %p162
    $region30: #{residual_conv_unit.1} parent=5 // pred_check_branch
      %165 = sbr.rel (%p163) target = $region32
    $region31: #{residual_conv_unit.1} parent=5 // pred_region
      _
    $region32: #{residual_conv_unit.1} parent=5 // pred_fallthru
      _
    %p166 = scmp.le.s32.totalorder 1, %s11
    %p167 = scmp.lt.s32.totalorder %s11, 7
    %p168 = pnand %p166, %p167
    %p169 = pneg %p168
    // Predicated region
    $region33: #{residual_conv_unit.1} parent=5 // pred_check
      _
    $region34: #{residual_conv_unit.1} parent=5 // pred_check_branch
      %171 = sbr.rel (%p168) target = $region36
    $region35: #{residual_conv_unit.1} parent=5 // pred_region
      %s172 = ssub.s32 %s11, 1
      %p173 = pneg %p44
      %p174 = pneg %p41
      %p175 = pneg %p65
      %p176 = pneg %p62
      %p177 = pneg %p86
      %p178 = pneg %p83
      %p179 = pneg %p107
      %p180 = pneg %p104
      %p181 = pneg %p135
      %p182 = pneg %p132
      %s183 = smul.u32 8, %s21
      %p184 = scmp.lt.s32.totalorder %s20, 1
      %s185 = scalar_select %p184, %s20, 1
      %p186 = scmp.lt.s32.totalorder %s183, 23
      %s187 = scalar_select %p186, %s183, 23
      %s188 = smul.addr %s187, 2
      %s189 = smul.addr %s185, 48
      %s190 = sadd.s32 %s188, %s189
      %s191 = smul.addr %s190, 8
      %s192 = scalar_lea.vmem %s5, %s191
      %s193 = smul.u32 8, %s21
      %p194 = scmp.lt.s32.totalorder %s20, 1
      %s195 = scalar_select %p194, %s20, 1
      %p196 = scmp.lt.s32.totalorder %s193, 23
      %s197 = scalar_select %p196, %s193, 23
      %s198 = smul.addr %s197, 2
      %s199 = smul.addr %s195, 48
      %s200 = sadd.s32 %s198, %s199
      %s201 = smul.addr %s200, 8
      %s202 = scalar_lea.vmem %s5, %s201
      %s203 = smul.u32 8, %s21
      %p205 = scmp.lt.s32.totalorder %s21, 0
      %s206 = ssub.s32 0, %s21
      %s207 = scalar_select %p205, %s206, %s21
      %s208 = sand.u32 %s207, 1
      %s209 = ssub.s32 0, %s208
      %s210 = scalar_select %p205, %s209, %s208
      %p211 = scmp.ne.s32.totalorder %s210, 0
      %p212 = scmp.lt.s32.totalorder %s210, 0
      %p213 = pnand %p212, %p211
      %p214 = pneg %p213
      %s215 = sadd.s32 %s210, 2
      %s216 = scalar_select %p214, %s215, %s210
      %p217 = scmp.eq.s32.totalorder %s21, 0
      // Predicated region
      $region37: #{residual_conv_unit.1} parent=35 // pred_check
        %p218 = pneg %p217
      $region38: #{residual_conv_unit.1} parent=35 // pred_check_branch
        %220 = sbr.rel (%p218) target = $region40
      $region39: #{residual_conv_unit.1} parent=35 // pred_region
        %s221 = smul.u32 %s20, 672
        %s222 = scalar_lea.vmem %s0, %s221
        %s223 = smul.u32 %s216, 288
        %s224 = scalar_lea.vmem [#allocation2], %s223
        %s225 = scalar_lea.sflag [#allocation4], %s216
        %p227 = scmp.lt.u32.totalorder 18, 8
        %p228 = pneg %p227
        // Predicated region
        $region41: #{residual_conv_unit.1} parent=39 // pred_check
          _
        $region42: #{residual_conv_unit.1} parent=39 // pred_check_branch
          %230 = sbr.rel (%p227) target = $region44
        $region43: #{residual_conv_unit.1} parent=39 // pred_region
          %s268 = sand.u32 18, 7
          %p269 = scmp.eq.s32.totalorder %s268, 0
          %p270 = pneg %p269
          // Predicated region
          $region56: #{residual_conv_unit.1} parent=43 // pred_check
            _
          $region57: #{residual_conv_unit.1} parent=43 // pred_check_branch
            %272 = sbr.rel (%p269) target = $region59
          $region58: #{residual_conv_unit.1} parent=43 // pred_region
            %s273 = sand.u32 18, 7
            %s274 = ssub.s32 18, %s273
            %s275 = scalar_lea.vmem %s222, %s274
            %s276 = ssub.s32 18, %s273
            %s277 = scalar_lea.vmem %s224, %s276 [#allocation2]
            loop: start=0, step=1, limit=1
            $region60: #{residual_conv_unit.1} parent=58 // loop_pre_header
              _
            $region61: #{residual_conv_unit.1} parent=58 // loop_header
              %s279 = sphi 0, %s283
              %p280 = scmp.ge.s32.totalorder %s279, 1
              %s284 = sphi %s222, %s222
              %s285 = sphi %s224, %s224
            $region62: #{residual_conv_unit.1} parent=58 // loop_header_branch
              %282 = sbr.rel (%p280) target = $region66
            $region63: #{residual_conv_unit.1} parent=58 // loop_body
              %v286 = vld [vmem:[%s284] sm:$0xff]
              %287 = vst [vmem:[%s285] sm:$0xff] %v286
              %v288 = vld [vmem:[%s284 + $0x8] sm:$0xff]
              %289 = vst [vmem:[%s285 + $0x8] sm:$0xff] %v288
              %v290 = vld [vmem:[%s284 + $0x18] sm:$0xff]
              %291 = vst [vmem:[%s285 + $0x18] sm:$0xff] %v290
              %v292 = vld [vmem:[%s284 + $0x20] sm:$0xff]
              %293 = vst [vmem:[%s285 + $0x20] sm:$0xff] %v292
              %v294 = vld [vmem:[%s284 + $0x30] sm:$0xff]
              %295 = vst [vmem:[%s285 + $0x30] sm:$0xff] %v294
              %v296 = vld [vmem:[%s284 + $0x38] sm:$0xff]
              %297 = vst [vmem:[%s285 + $0x38] sm:$0xff] %v296
              %v298 = vld [vmem:[%s284 + $0x48] sm:$0xff]
              %299 = vst [vmem:[%s285 + $0x48] sm:$0xff] %v298
              %v300 = vld [vmem:[%s284 + $0x50] sm:$0xff]
              %301 = vst [vmem:[%s285 + $0x50] sm:$0xff] %v300
              %v302 = vld [vmem:[%s284 + $0x60] sm:$0xff]
              %303 = vst [vmem:[%s285 + $0x60] sm:$0xff] %v302
              %v304 = vld [vmem:[%s284 + $0x68] sm:$0xff]
              %305 = vst [vmem:[%s285 + $0x68] sm:$0xff] %v304
              %v306 = vld [vmem:[%s284 + $0x78] sm:$0xff]
              %307 = vst [vmem:[%s285 + $0x78] sm:$0xff] %v306
              %v308 = vld [vmem:[%s284 + $0x80] sm:$0xff]
              %309 = vst [vmem:[%s285 + $0x80] sm:$0xff] %v308
              %v310 = vld [vmem:[%s284 + $0x90] sm:$0xff]
              %311 = vst [vmem:[%s285 + $0x90] sm:$0xff] %v310
              %v312 = vld [vmem:[%s284 + $0x98] sm:$0xff]
              %313 = vst [vmem:[%s285 + $0x98] sm:$0xff] %v312
              %v314 = vld [vmem:[%s284 + $0xa8] sm:$0xff]
              %315 = vst [vmem:[%s285 + $0xa8] sm:$0xff] %v314
              %v316 = vld [vmem:[%s284 + $0xb0] sm:$0xff]
              %317 = vst [vmem:[%s285 + $0xb0] sm:$0xff] %v316
              %v318 = vld [vmem:[%s284 + $0xc0] sm:$0xff]
              %319 = vst [vmem:[%s285 + $0xc0] sm:$0xff] %v318
              %v320 = vld [vmem:[%s284 + $0xc8] sm:$0xff]
              %321 = vst [vmem:[%s285 + $0xc8] sm:$0xff] %v320
              %v322 = vld [vmem:[%s284 + $0xd8] sm:$0xff]
              %323 = vst [vmem:[%s285 + $0xd8] sm:$0xff] %v322
              %v324 = vld [vmem:[%s284 + $0xe0] sm:$0xff]
              %325 = vst [vmem:[%s285 + $0xe0] sm:$0xff] %v324
              %v326 = vld [vmem:[%s284 + $0xf0] sm:$0xff]
              %327 = vst [vmem:[%s285 + $0xf0] sm:$0xff] %v326
              %v328 = vld [vmem:[%s284 + $0xf8] sm:$0xff]
              %329 = vst [vmem:[%s285 + $0xf8] sm:$0xff] %v328
              %v330 = vld [vmem:[%s284 + $0x108] sm:$0xff]
              %331 = vst [vmem:[%s285 + $0x108] sm:$0xff] %v330
              %v332 = vld [vmem:[%s284 + $0x110] sm:$0xff]
              %333 = vst [vmem:[%s285 + $0x110] sm:$0xff] %v332
            $region64: #{residual_conv_unit.1} parent=58 // loop_footer
              %s283 = sadd.s32 1, %s279
            $region65: #{residual_conv_unit.1} parent=58 // loop_footer_branch
              %278 = sbr.rel target = $region61
            $region66: #{residual_conv_unit.1} parent=58 // loop_exit
              _
            %s334 = sshll.u32 1, %s273
            %s335 = ssub.s32 %s334, 1
            loop: start=0, step=1, limit=1
            $region67: #{residual_conv_unit.1} parent=58 // loop_pre_header
              _
            $region68: #{residual_conv_unit.1} parent=58 // loop_header
              %s337 = sphi 0, %s341
              %p338 = scmp.ge.s32.totalorder %s337, 1
              %s342 = sphi %s275, %s275
              %s343 = sphi %s277, %s277
            $region69: #{residual_conv_unit.1} parent=58 // loop_header_branch
              %340 = sbr.rel (%p338) target = $region73
            $region70: #{residual_conv_unit.1} parent=58 // loop_body
              %v344 = vld [vmem:[%s342] sm:%s335]
              %345 = vst [vmem:[%s343] sm:%s335] %v344
              %v346 = vld [vmem:[%s342 + $0x18] sm:%s335]
              %347 = vst [vmem:[%s343 + $0x18] sm:%s335] %v346
              %v348 = vld [vmem:[%s342 + $0x30] sm:%s335]
              %349 = vst [vmem:[%s343 + $0x30] sm:%s335] %v348
              %v350 = vld [vmem:[%s342 + $0x48] sm:%s335]
              %351 = vst [vmem:[%s343 + $0x48] sm:%s335] %v350
              %v352 = vld [vmem:[%s342 + $0x60] sm:%s335]
              %353 = vst [vmem:[%s343 + $0x60] sm:%s335] %v352
              %v354 = vld [vmem:[%s342 + $0x78] sm:%s335]
              %355 = vst [vmem:[%s343 + $0x78] sm:%s335] %v354
              %v356 = vld [vmem:[%s342 + $0x90] sm:%s335]
              %357 = vst [vmem:[%s343 + $0x90] sm:%s335] %v356
              %v358 = vld [vmem:[%s342 + $0xa8] sm:%s335]
              %359 = vst [vmem:[%s343 + $0xa8] sm:%s335] %v358
              %v360 = vld [vmem:[%s342 + $0xc0] sm:%s335]
              %361 = vst [vmem:[%s343 + $0xc0] sm:%s335] %v360
              %v362 = vld [vmem:[%s342 + $0xd8] sm:%s335]
              %363 = vst [vmem:[%s343 + $0xd8] sm:%s335] %v362
              %v364 = vld [vmem:[%s342 + $0xf0] sm:%s335]
              %365 = vst [vmem:[%s343 + $0xf0] sm:%s335] %v364
              %v366 = vld [vmem:[%s342 + $0x108] sm:%s335]
              %367 = vst [vmem:[%s343 + $0x108] sm:%s335] %v366
            $region71: #{residual_conv_unit.1} parent=58 // loop_footer
              %s341 = sadd.s32 1, %s337
            $region72: #{residual_conv_unit.1} parent=58 // loop_footer_branch
              %336 = sbr.rel target = $region68
            $region73: #{residual_conv_unit.1} parent=58 // loop_exit
              _
          $region59: #{residual_conv_unit.1} parent=43 // pred_fallthru
            _
        $region44: #{residual_conv_unit.1} parent=39 // pred_fallthru
          _
        // Predicated region
        $region45: #{residual_conv_unit.1} parent=39 // pred_check
          %p231 = pneg %p227
        $region46: #{residual_conv_unit.1} parent=39 // pred_check_branch
          %233 = sbr.rel (%p231) target = $region48
        $region47: #{residual_conv_unit.1} parent=39 // pred_region
          %s234 = sshll.u32 1, 18
          %s235 = ssub.s32 %s234, 1
          loop: start=0, step=1, limit=1
          $region49: #{residual_conv_unit.1} parent=47 // loop_pre_header
            _
          $region50: #{residual_conv_unit.1} parent=47 // loop_header
            %s237 = sphi 0, %s241
            %p238 = scmp.ge.s32.totalorder %s237, 1
            %s242 = sphi %s222, %s222
            %s243 = sphi %s224, %s224
          $region51: #{residual_conv_unit.1} parent=47 // loop_header_branch
            %240 = sbr.rel (%p238) target = $region55
          $region52: #{residual_conv_unit.1} parent=47 // loop_body
            %v244 = vld [vmem:[%s242] sm:%s235]
            %245 = vst [vmem:[%s243] sm:%s235] %v244
            %v246 = vld [vmem:[%s242 + $0x18] sm:%s235]
            %247 = vst [vmem:[%s243 + $0x18] sm:%s235] %v246
            %v248 = vld [vmem:[%s242 + $0x30] sm:%s235]
            %249 = vst [vmem:[%s243 + $0x30] sm:%s235] %v248
            %v250 = vld [vmem:[%s242 + $0x48] sm:%s235]
            %251 = vst [vmem:[%s243 + $0x48] sm:%s235] %v250
            %v252 = vld [vmem:[%s242 + $0x60] sm:%s235]
            %253 = vst [vmem:[%s243 + $0x60] sm:%s235] %v252
            %v254 = vld [vmem:[%s242 + $0x78] sm:%s235]
            %255 = vst [vmem:[%s243 + $0x78] sm:%s235] %v254
            %v256 = vld [vmem:[%s242 + $0x90] sm:%s235]
            %257 = vst [vmem:[%s243 + $0x90] sm:%s235] %v256
            %v258 = vld [vmem:[%s242 + $0xa8] sm:%s235]
            %259 = vst [vmem:[%s243 + $0xa8] sm:%s235] %v258
            %v260 = vld [vmem:[%s242 + $0xc0] sm:%s235]
            %261 = vst [vmem:[%s243 + $0xc0] sm:%s235] %v260
            %v262 = vld [vmem:[%s242 + $0xd8] sm:%s235]
            %263 = vst [vmem:[%s243 + $0xd8] sm:%s235] %v262
            %v264 = vld [vmem:[%s242 + $0xf0] sm:%s235]
            %265 = vst [vmem:[%s243 + $0xf0] sm:%s235] %v264
            %v266 = vld [vmem:[%s242 + $0x108] sm:%s235]
            %267 = vst [vmem:[%s243 + $0x108] sm:%s235] %v266
          $region53: #{residual_conv_unit.1} parent=47 // loop_footer
            %s241 = sadd.s32 1, %s237
          $region54: #{residual_conv_unit.1} parent=47 // loop_footer_branch
            %236 = sbr.rel target = $region50
          $region55: #{residual_conv_unit.1} parent=47 // loop_exit
            _
        $region48: #{residual_conv_unit.1} parent=39 // pred_fallthru
          _
        // Predicated region
        $region74: #{residual_conv_unit.1} parent=39 // pred_check
          _
        $region75: #{residual_conv_unit.1} parent=39 // pred_check_branch
          %370 = sbr.rel (0) target = $region77
        $region76: #{residual_conv_unit.1} parent=39 // pred_region
          %371 = vsyncadd %s225, 3456
        $region77: #{residual_conv_unit.1} parent=39 // pred_fallthru
          _
      $region40: #{residual_conv_unit.1} parent=35 // pred_fallthru
        _
      %s372 = smul.u32 %s21, 8
      %s373 = smul.u32 %s216, 288
      %s374 = scalar_lea.vmem [#allocation2], %s373
      %s375 = scalar_lea.sflag [#allocation4], %s216
      %s376 = smul.u32 12, 18
      %s377 = smul.u32 %s376, 1
      %s378 = sshll.u32 %s377, 4
      %379 = dma.done %s375, %s378
      %s380 = sadd.s32 %s21, 1
      %p381 = scmp.lt.s32.totalorder %s380, 3
      // Predicated region
      $region78: #{residual_conv_unit.1} parent=35 // pred_check
        %p382 = pneg %p381
      $region79: #{residual_conv_unit.1} parent=35 // pred_check_branch
        %384 = sbr.rel (%p382) target = $region81
      $region80: #{residual_conv_unit.1} parent=35 // pred_region
        %s385 = smul.u32 %s380, 8
        %s386 = ssub.s32 1, %s216
        %s387 = smul.u32 %s385, 24
        %s388 = smul.u32 %s20, 672
        %s389 = sadd.s32 %s387, %s388
        %s390 = scalar_lea.vmem %s0, %s389
        %s391 = smul.u32 %s386, 288
        %s392 = scalar_lea.vmem [#allocation2], %s391
        %s393 = scalar_lea.sflag [#allocation4], %s386
        %p395 = scmp.lt.u32.totalorder 18, 8
        %p396 = pneg %p395
        // Predicated region
        $region82: #{residual_conv_unit.1} parent=80 // pred_check
          _
        $region83: #{residual_conv_unit.1} parent=80 // pred_check_branch
          %398 = sbr.rel (%p395) target = $region85
        $region84: #{residual_conv_unit.1} parent=80 // pred_region
          %s436 = sand.u32 18, 7
          %p437 = scmp.eq.s32.totalorder %s436, 0
          %p438 = pneg %p437
          // Predicated region
          $region97: #{residual_conv_unit.1} parent=84 // pred_check
            _
          $region98: #{residual_conv_unit.1} parent=84 // pred_check_branch
            %440 = sbr.rel (%p437) target = $region100
          $region99: #{residual_conv_unit.1} parent=84 // pred_region
            %s441 = sand.u32 18, 7
            %s442 = ssub.s32 18, %s441
            %s443 = scalar_lea.vmem %s390, %s442
            %s444 = ssub.s32 18, %s441
            %s445 = scalar_lea.vmem %s392, %s444 [#allocation2]
            loop: start=0, step=1, limit=1
            $region101: #{residual_conv_unit.1} parent=99 // loop_pre_header
              _
            $region102: #{residual_conv_unit.1} parent=99 // loop_header
              %s447 = sphi 0, %s451
              %p448 = scmp.ge.s32.totalorder %s447, 1
              %s452 = sphi %s390, %s390
              %s453 = sphi %s392, %s392
            $region103: #{residual_conv_unit.1} parent=99 // loop_header_branch
              %450 = sbr.rel (%p448) target = $region107
            $region104: #{residual_conv_unit.1} parent=99 // loop_body
              %v454 = vld [vmem:[%s452] sm:$0xff]
              %455 = vst [vmem:[%s453] sm:$0xff] %v454
              %v456 = vld [vmem:[%s452 + $0x8] sm:$0xff]
              %457 = vst [vmem:[%s453 + $0x8] sm:$0xff] %v456
              %v458 = vld [vmem:[%s452 + $0x18] sm:$0xff]
              %459 = vst [vmem:[%s453 + $0x18] sm:$0xff] %v458
              %v460 = vld [vmem:[%s452 + $0x20] sm:$0xff]
              %461 = vst [vmem:[%s453 + $0x20] sm:$0xff] %v460
              %v462 = vld [vmem:[%s452 + $0x30] sm:$0xff]
              %463 = vst [vmem:[%s453 + $0x30] sm:$0xff] %v462
              %v464 = vld [vmem:[%s452 + $0x38] sm:$0xff]
              %465 = vst [vmem:[%s453 + $0x38] sm:$0xff] %v464
              %v466 = vld [vmem:[%s452 + $0x48] sm:$0xff]
              %467 = vst [vmem:[%s453 + $0x48] sm:$0xff] %v466
              %v468 = vld [vmem:[%s452 + $0x50] sm:$0xff]
              %469 = vst [vmem:[%s453 + $0x50] sm:$0xff] %v468
              %v470 = vld [vmem:[%s452 + $0x60] sm:$0xff]
              %471 = vst [vmem:[%s453 + $0x60] sm:$0xff] %v470
              %v472 = vld [vmem:[%s452 + $0x68] sm:$0xff]
              %473 = vst [vmem:[%s453 + $0x68] sm:$0xff] %v472
              %v474 = vld [vmem:[%s452 + $0x78] sm:$0xff]
              %475 = vst [vmem:[%s453 + $0x78] sm:$0xff] %v474
              %v476 = vld [vmem:[%s452 + $0x80] sm:$0xff]
              %477 = vst [vmem:[%s453 + $0x80] sm:$0xff] %v476
              %v478 = vld [vmem:[%s452 + $0x90] sm:$0xff]
              %479 = vst [vmem:[%s453 + $0x90] sm:$0xff] %v478
              %v480 = vld [vmem:[%s452 + $0x98] sm:$0xff]
              %481 = vst [vmem:[%s453 + $0x98] sm:$0xff] %v480
              %v482 = vld [vmem:[%s452 + $0xa8] sm:$0xff]
              %483 = vst [vmem:[%s453 + $0xa8] sm:$0xff] %v482
              %v484 = vld [vmem:[%s452 + $0xb0] sm:$0xff]
              %485 = vst [vmem:[%s453 + $0xb0] sm:$0xff] %v484
              %v486 = vld [vmem:[%s452 + $0xc0] sm:$0xff]
              %487 = vst [vmem:[%s453 + $0xc0] sm:$0xff] %v486
              %v488 = vld [vmem:[%s452 + $0xc8] sm:$0xff]
              %489 = vst [vmem:[%s453 + $0xc8] sm:$0xff] %v488
              %v490 = vld [vmem:[%s452 + $0xd8] sm:$0xff]
              %491 = vst [vmem:[%s453 + $0xd8] sm:$0xff] %v490
              %v492 = vld [vmem:[%s452 + $0xe0] sm:$0xff]
              %493 = vst [vmem:[%s453 + $0xe0] sm:$0xff] %v492
              %v494 = vld [vmem:[%s452 + $0xf0] sm:$0xff]
              %495 = vst [vmem:[%s453 + $0xf0] sm:$0xff] %v494
              %v496 = vld [vmem:[%s452 + $0xf8] sm:$0xff]
              %497 = vst [vmem:[%s453 + $0xf8] sm:$0xff] %v496
              %v498 = vld [vmem:[%s452 + $0x108] sm:$0xff]
              %499 = vst [vmem:[%s453 + $0x108] sm:$0xff] %v498
              %v500 = vld [vmem:[%s452 + $0x110] sm:$0xff]
              %501 = vst [vmem:[%s453 + $0x110] sm:$0xff] %v500
            $region105: #{residual_conv_unit.1} parent=99 // loop_footer
              %s451 = sadd.s32 1, %s447
            $region106: #{residual_conv_unit.1} parent=99 // loop_footer_branch
              %446 = sbr.rel target = $region102
            $region107: #{residual_conv_unit.1} parent=99 // loop_exit
              _
            %s502 = sshll.u32 1, %s441
            %s503 = ssub.s32 %s502, 1
            loop: start=0, step=1, limit=1
            $region108: #{residual_conv_unit.1} parent=99 // loop_pre_header
              _
            $region109: #{residual_conv_unit.1} parent=99 // loop_header
              %s505 = sphi 0, %s509
              %p506 = scmp.ge.s32.totalorder %s505, 1
              %s510 = sphi %s443, %s443
              %s511 = sphi %s445, %s445
            $region110: #{residual_conv_unit.1} parent=99 // loop_header_branch
              %508 = sbr.rel (%p506) target = $region114
            $region111: #{residual_conv_unit.1} parent=99 // loop_body
              %v512 = vld [vmem:[%s510] sm:%s503]
              %513 = vst [vmem:[%s511] sm:%s503] %v512
              %v514 = vld [vmem:[%s510 + $0x18] sm:%s503]
              %515 = vst [vmem:[%s511 + $0x18] sm:%s503] %v514
              %v516 = vld [vmem:[%s510 + $0x30] sm:%s503]
              %517 = vst [vmem:[%s511 + $0x30] sm:%s503] %v516
              %v518 = vld [vmem:[%s510 + $0x48] sm:%s503]
              %519 = vst [vmem:[%s511 + $0x48] sm:%s503] %v518
              %v520 = vld [vmem:[%s510 + $0x60] sm:%s503]
              %521 = vst [vmem:[%s511 + $0x60] sm:%s503] %v520
              %v522 = vld [vmem:[%s510 + $0x78] sm:%s503]
              %523 = vst [vmem:[%s511 + $0x78] sm:%s503] %v522
              %v524 = vld [vmem:[%s510 + $0x90] sm:%s503]
              %525 = vst [vmem:[%s511 + $0x90] sm:%s503] %v524
              %v526 = vld [vmem:[%s510 + $0xa8] sm:%s503]
              %527 = vst [vmem:[%s511 + $0xa8] sm:%s503] %v526
              %v528 = vld [vmem:[%s510 + $0xc0] sm:%s503]
              %529 = vst [vmem:[%s511 + $0xc0] sm:%s503] %v528
              %v530 = vld [vmem:[%s510 + $0xd8] sm:%s503]
              %531 = vst [vmem:[%s511 + $0xd8] sm:%s503] %v530
              %v532 = vld [vmem:[%s510 + $0xf0] sm:%s503]
              %533 = vst [vmem:[%s511 + $0xf0] sm:%s503] %v532
              %v534 = vld [vmem:[%s510 + $0x108] sm:%s503]
              %535 = vst [vmem:[%s511 + $0x108] sm:%s503] %v534
            $region112: #{residual_conv_unit.1} parent=99 // loop_footer
              %s509 = sadd.s32 1, %s505
            $region113: #{residual_conv_unit.1} parent=99 // loop_footer_branch
              %504 = sbr.rel target = $region109
            $region114: #{residual_conv_unit.1} parent=99 // loop_exit
              _
          $region100: #{residual_conv_unit.1} parent=84 // pred_fallthru
            _
        $region85: #{residual_conv_unit.1} parent=80 // pred_fallthru
          _
        // Predicated region
        $region86: #{residual_conv_unit.1} parent=80 // pred_check
          %p399 = pneg %p395
        $region87: #{residual_conv_unit.1} parent=80 // pred_check_branch
          %401 = sbr.rel (%p399) target = $region89
        $region88: #{residual_conv_unit.1} parent=80 // pred_region
          %s402 = sshll.u32 1, 18
          %s403 = ssub.s32 %s402, 1
          loop: start=0, step=1, limit=1
          $region90: #{residual_conv_unit.1} parent=88 // loop_pre_header
            _
          $region91: #{residual_conv_unit.1} parent=88 // loop_header
            %s405 = sphi 0, %s409
            %p406 = scmp.ge.s32.totalorder %s405, 1
            %s410 = sphi %s390, %s390
            %s411 = sphi %s392, %s392
          $region92: #{residual_conv_unit.1} parent=88 // loop_header_branch
            %408 = sbr.rel (%p406) target = $region96
          $region93: #{residual_conv_unit.1} parent=88 // loop_body
            %v412 = vld [vmem:[%s410] sm:%s403]
            %413 = vst [vmem:[%s411] sm:%s403] %v412
            %v414 = vld [vmem:[%s410 + $0x18] sm:%s403]
            %415 = vst [vmem:[%s411 + $0x18] sm:%s403] %v414
            %v416 = vld [vmem:[%s410 + $0x30] sm:%s403]
            %417 = vst [vmem:[%s411 + $0x30] sm:%s403] %v416
            %v418 = vld [vmem:[%s410 + $0x48] sm:%s403]
            %419 = vst [vmem:[%s411 + $0x48] sm:%s403] %v418
            %v420 = vld [vmem:[%s410 + $0x60] sm:%s403]
            %421 = vst [vmem:[%s411 + $0x60] sm:%s403] %v420
            %v422 = vld [vmem:[%s410 + $0x78] sm:%s403]
            %423 = vst [vmem:[%s411 + $0x78] sm:%s403] %v422
            %v424 = vld [vmem:[%s410 + $0x90] sm:%s403]
            %425 = vst [vmem:[%s411 + $0x90] sm:%s403] %v424
            %v426 = vld [vmem:[%s410 + $0xa8] sm:%s403]
            %427 = vst [vmem:[%s411 + $0xa8] sm:%s403] %v426
            %v428 = vld [vmem:[%s410 + $0xc0] sm:%s403]
            %429 = vst [vmem:[%s411 + $0xc0] sm:%s403] %v428
            %v430 = vld [vmem:[%s410 + $0xd8] sm:%s403]
            %431 = vst [vmem:[%s411 + $0xd8] sm:%s403] %v430
            %v432 = vld [vmem:[%s410 + $0xf0] sm:%s403]
            %433 = vst [vmem:[%s411 + $0xf0] sm:%s403] %v432
            %v434 = vld [vmem:[%s410 + $0x108] sm:%s403]
            %435 = vst [vmem:[%s411 + $0x108] sm:%s403] %v434
          $region94: #{residual_conv_unit.1} parent=88 // loop_footer
            %s409 = sadd.s32 1, %s405
          $region95: #{residual_conv_unit.1} parent=88 // loop_footer_branch
            %404 = sbr.rel target = $region91
          $region96: #{residual_conv_unit.1} parent=88 // loop_exit
            _
        $region89: #{residual_conv_unit.1} parent=80 // pred_fallthru
          _
        // Predicated region
        $region115: #{residual_conv_unit.1} parent=80 // pred_check
          _
        $region116: #{residual_conv_unit.1} parent=80 // pred_check_branch
          %538 = sbr.rel (0) target = $region118
        $region117: #{residual_conv_unit.1} parent=80 // pred_region
          %539 = vsyncadd %s393, 3456
        $region118: #{residual_conv_unit.1} parent=80 // pred_fallthru
          _
      $region81: #{residual_conv_unit.1} parent=35 // pred_fallthru
        _
      %v540 = vld [vmem:[%s374] sm:$0xff]
      %v541 = vld [vmem:[%s374 + $0x8] sm:$0xff]
      %v542 = vld [vmem:[%s374 + $0x18] sm:$0xff]
      %v543 = vld [vmem:[%s374 + $0x20] sm:$0xff]
      %v544 = vld [vmem:[%s374 + $0x30] sm:$0xff]
      %v545 = vld [vmem:[%s374 + $0x38] sm:$0xff]
      %v546 = vld [vmem:[%s374 + $0x48] sm:$0xff]
      %v547 = vld [vmem:[%s374 + $0x50] sm:$0xff]
      %v548 = vld [vmem:[%s374 + $0x60] sm:$0xff]
      %v549 = vld [vmem:[%s374 + $0x68] sm:$0xff]
      %v550 = vld [vmem:[%s374 + $0x78] sm:$0xff]
      %v551 = vld [vmem:[%s374 + $0x80] sm:$0xff]
      %v552 = vld [vmem:[%s374 + $0x90] sm:$0xff]
      %v553 = vld [vmem:[%s374 + $0x98] sm:$0xff]
      %v554 = vld [vmem:[%s374 + $0xa8] sm:$0xff]
      %v555 = vld [vmem:[%s374 + $0xb0] sm:$0xff]
      %v556 = vld [vmem:[%s374 + $0xc0] sm:$0xff]
      %v557 = vld [vmem:[%s374 + $0xc8] sm:$0xff]
      %v558 = vld [vmem:[%s374 + $0xd8] sm:$0xff]
      %v559 = vld [vmem:[%s374 + $0xe0] sm:$0xff]
      %v560 = vld [vmem:[%s374 + $0xf0] sm:$0xff]
      %v561 = vld [vmem:[%s374 + $0xf8] sm:$0xff]
      %v562 = vld [vmem:[%s374 + $0x108] sm:$0xff]
      %v563 = vld [vmem:[%s374 + $0x110] sm:$0xff]
      %v564 = vmax.f32 %v540, 0.0
      %v565 = vmax.f32 %v541, 0.0
      %v566 = vmax.f32 %v542, 0.0
      %v567 = vmax.f32 %v543, 0.0
      %v568 = vmax.f32 %v544, 0.0
      %v569 = vmax.f32 %v545, 0.0
      %v570 = vmax.f32 %v546, 0.0
      %v571 = vmax.f32 %v547, 0.0
      %v572 = vmax.f32 %v548, 0.0
      %v573 = vmax.f32 %v549, 0.0
      %v574 = vmax.f32 %v550, 0.0
      %v575 = vmax.f32 %v551, 0.0
      %v576 = vmax.f32 %v552, 0.0
      %v577 = vmax.f32 %v553, 0.0
      %v578 = vmax.f32 %v554, 0.0
      %v579 = vmax.f32 %v555, 0.0
      %v580 = vmax.f32 %v556, 0.0
      %v581 = vmax.f32 %v557, 0.0
      %v582 = vmax.f32 %v558, 0.0
      %v583 = vmax.f32 %v559, 0.0
      %v584 = vmax.f32 %v560, 0.0
      %v585 = vmax.f32 %v561, 0.0
      %v586 = vmax.f32 %v562, 0.0
      %v587 = vmax.f32 %v563, 0.0
      %v588 = vpack.c.bf16 %v565, %v564
      %v589 = vpack.c.bf16 %v567, %v566
      %v590 = vpack.c.bf16 %v569, %v568
      %v591 = vpack.c.bf16 %v571, %v570
      %v592 = vpack.c.bf16 %v573, %v572
      %v593 = vpack.c.bf16 %v575, %v574
      %v594 = vpack.c.bf16 %v577, %v576
      %v595 = vpack.c.bf16 %v579, %v578
      %v596 = vpack.c.bf16 %v581, %v580
      %v597 = vpack.c.bf16 %v583, %v582
      %v598 = vpack.c.bf16 %v585, %v584
      %v599 = vpack.c.bf16 %v587, %v586
      %v600 = vld [vmem:[%s1] sm:$0xf]
      %v601 = vld [vmem:[%s1 + $0x4] sm:$0xf]
      %v602 = vld [vmem:[%s1 + $0x8] sm:$0xf]
      %v603 = vld [vmem:[%s1 + $0xc] sm:$0xf]
      %v604 = vld [vmem:[%s1 + $0x10] sm:$0xf]
      %v605 = vld [vmem:[%s1 + $0x14] sm:$0xf]
      %v606 = vld [vmem:[%s1 + $0x18] sm:$0xf]
      %v607 = vld [vmem:[%s1 + $0x1c] sm:$0xf]
      %v608 = vld [vmem:[%s1 + $0x20] sm:$0xf]
      %v609 = vld [vmem:[%s1 + $0x24] sm:$0xf]
      %v610 = vld [vmem:[%s1 + $0x28] sm:$0xf]
      %v611 = vld [vmem:[%s1 + $0x2c] sm:$0xf]
      %v612 = vld [vmem:[%s1 + $0x30] sm:$0xf]
      %v613 = vld [vmem:[%s1 + $0x34] sm:$0xf]
      %v614 = vld [vmem:[%s1 + $0x38] sm:$0xf]
      %v615 = vld [vmem:[%s1 + $0x3c] sm:$0xf]
      %s616 = scalar_lea.vmem %s1, 192
      %v617 = vld [vmem:[%s616] sm:$0xf]
      %v618 = vld [vmem:[%s616 + $0x4] sm:$0xf]
      %v619 = vld [vmem:[%s616 + $0x8] sm:$0xf]
      %v620 = vld [vmem:[%s616 + $0xc] sm:$0xf]
      %v621 = vld [vmem:[%s616 + $0x10] sm:$0xf]
      %v622 = vld [vmem:[%s616 + $0x14] sm:$0xf]
      %v623 = vld [vmem:[%s616 + $0x18] sm:$0xf]
      %v624 = vld [vmem:[%s616 + $0x1c] sm:$0xf]
      %v625 = vld [vmem:[%s616 + $0x20] sm:$0xf]
      %v626 = vld [vmem:[%s616 + $0x24] sm:$0xf]
      %v627 = vld [vmem:[%s616 + $0x28] sm:$0xf]
      %v628 = vld [vmem:[%s616 + $0x2c] sm:$0xf]
      %v629 = vld [vmem:[%s616 + $0x30] sm:$0xf]
      %v630 = vld [vmem:[%s616 + $0x34] sm:$0xf]
      %v631 = vld [vmem:[%s616 + $0x38] sm:$0xf]
      %v632 = vld [vmem:[%s616 + $0x3c] sm:$0xf]
      %v649 = vunpack.c.l.b16 %v617
      %v650 = vunpack.c.l.b16 %v618
      %v651 = vunpack.c.l.b16 %v619
      %v652 = vunpack.c.l.b16 %v620
      %v653 = vunpack.c.l.b16 %v621
      %v654 = vunpack.c.l.b16 %v622
      %v655 = vunpack.c.l.b16 %v623
      %v656 = vunpack.c.l.b16 %v624
      %v657 = vunpack.c.l.b16 %v625
      %v658 = vunpack.c.l.b16 %v626
      %v659 = vunpack.c.l.b16 %v627
      %v660 = vunpack.c.l.b16 %v628
      %v661 = vunpack.c.l.b16 %v629
      %v662 = vunpack.c.l.b16 %v630
      %v663 = vunpack.c.l.b16 %v631
      %v664 = vunpack.c.l.b16 %v632
      %v665 = vpack.c.b16 %v650, %v649
      %v666 = vpack.c.b16 %v652, %v651
      %v667 = vpack.c.b16 %v654, %v653
      %v668 = vpack.c.b16 %v656, %v655
      %v669 = vpack.c.b16 %v658, %v657
      %v670 = vpack.c.b16 %v660, %v659
      %v671 = vpack.c.b16 %v662, %v661
      %v672 = vpack.c.b16 %v664, %v663
      %681 = vmatprep.subr.bf16.mxu0 0
      %682 = vmatpush1.bf16.msra.mxu0 %v672
      %683 = vmatprep.subr.bf16.mxu0 0
      %684 = vmatpush1.bf16.msra.mxu0 %v671
      %685 = vmatprep.subr.bf16.mxu0 0
      %686 = vmatpush1.bf16.msra.mxu0 %v670
      %687 = vmatprep.subr.bf16.mxu0 0
      %688 = vmatpush1.bf16.msra.mxu0 %v669
      %689 = vmatprep.subr.bf16.mxu0 0
      %690 = vmatpush1.bf16.msra.mxu0 %v668
      %691 = vmatprep.subr.bf16.mxu0 0
      %692 = vmatpush1.bf16.msra.mxu0 %v667
      %693 = vmatprep.subr.bf16.mxu0 0
      %694 = vmatpush1.bf16.msra.mxu0 %v666
      %695 = vmatprep.subr.bf16.mxu0 0
      %696 = vmatpush1.bf16.msra.mxu0 %v665
      %697 = vmatprep.subr.bf16.mxu0 0
      %698 = vmatpush2.bf16.msra.mxu0 0
      %699 = vmatprep.subr.bf16.mxu0 0
      %700 = vmatpush2.bf16.msra.mxu0 0
      %701 = vmatprep.subr.bf16.mxu0 0
      %702 = vmatpush2.bf16.msra.mxu0 0
      %703 = vmatprep.subr.bf16.mxu0 0
      %704 = vmatpush2.bf16.msra.mxu0 0
      %705 = vmatprep.subr.bf16.mxu0 0
      %706 = vmatpush2.bf16.msra.mxu0 0
      %707 = vmatprep.subr.bf16.mxu0 0
      %708 = vmatpush2.bf16.msra.mxu0 0
      %709 = vmatprep.subr.bf16.mxu0 0
      %710 = vmatpush2.bf16.msra.mxu0 0
      %711 = vmatprep.subr.bf16.mxu0 0
      %712 = vmatpush2.bf16.msra.mxu0 0
      %713 = vmatprep.mubr.bf16.mxu0 0
      %714 = vmatmul.mubr.bf16.gmra.mxu0 %v589
      %v715 = vpop.f32.mrf.mxu0
      %v716 = vadd.f32 0.0, %v715
      %v717 = vpop.f32.mrf.mxu0
      %v718 = vpop.f32.mrf.mxu0
      %v719 = vadd.f32 0.0, %v718
      %v720 = vpop.f32.mrf.mxu0
      %721 = vmatprep.mubr.bf16.mxu0 0
      %722 = vmatmul.mubr.bf16.gmra.mxu0 %v590
      %v723 = vpop.f32.mrf.mxu0
      %v724 = vadd.f32 0.0, %v723
      %v725 = vpop.f32.mrf.mxu0
      %v726 = vpop.f32.mrf.mxu0
      %v727 = vadd.f32 0.0, %v726
      %v728 = vpop.f32.mrf.mxu0
      %729 = vmatprep.mubr.bf16.mxu0 0
      %730 = vmatmul.mubr.bf16.gmra.mxu0 %v591
      %v731 = vpop.f32.mrf.mxu0
      %v732 = vadd.f32 0.0, %v731
      %v733 = vpop.f32.mrf.mxu0
      %v734 = vpop.f32.mrf.mxu0
      %v735 = vadd.f32 0.0, %v734
      %v736 = vpop.f32.mrf.mxu0
      %737 = vmatprep.mubr.bf16.mxu0 0
      %738 = vmatmul.mubr.bf16.gmra.mxu0 %v592
      %v739 = vpop.f32.mrf.mxu0
      %v740 = vadd.f32 0.0, %v739
      %v741 = vpop.f32.mrf.mxu0
      %v742 = vpop.f32.mrf.mxu0
      %v743 = vadd.f32 0.0, %v742
      %v744 = vpop.f32.mrf.mxu0
      %745 = vmatprep.mubr.bf16.mxu0 0
      %746 = vmatmul.mubr.bf16.gmra.mxu0 %v593
      %v747 = vpop.f32.mrf.mxu0
      %v748 = vadd.f32 0.0, %v747
      %v749 = vpop.f32.mrf.mxu0
      %v750 = vpop.f32.mrf.mxu0
      %v751 = vadd.f32 0.0, %v750
      %v752 = vpop.f32.mrf.mxu0
      %753 = vmatprep.mubr.bf16.mxu0 0
      %754 = vmatmul.mubr.bf16.gmra.mxu0 %v594
      %v755 = vpop.f32.mrf.mxu0
      %v756 = vadd.f32 0.0, %v755
      %v757 = vpop.f32.mrf.mxu0
      %v758 = vpop.f32.mrf.mxu0
      %v759 = vadd.f32 0.0, %v758
      %v760 = vpop.f32.mrf.mxu0
      %761 = vmatprep.mubr.bf16.mxu0 0
      %762 = vmatmul.mubr.bf16.gmra.mxu0 %v595
      %v763 = vpop.f32.mrf.mxu0
      %v764 = vadd.f32 0.0, %v763
      %v765 = vpop.f32.mrf.mxu0
      %v766 = vpop.f32.mrf.mxu0
      %v767 = vadd.f32 0.0, %v766
      %v768 = vpop.f32.mrf.mxu0
      %769 = vmatprep.mubr.bf16.mxu0 0
      %770 = vmatmul.mubr.bf16.gmra.mxu0 %v596
      %v771 = vpop.f32.mrf.mxu0
      %v772 = vadd.f32 0.0, %v771
      %v773 = vpop.f32.mrf.mxu0
      %v774 = vpop.f32.mrf.mxu0
      %v775 = vadd.f32 0.0, %v774
      %v776 = vpop.f32.mrf.mxu0
      %777 = vmatprep.mubr.bf16.mxu0 0
      %778 = vmatmul.mubr.bf16.gmra.mxu0 %v597
      %v779 = vpop.f32.mrf.mxu0
      %v780 = vadd.f32 0.0, %v779
      %v781 = vpop.f32.mrf.mxu0
      %v782 = vpop.f32.mrf.mxu0
      %v783 = vadd.f32 0.0, %v782
      %v784 = vpop.f32.mrf.mxu0
      %785 = vmatprep.mubr.bf16.mxu0 0
      %786 = vmatmul.mubr.bf16.gmra.mxu0 %v598
      %v787 = vpop.f32.mrf.mxu0
      %v788 = vadd.f32 0.0, %v787
      %v789 = vpop.f32.mrf.mxu0
      %v790 = vpop.f32.mrf.mxu0
      %v791 = vadd.f32 0.0, %v790
      %v792 = vpop.f32.mrf.mxu0
      %793 = vdwg.mxu0
      %v810 = vunpack.c.l.b16 %v600
      %v811 = vunpack.c.l.b16 %v601
      %v812 = vunpack.c.l.b16 %v602
      %v813 = vunpack.c.l.b16 %v603
      %v814 = vunpack.c.l.b16 %v604
      %v815 = vunpack.c.l.b16 %v605
      %v816 = vunpack.c.l.b16 %v606
      %v817 = vunpack.c.l.b16 %v607
      %v818 = vunpack.c.l.b16 %v608
      %v819 = vunpack.c.l.b16 %v609
      %v820 = vunpack.c.l.b16 %v610
      %v821 = vunpack.c.l.b16 %v611
      %v822 = vunpack.c.l.b16 %v612
      %v823 = vunpack.c.l.b16 %v613
      %v824 = vunpack.c.l.b16 %v614
      %v825 = vunpack.c.l.b16 %v615
      %v826 = vpack.c.b16 %v811, %v810
      %v827 = vpack.c.b16 %v813, %v812
      %v828 = vpack.c.b16 %v815, %v814
      %v829 = vpack.c.b16 %v817, %v816
      %v830 = vpack.c.b16 %v819, %v818
      %v831 = vpack.c.b16 %v821, %v820
      %v832 = vpack.c.b16 %v823, %v822
      %v833 = vpack.c.b16 %v825, %v824
      %842 = vmatprep.subr.bf16.mxu0 0
      %843 = vmatpush1.bf16.msra.mxu0 %v833
      %844 = vmatprep.subr.bf16.mxu0 0
      %845 = vmatpush1.bf16.msra.mxu0 %v832
      %846 = vmatprep.subr.bf16.mxu0 0
      %847 = vmatpush1.bf16.msra.mxu0 %v831
      %848 = vmatprep.subr.bf16.mxu0 0
      %849 = vmatpush1.bf16.msra.mxu0 %v830
      %850 = vmatprep.subr.bf16.mxu0 0
      %851 = vmatpush1.bf16.msra.mxu0 %v829
      %852 = vmatprep.subr.bf16.mxu0 0
      %853 = vmatpush1.bf16.msra.mxu0 %v828
      %854 = vmatprep.subr.bf16.mxu0 0
      %855 = vmatpush1.bf16.msra.mxu0 %v827
      %856 = vmatprep.subr.bf16.mxu0 0
      %857 = vmatpush1.bf16.msra.mxu0 %v826
      %858 = vmatprep.subr.bf16.mxu0 0
      %859 = vmatpush2.bf16.msra.mxu0 0
      %860 = vmatprep.subr.bf16.mxu0 0
      %861 = vmatpush2.bf16.msra.mxu0 0
      %862 = vmatprep.subr.bf16.mxu0 0
      %863 = vmatpush2.bf16.msra.mxu0 0
      %864 = vmatprep.subr.bf16.mxu0 0
      %865 = vmatpush2.bf16.msra.mxu0 0
      %866 = vmatprep.subr.bf16.mxu0 0
      %867 = vmatpush2.bf16.msra.mxu0 0
      %868 = vmatprep.subr.bf16.mxu0 0
      %869 = vmatpush2.bf16.msra.mxu0 0
      %870 = vmatprep.subr.bf16.mxu0 0
      %871 = vmatpush2.bf16.msra.mxu0 0
      %872 = vmatprep.subr.bf16.mxu0 0
      %873 = vmatpush2.bf16.msra.mxu0 0
      %874 = vmatprep.mubr.bf16.mxu0 0
      %875 = vmatmul.mubr.bf16.gmra.mxu0 %v588
      %v876 = vpop.f32.mrf.mxu0
      %v877 = vadd.f32 %v716, %v876
      %v878 = vpop.f32.mrf.mxu0
      %v879 = vpop.f32.mrf.mxu0
      %v880 = vadd.f32 %v719, %v879
      %v881 = vpop.f32.mrf.mxu0
      %882 = vmatprep.mubr.bf16.mxu0 0
      %883 = vmatmul.mubr.bf16.gmra.mxu0 %v589
      %v884 = vpop.f32.mrf.mxu0
      %v885 = vadd.f32 %v724, %v884
      %v886 = vpop.f32.mrf.mxu0
      %v887 = vpop.f32.mrf.mxu0
      %v888 = vadd.f32 %v727, %v887
      %v889 = vpop.f32.mrf.mxu0
      %890 = vmatprep.mubr.bf16.mxu0 0
      %891 = vmatmul.mubr.bf16.gmra.mxu0 %v590
      %v892 = vpop.f32.mrf.mxu0
      %v893 = vadd.f32 %v732, %v892
      %v894 = vpop.f32.mrf.mxu0
      %v895 = vpop.f32.mrf.mxu0
      %v896 = vadd.f32 %v735, %v895
      %v897 = vpop.f32.mrf.mxu0
      %898 = vmatprep.mubr.bf16.mxu0 0
      %899 = vmatmul.mubr.bf16.gmra.mxu0 %v591
      %v900 = vpop.f32.mrf.mxu0
      %v901 = vadd.f32 %v740, %v900
      %v902 = vpop.f32.mrf.mxu0
      %v903 = vpop.f32.mrf.mxu0
      %v904 = vadd.f32 %v743, %v903
      %v905 = vpop.f32.mrf.mxu0
      %906 = vmatprep.mubr.bf16.mxu0 0
      %907 = vmatmul.mubr.bf16.gmra.mxu0 %v592
      %v908 = vpop.f32.mrf.mxu0
      %v909 = vadd.f32 %v748, %v908
      %v910 = vpop.f32.mrf.mxu0
      %v911 = vpop.f32.mrf.mxu0
      %v912 = vadd.f32 %v751, %v911
      %v913 = vpop.f32.mrf.mxu0
      %914 = vmatprep.mubr.bf16.mxu0 0
      %915 = vmatmul.mubr.bf16.gmra.mxu0 %v593
      %v916 = vpop.f32.mrf.mxu0
      %v917 = vadd.f32 %v756, %v916
      %v918 = vpop.f32.mrf.mxu0
      %v919 = vpop.f32.mrf.mxu0
      %v920 = vadd.f32 %v759, %v919
      %v921 = vpop.f32.mrf.mxu0
      %922 = vmatprep.mubr.bf16.mxu0 0
      %923 = vmatmul.mubr.bf16.gmra.mxu0 %v594
      %v924 = vpop.f32.mrf.mxu0
      %v925 = vadd.f32 %v764, %v924
      %v926 = vpop.f32.mrf.mxu0
      %v927 = vpop.f32.mrf.mxu0
      %v928 = vadd.f32 %v767, %v927
      %v929 = vpop.f32.mrf.mxu0
      %930 = vmatprep.mubr.bf16.mxu0 0
      %931 = vmatmul.mubr.bf16.gmra.mxu0 %v595
      %v932 = vpop.f32.mrf.mxu0
      %v933 = vadd.f32 %v772, %v932
      %v934 = vpop.f32.mrf.mxu0
      %v935 = vpop.f32.mrf.mxu0
      %v936 = vadd.f32 %v775, %v935
      %v937 = vpop.f32.mrf.mxu0
      %938 = vmatprep.mubr.bf16.mxu0 0
      %939 = vmatmul.mubr.bf16.gmra.mxu0 %v596
      %v940 = vpop.f32.mrf.mxu0
      %v941 = vadd.f32 %v780, %v940
      %v942 = vpop.f32.mrf.mxu0
      %v943 = vpop.f32.mrf.mxu0
      %v944 = vadd.f32 %v783, %v943
      %v945 = vpop.f32.mrf.mxu0
      %946 = vmatprep.mubr.bf16.mxu0 0
      %947 = vmatmul.mubr.bf16.gmra.mxu0 %v597
      %v948 = vpop.f32.mrf.mxu0
      %v949 = vadd.f32 %v788, %v948
      %v950 = vpop.f32.mrf.mxu0
      %v951 = vpop.f32.mrf.mxu0
      %v952 = vadd.f32 %v791, %v951
      %v953 = vpop.f32.mrf.mxu0
      %954 = vdwg.mxu0
      %s955 = scalar_lea.vmem %s1, 384
      %v956 = vld [vmem:[%s955] sm:$0xf]
      %v957 = vld [vmem:[%s955 + $0x4] sm:$0xf]
      %v958 = vld [vmem:[%s955 + $0x8] sm:$0xf]
      %v959 = vld [vmem:[%s955 + $0xc] sm:$0xf]
      %v960 = vld [vmem:[%s955 + $0x10] sm:$0xf]
      %v961 = vld [vmem:[%s955 + $0x14] sm:$0xf]
      %v962 = vld [vmem:[%s955 + $0x18] sm:$0xf]
      %v963 = vld [vmem:[%s955 + $0x1c] sm:$0xf]
      %v964 = vld [vmem:[%s955 + $0x20] sm:$0xf]
      %v965 = vld [vmem:[%s955 + $0x24] sm:$0xf]
      %v966 = vld [vmem:[%s955 + $0x28] sm:$0xf]
      %v967 = vld [vmem:[%s955 + $0x2c] sm:$0xf]
      %v968 = vld [vmem:[%s955 + $0x30] sm:$0xf]
      %v969 = vld [vmem:[%s955 + $0x34] sm:$0xf]
      %v970 = vld [vmem:[%s955 + $0x38] sm:$0xf]
      %v971 = vld [vmem:[%s955 + $0x3c] sm:$0xf]
      %v988 = vunpack.c.l.b16 %v956
      %v989 = vunpack.c.l.b16 %v957
      %v990 = vunpack.c.l.b16 %v958
      %v991 = vunpack.c.l.b16 %v959
      %v992 = vunpack.c.l.b16 %v960
      %v993 = vunpack.c.l.b16 %v961
      %v994 = vunpack.c.l.b16 %v962
      %v995 = vunpack.c.l.b16 %v963
      %v996 = vunpack.c.l.b16 %v964
      %v997 = vunpack.c.l.b16 %v965
      %v998 = vunpack.c.l.b16 %v966
      %v999 = vunpack.c.l.b16 %v967
      %v1000 = vunpack.c.l.b16 %v968
      %v1001 = vunpack.c.l.b16 %v969
      %v1002 = vunpack.c.l.b16 %v970
      %v1003 = vunpack.c.l.b16 %v971
      %v1004 = vpack.c.b16 %v989, %v988
      %v1005 = vpack.c.b16 %v991, %v990
      %v1006 = vpack.c.b16 %v993, %v992
      %v1007 = vpack.c.b16 %v995, %v994
      %v1008 = vpack.c.b16 %v997, %v996
      %v1009 = vpack.c.b16 %v999, %v998
      %v1010 = vpack.c.b16 %v1001, %v1000
      %v1011 = vpack.c.b16 %v1003, %v1002
      %1020 = vmatprep.subr.bf16.mxu0 0
      %1021 = vmatpush1.bf16.msra.mxu0 %v1011
      %1022 = vmatprep.subr.bf16.mxu0 0
      %1023 = vmatpush1.bf16.msra.mxu0 %v1010
      %1024 = vmatprep.subr.bf16.mxu0 0
      %1025 = vmatpush1.bf16.msra.mxu0 %v1009
      %1026 = vmatprep.subr.bf16.mxu0 0
      %1027 = vmatpush1.bf16.msra.mxu0 %v1008
      %1028 = vmatprep.subr.bf16.mxu0 0
      %1029 = vmatpush1.bf16.msra.mxu0 %v1007
      %1030 = vmatprep.subr.bf16.mxu0 0
      %1031 = vmatpush1.bf16.msra.mxu0 %v1006
      %1032 = vmatprep.subr.bf16.mxu0 0
      %1033 = vmatpush1.bf16.msra.mxu0 %v1005
      %1034 = vmatprep.subr.bf16.mxu0 0
      %1035 = vmatpush1.bf16.msra.mxu0 %v1004
      %1036 = vmatprep.subr.bf16.mxu0 0
      %1037 = vmatpush2.bf16.msra.mxu0 0
      %1038 = vmatprep.subr.bf16.mxu0 0
      %1039 = vmatpush2.bf16.msra.mxu0 0
      %1040 = vmatprep.subr.bf16.mxu0 0
      %1041 = vmatpush2.bf16.msra.mxu0 0
      %1042 = vmatprep.subr.bf16.mxu0 0
      %1043 = vmatpush2.bf16.msra.mxu0 0
      %1044 = vmatprep.subr.bf16.mxu0 0
      %1045 = vmatpush2.bf16.msra.mxu0 0
      %1046 = vmatprep.subr.bf16.mxu0 0
      %1047 = vmatpush2.bf16.msra.mxu0 0
      %1048 = vmatprep.subr.bf16.mxu0 0
      %1049 = vmatpush2.bf16.msra.mxu0 0
      %1050 = vmatprep.subr.bf16.mxu0 0
      %1051 = vmatpush2.bf16.msra.mxu0 0
      %1052 = vmatprep.mubr.bf16.mxu0 0
      %1053 = vmatmul.mubr.bf16.gmra.mxu0 %v590
      %v1054 = vpop.f32.mrf.mxu0
      %v1055 = vadd.f32 0.0, %v1054
      %v1056 = vpop.f32.mrf.mxu0
      %v1057 = vpop.f32.mrf.mxu0
      %v1058 = vadd.f32 0.0, %v1057
      %v1059 = vpop.f32.mrf.mxu0
      %1060 = vmatprep.mubr.bf16.mxu0 0
      %1061 = vmatmul.mubr.bf16.gmra.mxu0 %v591
      %v1062 = vpop.f32.mrf.mxu0
      %v1063 = vadd.f32 0.0, %v1062
      %v1064 = vpop.f32.mrf.mxu0
      %v1065 = vpop.f32.mrf.mxu0
      %v1066 = vadd.f32 0.0, %v1065
      %v1067 = vpop.f32.mrf.mxu0
      %1068 = vmatprep.mubr.bf16.mxu0 0
      %1069 = vmatmul.mubr.bf16.gmra.mxu0 %v592
      %v1070 = vpop.f32.mrf.mxu0
      %v1071 = vadd.f32 0.0, %v1070
      %v1072 = vpop.f32.mrf.mxu0
      %v1073 = vpop.f32.mrf.mxu0
      %v1074 = vadd.f32 0.0, %v1073
      %v1075 = vpop.f32.mrf.mxu0
      %1076 = vmatprep.mubr.bf16.mxu0 0
      %1077 = vmatmul.mubr.bf16.gmra.mxu0 %v593
      %v1078 = vpop.f32.mrf.mxu0
      %v1079 = vadd.f32 0.0, %v1078
      %v1080 = vpop.f32.mrf.mxu0
      %v1081 = vpop.f32.mrf.mxu0
      %v1082 = vadd.f32 0.0, %v1081
      %v1083 = vpop.f32.mrf.mxu0
      %1084 = vmatprep.mubr.bf16.mxu0 0
      %1085 = vmatmul.mubr.bf16.gmra.mxu0 %v594
      %v1086 = vpop.f32.mrf.mxu0
      %v1087 = vadd.f32 0.0, %v1086
      %v1088 = vpop.f32.mrf.mxu0
      %v1089 = vpop.f32.mrf.mxu0
      %v1090 = vadd.f32 0.0, %v1089
      %v1091 = vpop.f32.mrf.mxu0
      %1092 = vmatprep.mubr.bf16.mxu0 0
      %1093 = vmatmul.mubr.bf16.gmra.mxu0 %v595
      %v1094 = vpop.f32.mrf.mxu0
      %v1095 = vadd.f32 0.0, %v1094
      %v1096 = vpop.f32.mrf.mxu0
      %v1097 = vpop.f32.mrf.mxu0
      %v1098 = vadd.f32 0.0, %v1097
      %v1099 = vpop.f32.mrf.mxu0
      %1100 = vmatprep.mubr.bf16.mxu0 0
      %1101 = vmatmul.mubr.bf16.gmra.mxu0 %v596
      %v1102 = vpop.f32.mrf.mxu0
      %v1103 = vadd.f32 0.0, %v1102
      %v1104 = vpop.f32.mrf.mxu0
      %v1105 = vpop.f32.mrf.mxu0
      %v1106 = vadd.f32 0.0, %v1105
      %v1107 = vpop.f32.mrf.mxu0
      %1108 = vmatprep.mubr.bf16.mxu0 0
      %1109 = vmatmul.mubr.bf16.gmra.mxu0 %v597
      %v1110 = vpop.f32.mrf.mxu0
      %v1111 = vadd.f32 0.0, %v1110
      %v1112 = vpop.f32.mrf.mxu0
      %v1113 = vpop.f32.mrf.mxu0
      %v1114 = vadd.f32 0.0, %v1113
      %v1115 = vpop.f32.mrf.mxu0
      %1116 = vmatprep.mubr.bf16.mxu0 0
      %1117 = vmatmul.mubr.bf16.gmra.mxu0 %v598
      %v1118 = vpop.f32.mrf.mxu0
      %v1119 = vadd.f32 0.0, %v1118
      %v1120 = vpop.f32.mrf.mxu0
      %v1121 = vpop.f32.mrf.mxu0
      %v1122 = vadd.f32 0.0, %v1121
      %v1123 = vpop.f32.mrf.mxu0
      %1124 = vmatprep.mubr.bf16.mxu0 0
      %1125 = vmatmul.mubr.bf16.gmra.mxu0 %v599
      %v1126 = vpop.f32.mrf.mxu0
      %v1127 = vadd.f32 0.0, %v1126
      %v1128 = vpop.f32.mrf.mxu0
      %v1129 = vpop.f32.mrf.mxu0
      %v1130 = vadd.f32 0.0, %v1129
      %v1131 = vpop.f32.mrf.mxu0
      %1132 = vdwg.mxu0
      %v1133 = vadd.f32 %v877, %v1055
      %v1134 = vadd.f32 %v880, %v1058
      %v1135 = vadd.f32 %v885, %v1063
      %v1136 = vadd.f32 %v888, %v1066
      %v1137 = vadd.f32 %v893, %v1071
      %v1138 = vadd.f32 %v896, %v1074
      %v1139 = vadd.f32 %v901, %v1079
      %v1140 = vadd.f32 %v904, %v1082
      %v1141 = vadd.f32 %v909, %v1087
      %v1142 = vadd.f32 %v912, %v1090
      %v1143 = vadd.f32 %v917, %v1095
      %v1144 = vadd.f32 %v920, %v1098
      %v1145 = vadd.f32 %v925, %v1103
      %v1146 = vadd.f32 %v928, %v1106
      %v1147 = vadd.f32 %v933, %v1111
      %v1148 = vadd.f32 %v936, %v1114
      %v1149 = vadd.f32 %v941, %v1119
      %v1150 = vadd.f32 %v944, %v1122
      %v1151 = vadd.f32 %v949, %v1127
      %v1152 = vadd.f32 %v952, %v1130
      %v1153 = vld [vmem:[%s374 + $0x1] sm:$0xff]
      %v1154 = vld [vmem:[%s374 + $0x9] sm:$0xff]
      %v1155 = vld [vmem:[%s374 + $0x19] sm:$0xff]
      %v1156 = vld [vmem:[%s374 + $0x21] sm:$0xff]
      %v1157 = vld [vmem:[%s374 + $0x31] sm:$0xff]
      %v1158 = vld [vmem:[%s374 + $0x39] sm:$0xff]
      %v1159 = vld [vmem:[%s374 + $0x49] sm:$0xff]
      %v1160 = vld [vmem:[%s374 + $0x51] sm:$0xff]
      %v1161 = vld [vmem:[%s374 + $0x61] sm:$0xff]
      %v1162 = vld [vmem:[%s374 + $0x69] sm:$0xff]
      %v1163 = vld [vmem:[%s374 + $0x79] sm:$0xff]
      %v1164 = vld [vmem:[%s374 + $0x81] sm:$0xff]
      %v1165 = vld [vmem:[%s374 + $0x91] sm:$0xff]
      %v1166 = vld [vmem:[%s374 + $0x99] sm:$0xff]
      %v1167 = vld [vmem:[%s374 + $0xa9] sm:$0xff]
      %v1168 = vld [vmem:[%s374 + $0xb1] sm:$0xff]
      %v1169 = vld [vmem:[%s374 + $0xc1] sm:$0xff]
      %v1170 = vld [vmem:[%s374 + $0xc9] sm:$0xff]
      %v1171 = vld [vmem:[%s374 + $0xd9] sm:$0xff]
      %v1172 = vld [vmem:[%s374 + $0xe1] sm:$0xff]
      %v1173 = vld [vmem:[%s374 + $0xf1] sm:$0xff]
      %v1174 = vld [vmem:[%s374 + $0xf9] sm:$0xff]
      %v1175 = vld [vmem:[%s374 + $0x109] sm:$0xff]
      %v1176 = vld [vmem:[%s374 + $0x111] sm:$0xff]
      %v1177 = vmax.f32 %v1153, 0.0
      %v1178 = vmax.f32 %v1154, 0.0
      %v1179 = vmax.f32 %v1155, 0.0
      %v1180 = vmax.f32 %v1156, 0.0
      %v1181 = vmax.f32 %v1157, 0.0
      %v1182 = vmax.f32 %v1158, 0.0
      %v1183 = vmax.f32 %v1159, 0.0
      %v1184 = vmax.f32 %v1160, 0.0
      %v1185 = vmax.f32 %v1161, 0.0
      %v1186 = vmax.f32 %v1162, 0.0
      %v1187 = vmax.f32 %v1163, 0.0
      %v1188 = vmax.f32 %v1164, 0.0
      %v1189 = vmax.f32 %v1165, 0.0
      %v1190 = vmax.f32 %v1166, 0.0
      %v1191 = vmax.f32 %v1167, 0.0
      %v1192 = vmax.f32 %v1168, 0.0
      %v1193 = vmax.f32 %v1169, 0.0
      %v1194 = vmax.f32 %v1170, 0.0
      %v1195 = vmax.f32 %v1171, 0.0
      %v1196 = vmax.f32 %v1172, 0.0
      %v1197 = vmax.f32 %v1173, 0.0
      %v1198 = vmax.f32 %v1174, 0.0
      %v1199 = vmax.f32 %v1175, 0.0
      %v1200 = vmax.f32 %v1176, 0.0
      %v1201 = vpack.c.bf16 %v1178, %v1177
      %v1202 = vpack.c.bf16 %v1180, %v1179
      %v1203 = vpack.c.bf16 %v1182, %v1181
      %v1204 = vpack.c.bf16 %v1184, %v1183
      %v1205 = vpack.c.bf16 %v1186, %v1185
      %v1206 = vpack.c.bf16 %v1188, %v1187
      %v1207 = vpack.c.bf16 %v1190, %v1189
      %v1208 = vpack.c.bf16 %v1192, %v1191
      %v1209 = vpack.c.bf16 %v1194, %v1193
      %v1210 = vpack.c.bf16 %v1196, %v1195
      %v1211 = vpack.c.bf16 %v1198, %v1197
      %v1212 = vpack.c.bf16 %v1200, %v1199
      %s1213 = scalar_lea.vmem %s1, 64
      %v1214 = vld [vmem:[%s1213] sm:$0xf]
      %v1215 = vld [vmem:[%s1213 + $0x4] sm:$0xf]
      %v1216 = vld [vmem:[%s1213 + $0x8] sm:$0xf]
      %v1217 = vld [vmem:[%s1213 + $0xc] sm:$0xf]
      %v1218 = vld [vmem:[%s1213 + $0x10] sm:$0xf]
      %v1219 = vld [vmem:[%s1213 + $0x14] sm:$0xf]
      %v1220 = vld [vmem:[%s1213 + $0x18] sm:$0xf]
      %v1221 = vld [vmem:[%s1213 + $0x1c] sm:$0xf]
      %v1222 = vld [vmem:[%s1213 + $0x20] sm:$0xf]
      %v1223 = vld [vmem:[%s1213 + $0x24] sm:$0xf]
      %v1224 = vld [vmem:[%s1213 + $0x28] sm:$0xf]
      %v1225 = vld [vmem:[%s1213 + $0x2c] sm:$0xf]
      %v1226 = vld [vmem:[%s1213 + $0x30] sm:$0xf]
      %v1227 = vld [vmem:[%s1213 + $0x34] sm:$0xf]
      %v1228 = vld [vmem:[%s1213 + $0x38] sm:$0xf]
      %v1229 = vld [vmem:[%s1213 + $0x3c] sm:$0xf]
      %v1246 = vunpack.c.l.b16 %v1214
      %v1247 = vunpack.c.l.b16 %v1215
      %v1248 = vunpack.c.l.b16 %v1216
      %v1249 = vunpack.c.l.b16 %v1217
      %v1250 = vunpack.c.l.b16 %v1218
      %v1251 = vunpack.c.l.b16 %v1219
      %v1252 = vunpack.c.l.b16 %v1220
      %v1253 = vunpack.c.l.b16 %v1221
      %v1254 = vunpack.c.l.b16 %v1222
      %v1255 = vunpack.c.l.b16 %v1223
      %v1256 = vunpack.c.l.b16 %v1224
      %v1257 = vunpack.c.l.b16 %v1225
      %v1258 = vunpack.c.l.b16 %v1226
      %v1259 = vunpack.c.l.b16 %v1227
      %v1260 = vunpack.c.l.b16 %v1228
      %v1261 = vunpack.c.l.b16 %v1229
      %v1262 = vpack.c.b16 %v1247, %v1246
      %v1263 = vpack.c.b16 %v1249, %v1248
      %v1264 = vpack.c.b16 %v1251, %v1250
      %v1265 = vpack.c.b16 %v1253, %v1252
      %v1266 = vpack.c.b16 %v1255, %v1254
      %v1267 = vpack.c.b16 %v1257, %v1256
      %v1268 = vpack.c.b16 %v1259, %v1258
      %v1269 = vpack.c.b16 %v1261, %v1260
      %1278 = vmatprep.subr.bf16.mxu0 0
      %1279 = vmatpush1.bf16.msra.mxu0 %v1269
      %1280 = vmatprep.subr.bf16.mxu0 0
      %1281 = vmatpush1.bf16.msra.mxu0 %v1268
      %1282 = vmatprep.subr.bf16.mxu0 0
      %1283 = vmatpush1.bf16.msra.mxu0 %v1267
      %1284 = vmatprep.subr.bf16.mxu0 0
      %1285 = vmatpush1.bf16.msra.mxu0 %v1266
      %1286 = vmatprep.subr.bf16.mxu0 0
      %1287 = vmatpush1.bf16.msra.mxu0 %v1265
      %1288 = vmatprep.subr.bf16.mxu0 0
      %1289 = vmatpush1.bf16.msra.mxu0 %v1264
      %1290 = vmatprep.subr.bf16.mxu0 0
      %1291 = vmatpush1.bf16.msra.mxu0 %v1263
      %1292 = vmatprep.subr.bf16.mxu0 0
      %1293 = vmatpush1.bf16.msra.mxu0 %v1262
      %1294 = vmatprep.subr.bf16.mxu0 0
      %1295 = vmatpush2.bf16.msra.mxu0 0
      %1296 = vmatprep.subr.bf16.mxu0 0
      %1297 = vmatpush2.bf16.msra.mxu0 0
      %1298 = vmatprep.subr.bf16.mxu0 0
      %1299 = vmatpush2.bf16.msra.mxu0 0
      %1300 = vmatprep.subr.bf16.mxu0 0
      %1301 = vmatpush2.bf16.msra.mxu0 0
      %1302 = vmatprep.subr.bf16.mxu0 0
      %1303 = vmatpush2.bf16.msra.mxu0 0
      %1304 = vmatprep.subr.bf16.mxu0 0
      %1305 = vmatpush2.bf16.msra.mxu0 0
      %1306 = vmatprep.subr.bf16.mxu0 0
      %1307 = vmatpush2.bf16.msra.mxu0 0
      %1308 = vmatprep.subr.bf16.mxu0 0
      %1309 = vmatpush2.bf16.msra.mxu0 0
      %1310 = vmatprep.mubr.bf16.mxu0 0
      %1311 = vmatmul.mubr.bf16.gmra.mxu0 %v1201
      %v1312 = vpop.f32.mrf.mxu0
      %v1313 = vadd.f32 0.0, %v1312
      %v1314 = vpop.f32.mrf.mxu0
      %v1315 = vpop.f32.mrf.mxu0
      %v1316 = vadd.f32 0.0, %v1315
      %v1317 = vpop.f32.mrf.mxu0
      %1318 = vmatprep.mubr.bf16.mxu0 0
      %1319 = vmatmul.mubr.bf16.gmra.mxu0 %v1202
      %v1320 = vpop.f32.mrf.mxu0
      %v1321 = vadd.f32 0.0, %v1320
      %v1322 = vpop.f32.mrf.mxu0
      %v1323 = vpop.f32.mrf.mxu0
      %v1324 = vadd.f32 0.0, %v1323
      %v1325 = vpop.f32.mrf.mxu0
      %1326 = vmatprep.mubr.bf16.mxu0 0
      %1327 = vmatmul.mubr.bf16.gmra.mxu0 %v1203
      %v1328 = vpop.f32.mrf.mxu0
      %v1329 = vadd.f32 0.0, %v1328
      %v1330 = vpop.f32.mrf.mxu0
      %v1331 = vpop.f32.mrf.mxu0
      %v1332 = vadd.f32 0.0, %v1331
      %v1333 = vpop.f32.mrf.mxu0
      %1334 = vmatprep.mubr.bf16.mxu0 0
      %1335 = vmatmul.mubr.bf16.gmra.mxu0 %v1204
      %v1336 = vpop.f32.mrf.mxu0
      %v1337 = vadd.f32 0.0, %v1336
      %v1338 = vpop.f32.mrf.mxu0
      %v1339 = vpop.f32.mrf.mxu0
      %v1340 = vadd.f32 0.0, %v1339
      %v1341 = vpop.f32.mrf.mxu0
      %1342 = vmatprep.mubr.bf16.mxu0 0
      %1343 = vmatmul.mubr.bf16.gmra.mxu0 %v1205
      %v1344 = vpop.f32.mrf.mxu0
      %v1345 = vadd.f32 0.0, %v1344
      %v1346 = vpop.f32.mrf.mxu0
      %v1347 = vpop.f32.mrf.mxu0
      %v1348 = vadd.f32 0.0, %v1347
      %v1349 = vpop.f32.mrf.mxu0
      %1350 = vmatprep.mubr.bf16.mxu0 0
      %1351 = vmatmul.mubr.bf16.gmra.mxu0 %v1206
      %v1352 = vpop.f32.mrf.mxu0
      %v1353 = vadd.f32 0.0, %v1352
      %v1354 = vpop.f32.mrf.mxu0
      %v1355 = vpop.f32.mrf.mxu0
      %v1356 = vadd.f32 0.0, %v1355
      %v1357 = vpop.f32.mrf.mxu0
      %1358 = vmatprep.mubr.bf16.mxu0 0
      %1359 = vmatmul.mubr.bf16.gmra.mxu0 %v1207
      %v1360 = vpop.f32.mrf.mxu0
      %v1361 = vadd.f32 0.0, %v1360
      %v1362 = vpop.f32.mrf.mxu0
      %v1363 = vpop.f32.mrf.mxu0
      %v1364 = vadd.f32 0.0, %v1363
      %v1365 = vpop.f32.mrf.mxu0
      %1366 = vmatprep.mubr.bf16.mxu0 0
      %1367 = vmatmul.mubr.bf16.gmra.mxu0 %v1208
      %v1368 = vpop.f32.mrf.mxu0
      %v1369 = vadd.f32 0.0, %v1368
      %v1370 = vpop.f32.mrf.mxu0
      %v1371 = vpop.f32.mrf.mxu0
      %v1372 = vadd.f32 0.0, %v1371
      %v1373 = vpop.f32.mrf.mxu0
      %1374 = vmatprep.mubr.bf16.mxu0 0
      %1375 = vmatmul.mubr.bf16.gmra.mxu0 %v1209
      %v1376 = vpop.f32.mrf.mxu0
      %v1377 = vadd.f32 0.0, %v1376
      %v1378 = vpop.f32.mrf.mxu0
      %v1379 = vpop.f32.mrf.mxu0
      %v1380 = vadd.f32 0.0, %v1379
      %v1381 = vpop.f32.mrf.mxu0
      %1382 = vmatprep.mubr.bf16.mxu0 0
      %1383 = vmatmul.mubr.bf16.gmra.mxu0 %v1210
      %v1384 = vpop.f32.mrf.mxu0
      %v1385 = vadd.f32 0.0, %v1384
      %v1386 = vpop.f32.mrf.mxu0
      %v1387 = vpop.f32.mrf.mxu0
      %v1388 = vadd.f32 0.0, %v1387
      %v1389 = vpop.f32.mrf.mxu0
      %1390 = vdwg.mxu0
      %v1391 = vadd.f32 %v1133, %v1313
      %v1392 = vadd.f32 %v1134, %v1316
      %v1393 = vadd.f32 %v1135, %v1321
      %v1394 = vadd.f32 %v1136, %v1324
      %v1395 = vadd.f32 %v1137, %v1329
      %v1396 = vadd.f32 %v1138, %v1332
      %v1397 = vadd.f32 %v1139, %v1337
      %v1398 = vadd.f32 %v1140, %v1340
      %v1399 = vadd.f32 %v1141, %v1345
      %v1400 = vadd.f32 %v1142, %v1348
      %v1401 = vadd.f32 %v1143, %v1353
      %v1402 = vadd.f32 %v1144, %v1356
      %v1403 = vadd.f32 %v1145, %v1361
      %v1404 = vadd.f32 %v1146, %v1364
      %v1405 = vadd.f32 %v1147, %v1369
      %v1406 = vadd.f32 %v1148, %v1372
      %v1407 = vadd.f32 %v1149, %v1377
      %v1408 = vadd.f32 %v1150, %v1380
      %v1409 = vadd.f32 %v1151, %v1385
      %v1410 = vadd.f32 %v1152, %v1388
      %s1411 = scalar_lea.vmem %s1, 256
      %v1412 = vld [vmem:[%s1411] sm:$0xf]
      %v1413 = vld [vmem:[%s1411 + $0x4] sm:$0xf]
      %v1414 = vld [vmem:[%s1411 + $0x8] sm:$0xf]
      %v1415 = vld [vmem:[%s1411 + $0xc] sm:$0xf]
      %v1416 = vld [vmem:[%s1411 + $0x10] sm:$0xf]
      %v1417 = vld [vmem:[%s1411 + $0x14] sm:$0xf]
      %v1418 = vld [vmem:[%s1411 + $0x18] sm:$0xf]
      %v1419 = vld [vmem:[%s1411 + $0x1c] sm:$0xf]
      %v1420 = vld [vmem:[%s1411 + $0x20] sm:$0xf]
      %v1421 = vld [vmem:[%s1411 + $0x24] sm:$0xf]
      %v1422 = vld [vmem:[%s1411 + $0x28] sm:$0xf]
      %v1423 = vld [vmem:[%s1411 + $0x2c] sm:$0xf]
      %v1424 = vld [vmem:[%s1411 + $0x30] sm:$0xf]
      %v1425 = vld [vmem:[%s1411 + $0x34] sm:$0xf]
      %v1426 = vld [vmem:[%s1411 + $0x38] sm:$0xf]
      %v1427 = vld [vmem:[%s1411 + $0x3c] sm:$0xf]
      %v1444 = vunpack.c.l.b16 %v1412
      %v1445 = vunpack.c.l.b16 %v1413
      %v1446 = vunpack.c.l.b16 %v1414
      %v1447 = vunpack.c.l.b16 %v1415
      %v1448 = vunpack.c.l.b16 %v1416
      %v1449 = vunpack.c.l.b16 %v1417
      %v1450 = vunpack.c.l.b16 %v1418
      %v1451 = vunpack.c.l.b16 %v1419
      %v1452 = vunpack.c.l.b16 %v1420
      %v1453 = vunpack.c.l.b16 %v1421
      %v1454 = vunpack.c.l.b16 %v1422
      %v1455 = vunpack.c.l.b16 %v1423
      %v1456 = vunpack.c.l.b16 %v1424
      %v1457 = vunpack.c.l.b16 %v1425
      %v1458 = vunpack.c.l.b16 %v1426
      %v1459 = vunpack.c.l.b16 %v1427
      %v1460 = vpack.c.b16 %v1445, %v1444
      %v1461 = vpack.c.b16 %v1447, %v1446
      %v1462 = vpack.c.b16 %v1449, %v1448
      %v1463 = vpack.c.b16 %v1451, %v1450
      %v1464 = vpack.c.b16 %v1453, %v1452
      %v1465 = vpack.c.b16 %v1455, %v1454
      %v1466 = vpack.c.b16 %v1457, %v1456
      %v1467 = vpack.c.b16 %v1459, %v1458
      %1476 = vmatprep.subr.bf16.mxu0 0
      %1477 = vmatpush1.bf16.msra.mxu0 %v1467
      %1478 = vmatprep.subr.bf16.mxu0 0
      %1479 = vmatpush1.bf16.msra.mxu0 %v1466
      %1480 = vmatprep.subr.bf16.mxu0 0
      %1481 = vmatpush1.bf16.msra.mxu0 %v1465
      %1482 = vmatprep.subr.bf16.mxu0 0
      %1483 = vmatpush1.bf16.msra.mxu0 %v1464
      %1484 = vmatprep.subr.bf16.mxu0 0
      %1485 = vmatpush1.bf16.msra.mxu0 %v1463
      %1486 = vmatprep.subr.bf16.mxu0 0
      %1487 = vmatpush1.bf16.msra.mxu0 %v1462
      %1488 = vmatprep.subr.bf16.mxu0 0
      %1489 = vmatpush1.bf16.msra.mxu0 %v1461
      %1490 = vmatprep.subr.bf16.mxu0 0
      %1491 = vmatpush1.bf16.msra.mxu0 %v1460
      %1492 = vmatprep.subr.bf16.mxu0 0
      %1493 = vmatpush2.bf16.msra.mxu0 0
      %1494 = vmatprep.subr.bf16.mxu0 0
      %1495 = vmatpush2.bf16.msra.mxu0 0
      %1496 = vmatprep.subr.bf16.mxu0 0
      %1497 = vmatpush2.bf16.msra.mxu0 0
      %1498 = vmatprep.subr.bf16.mxu0 0
      %1499 = vmatpush2.bf16.msra.mxu0 0
      %1500 = vmatprep.subr.bf16.mxu0 0
      %1501 = vmatpush2.bf16.msra.mxu0 0
      %1502 = vmatprep.subr.bf16.mxu0 0
      %1503 = vmatpush2.bf16.msra.mxu0 0
      %1504 = vmatprep.subr.bf16.mxu0 0
      %1505 = vmatpush2.bf16.msra.mxu0 0
      %1506 = vmatprep.subr.bf16.mxu0 0
      %1507 = vmatpush2.bf16.msra.mxu0 0
      %1508 = vmatprep.mubr.bf16.mxu0 0
      %1509 = vmatmul.mubr.bf16.gmra.mxu0 %v1202
      %v1510 = vpop.f32.mrf.mxu0
      %v1511 = vadd.f32 0.0, %v1510
      %v1512 = vpop.f32.mrf.mxu0
      %v1513 = vpop.f32.mrf.mxu0
      %v1514 = vadd.f32 0.0, %v1513
      %v1515 = vpop.f32.mrf.mxu0
      %1516 = vmatprep.mubr.bf16.mxu0 0
      %1517 = vmatmul.mubr.bf16.gmra.mxu0 %v1203
      %v1518 = vpop.f32.mrf.mxu0
      %v1519 = vadd.f32 0.0, %v1518
      %v1520 = vpop.f32.mrf.mxu0
      %v1521 = vpop.f32.mrf.mxu0
      %v1522 = vadd.f32 0.0, %v1521
      %v1523 = vpop.f32.mrf.mxu0
      %1524 = vmatprep.mubr.bf16.mxu0 0
      %1525 = vmatmul.mubr.bf16.gmra.mxu0 %v1204
      %v1526 = vpop.f32.mrf.mxu0
      %v1527 = vadd.f32 0.0, %v1526
      %v1528 = vpop.f32.mrf.mxu0
      %v1529 = vpop.f32.mrf.mxu0
      %v1530 = vadd.f32 0.0, %v1529
      %v1531 = vpop.f32.mrf.mxu0
      %1532 = vmatprep.mubr.bf16.mxu0 0
      %1533 = vmatmul.mubr.bf16.gmra.mxu0 %v1205
      %v1534 = vpop.f32.mrf.mxu0
      %v1535 = vadd.f32 0.0, %v1534
      %v1536 = vpop.f32.mrf.mxu0
      %v1537 = vpop.f32.mrf.mxu0
      %v1538 = vadd.f32 0.0, %v1537
      %v1539 = vpop.f32.mrf.mxu0
      %1540 = vmatprep.mubr.bf16.mxu0 0
      %1541 = vmatmul.mubr.bf16.gmra.mxu0 %v1206
      %v1542 = vpop.f32.mrf.mxu0
      %v1543 = vadd.f32 0.0, %v1542
      %v1544 = vpop.f32.mrf.mxu0
      %v1545 = vpop.f32.mrf.mxu0
      %v1546 = vadd.f32 0.0, %v1545
      %v1547 = vpop.f32.mrf.mxu0
      %1548 = vmatprep.mubr.bf16.mxu0 0
      %1549 = vmatmul.mubr.bf16.gmra.mxu0 %v1207
      %v1550 = vpop.f32.mrf.mxu0
      %v1551 = vadd.f32 0.0, %v1550
      %v1552 = vpop.f32.mrf.mxu0
      %v1553 = vpop.f32.mrf.mxu0
      %v1554 = vadd.f32 0.0, %v1553
      %v1555 = vpop.f32.mrf.mxu0
      %1556 = vmatprep.mubr.bf16.mxu0 0
      %1557 = vmatmul.mubr.bf16.gmra.mxu0 %v1208
      %v1558 = vpop.f32.mrf.mxu0
      %v1559 = vadd.f32 0.0, %v1558
      %v1560 = vpop.f32.mrf.mxu0
      %v1561 = vpop.f32.mrf.mxu0
      %v1562 = vadd.f32 0.0, %v1561
      %v1563 = vpop.f32.mrf.mxu0
      %1564 = vmatprep.mubr.bf16.mxu0 0
      %1565 = vmatmul.mubr.bf16.gmra.mxu0 %v1209
      %v1566 = vpop.f32.mrf.mxu0
      %v1567 = vadd.f32 0.0, %v1566
      %v1568 = vpop.f32.mrf.mxu0
      %v1569 = vpop.f32.mrf.mxu0
      %v1570 = vadd.f32 0.0, %v1569
      %v1571 = vpop.f32.mrf.mxu0
      %1572 = vmatprep.mubr.bf16.mxu0 0
      %1573 = vmatmul.mubr.bf16.gmra.mxu0 %v1210
      %v1574 = vpop.f32.mrf.mxu0
      %v1575 = vadd.f32 0.0, %v1574
      %v1576 = vpop.f32.mrf.mxu0
      %v1577 = vpop.f32.mrf.mxu0
      %v1578 = vadd.f32 0.0, %v1577
      %v1579 = vpop.f32.mrf.mxu0
      %1580 = vmatprep.mubr.bf16.mxu0 0
      %1581 = vmatmul.mubr.bf16.gmra.mxu0 %v1211
      %v1582 = vpop.f32.mrf.mxu0
      %v1583 = vadd.f32 0.0, %v1582
      %v1584 = vpop.f32.mrf.mxu0
      %v1585 = vpop.f32.mrf.mxu0
      %v1586 = vadd.f32 0.0, %v1585
      %v1587 = vpop.f32.mrf.mxu0
      %1588 = vdwg.mxu0
      %v1589 = vadd.f32 %v1391, %v1511
      %v1590 = vadd.f32 %v1392, %v1514
      %v1591 = vadd.f32 %v1393, %v1519
      %v1592 = vadd.f32 %v1394, %v1522
      %v1593 = vadd.f32 %v1395, %v1527
      %v1594 = vadd.f32 %v1396, %v1530
      %v1595 = vadd.f32 %v1397, %v1535
      %v1596 = vadd.f32 %v1398, %v1538
      %v1597 = vadd.f32 %v1399, %v1543
      %v1598 = vadd.f32 %v1400, %v1546
      %v1599 = vadd.f32 %v1401, %v1551
      %v1600 = vadd.f32 %v1402, %v1554
      %v1601 = vadd.f32 %v1403, %v1559
      %v1602 = vadd.f32 %v1404, %v1562
      %v1603 = vadd.f32 %v1405, %v1567
      %v1604 = vadd.f32 %v1406, %v1570
      %v1605 = vadd.f32 %v1407, %v1575
      %v1606 = vadd.f32 %v1408, %v1578
      %v1607 = vadd.f32 %v1409, %v1583
      %v1608 = vadd.f32 %v1410, %v1586
      %s1609 = scalar_lea.vmem %s1, 448
      %v1610 = vld [vmem:[%s1609] sm:$0xf]
      %v1611 = vld [vmem:[%s1609 + $0x4] sm:$0xf]
      %v1612 = vld [vmem:[%s1609 + $0x8] sm:$0xf]
      %v1613 = vld [vmem:[%s1609 + $0xc] sm:$0xf]
      %v1614 = vld [vmem:[%s1609 + $0x10] sm:$0xf]
      %v1615 = vld [vmem:[%s1609 + $0x14] sm:$0xf]
      %v1616 = vld [vmem:[%s1609 + $0x18] sm:$0xf]
      %v1617 = vld [vmem:[%s1609 + $0x1c] sm:$0xf]
      %v1618 = vld [vmem:[%s1609 + $0x20] sm:$0xf]
      %v1619 = vld [vmem:[%s1609 + $0x24] sm:$0xf]
      %v1620 = vld [vmem:[%s1609 + $0x28] sm:$0xf]
      %v1621 = vld [vmem:[%s1609 + $0x2c] sm:$0xf]
      %v1622 = vld [vmem:[%s1609 + $0x30] sm:$0xf]
      %v1623 = vld [vmem:[%s1609 + $0x34] sm:$0xf]
      %v1624 = vld [vmem:[%s1609 + $0x38] sm:$0xf]
      %v1625 = vld [vmem:[%s1609 + $0x3c] sm:$0xf]
      %v1642 = vunpack.c.l.b16 %v1610
      %v1643 = vunpack.c.l.b16 %v1611
      %v1644 = vunpack.c.l.b16 %v1612
      %v1645 = vunpack.c.l.b16 %v1613
      %v1646 = vunpack.c.l.b16 %v1614
      %v1647 = vunpack.c.l.b16 %v1615
      %v1648 = vunpack.c.l.b16 %v1616
      %v1649 = vunpack.c.l.b16 %v1617
      %v1650 = vunpack.c.l.b16 %v1618
      %v1651 = vunpack.c.l.b16 %v1619
      %v1652 = vunpack.c.l.b16 %v1620
      %v1653 = vunpack.c.l.b16 %v1621
      %v1654 = vunpack.c.l.b16 %v1622
      %v1655 = vunpack.c.l.b16 %v1623
      %v1656 = vunpack.c.l.b16 %v1624
      %v1657 = vunpack.c.l.b16 %v1625
      %v1658 = vpack.c.b16 %v1643, %v1642
      %v1659 = vpack.c.b16 %v1645, %v1644
      %v1660 = vpack.c.b16 %v1647, %v1646
      %v1661 = vpack.c.b16 %v1649, %v1648
      %v1662 = vpack.c.b16 %v1651, %v1650
      %v1663 = vpack.c.b16 %v1653, %v1652
      %v1664 = vpack.c.b16 %v1655, %v1654
      %v1665 = vpack.c.b16 %v1657, %v1656
      %1674 = vmatprep.subr.bf16.mxu0 0
      %1675 = vmatpush1.bf16.msra.mxu0 %v1665
      %1676 = vmatprep.subr.bf16.mxu0 0
      %1677 = vmatpush1.bf16.msra.mxu0 %v1664
      %1678 = vmatprep.subr.bf16.mxu0 0
      %1679 = vmatpush1.bf16.msra.mxu0 %v1663
      %1680 = vmatprep.subr.bf16.mxu0 0
      %1681 = vmatpush1.bf16.msra.mxu0 %v1662
      %1682 = vmatprep.subr.bf16.mxu0 0
      %1683 = vmatpush1.bf16.msra.mxu0 %v1661
      %1684 = vmatprep.subr.bf16.mxu0 0
      %1685 = vmatpush1.bf16.msra.mxu0 %v1660
      %1686 = vmatprep.subr.bf16.mxu0 0
      %1687 = vmatpush1.bf16.msra.mxu0 %v1659
      %1688 = vmatprep.subr.bf16.mxu0 0
      %1689 = vmatpush1.bf16.msra.mxu0 %v1658
      %1690 = vmatprep.subr.bf16.mxu0 0
      %1691 = vmatpush2.bf16.msra.mxu0 0
      %1692 = vmatprep.subr.bf16.mxu0 0
      %1693 = vmatpush2.bf16.msra.mxu0 0
      %1694 = vmatprep.subr.bf16.mxu0 0
      %1695 = vmatpush2.bf16.msra.mxu0 0
      %1696 = vmatprep.subr.bf16.mxu0 0
      %1697 = vmatpush2.bf16.msra.mxu0 0
      %1698 = vmatprep.subr.bf16.mxu0 0
      %1699 = vmatpush2.bf16.msra.mxu0 0
      %1700 = vmatprep.subr.bf16.mxu0 0
      %1701 = vmatpush2.bf16.msra.mxu0 0
      %1702 = vmatprep.subr.bf16.mxu0 0
      %1703 = vmatpush2.bf16.msra.mxu0 0
      %1704 = vmatprep.subr.bf16.mxu0 0
      %1705 = vmatpush2.bf16.msra.mxu0 0
      %1706 = vmatprep.mubr.bf16.mxu0 0
      %1707 = vmatmul.mubr.bf16.gmra.mxu0 %v1203
      %v1708 = vpop.f32.mrf.mxu0
      %v1709 = vadd.f32 0.0, %v1708
      %v1710 = vpop.f32.mrf.mxu0
      %v1711 = vpop.f32.mrf.mxu0
      %v1712 = vadd.f32 0.0, %v1711
      %v1713 = vpop.f32.mrf.mxu0
      %1714 = vmatprep.mubr.bf16.mxu0 0
      %1715 = vmatmul.mubr.bf16.gmra.mxu0 %v1204
      %v1716 = vpop.f32.mrf.mxu0
      %v1717 = vadd.f32 0.0, %v1716
      %v1718 = vpop.f32.mrf.mxu0
      %v1719 = vpop.f32.mrf.mxu0
      %v1720 = vadd.f32 0.0, %v1719
      %v1721 = vpop.f32.mrf.mxu0
      %1722 = vmatprep.mubr.bf16.mxu0 0
      %1723 = vmatmul.mubr.bf16.gmra.mxu0 %v1205
      %v1724 = vpop.f32.mrf.mxu0
      %v1725 = vadd.f32 0.0, %v1724
      %v1726 = vpop.f32.mrf.mxu0
      %v1727 = vpop.f32.mrf.mxu0
      %v1728 = vadd.f32 0.0, %v1727
      %v1729 = vpop.f32.mrf.mxu0
      %1730 = vmatprep.mubr.bf16.mxu0 0
      %1731 = vmatmul.mubr.bf16.gmra.mxu0 %v1206
      %v1732 = vpop.f32.mrf.mxu0
      %v1733 = vadd.f32 0.0, %v1732
      %v1734 = vpop.f32.mrf.mxu0
      %v1735 = vpop.f32.mrf.mxu0
      %v1736 = vadd.f32 0.0, %v1735
      %v1737 = vpop.f32.mrf.mxu0
      %1738 = vmatprep.mubr.bf16.mxu0 0
      %1739 = vmatmul.mubr.bf16.gmra.mxu0 %v1207
      %v1740 = vpop.f32.mrf.mxu0
      %v1741 = vadd.f32 0.0, %v1740
      %v1742 = vpop.f32.mrf.mxu0
      %v1743 = vpop.f32.mrf.mxu0
      %v1744 = vadd.f32 0.0, %v1743
      %v1745 = vpop.f32.mrf.mxu0
      %1746 = vmatprep.mubr.bf16.mxu0 0
      %1747 = vmatmul.mubr.bf16.gmra.mxu0 %v1208
      %v1748 = vpop.f32.mrf.mxu0
      %v1749 = vadd.f32 0.0, %v1748
      %v1750 = vpop.f32.mrf.mxu0
      %v1751 = vpop.f32.mrf.mxu0
      %v1752 = vadd.f32 0.0, %v1751
      %v1753 = vpop.f32.mrf.mxu0
      %1754 = vmatprep.mubr.bf16.mxu0 0
      %1755 = vmatmul.mubr.bf16.gmra.mxu0 %v1209
      %v1756 = vpop.f32.mrf.mxu0
      %v1757 = vadd.f32 0.0, %v1756
      %v1758 = vpop.f32.mrf.mxu0
      %v1759 = vpop.f32.mrf.mxu0
      %v1760 = vadd.f32 0.0, %v1759
      %v1761 = vpop.f32.mrf.mxu0
      %1762 = vmatprep.mubr.bf16.mxu0 0
      %1763 = vmatmul.mubr.bf16.gmra.mxu0 %v1210
      %v1764 = vpop.f32.mrf.mxu0
      %v1765 = vadd.f32 0.0, %v1764
      %v1766 = vpop.f32.mrf.mxu0
      %v1767 = vpop.f32.mrf.mxu0
      %v1768 = vadd.f32 0.0, %v1767
      %v1769 = vpop.f32.mrf.mxu0
      %1770 = vmatprep.mubr.bf16.mxu0 0
      %1771 = vmatmul.mubr.bf16.gmra.mxu0 %v1211
      %v1772 = vpop.f32.mrf.mxu0
      %v1773 = vadd.f32 0.0, %v1772
      %v1774 = vpop.f32.mrf.mxu0
      %v1775 = vpop.f32.mrf.mxu0
      %v1776 = vadd.f32 0.0, %v1775
      %v1777 = vpop.f32.mrf.mxu0
      %1778 = vmatprep.mubr.bf16.mxu0 0
      %1779 = vmatmul.mubr.bf16.gmra.mxu0 %v1212
      %v1780 = vpop.f32.mrf.mxu0
      %v1781 = vadd.f32 0.0, %v1780
      %v1782 = vpop.f32.mrf.mxu0
      %v1783 = vpop.f32.mrf.mxu0
      %v1784 = vadd.f32 0.0, %v1783
      %v1785 = vpop.f32.mrf.mxu0
      %1786 = vdwg.mxu0
      %v1787 = vadd.f32 %v1589, %v1709
      %v1788 = vadd.f32 %v1590, %v1712
      %v1789 = vadd.f32 %v1591, %v1717
      %v1790 = vadd.f32 %v1592, %v1720
      %v1791 = vadd.f32 %v1593, %v1725
      %v1792 = vadd.f32 %v1594, %v1728
      %v1793 = vadd.f32 %v1595, %v1733
      %v1794 = vadd.f32 %v1596, %v1736
      %v1795 = vadd.f32 %v1597, %v1741
      %v1796 = vadd.f32 %v1598, %v1744
      %v1797 = vadd.f32 %v1599, %v1749
      %v1798 = vadd.f32 %v1600, %v1752
      %v1799 = vadd.f32 %v1601, %v1757
      %v1800 = vadd.f32 %v1602, %v1760
      %v1801 = vadd.f32 %v1603, %v1765
      %v1802 = vadd.f32 %v1604, %v1768
      %v1803 = vadd.f32 %v1605, %v1773
      %v1804 = vadd.f32 %v1606, %v1776
      %v1805 = vadd.f32 %v1607, %v1781
      %v1806 = vadd.f32 %v1608, %v1784
      %v1807 = vld [vmem:[%s374 + $0x2] sm:$0xff]
      %v1808 = vld [vmem:[%s374 + $0xa] sm:$0xff]
      %v1809 = vld [vmem:[%s374 + $0x1a] sm:$0xff]
      %v1810 = vld [vmem:[%s374 + $0x22] sm:$0xff]
      %v1811 = vld [vmem:[%s374 + $0x32] sm:$0xff]
      %v1812 = vld [vmem:[%s374 + $0x3a] sm:$0xff]
      %v1813 = vld [vmem:[%s374 + $0x4a] sm:$0xff]
      %v1814 = vld [vmem:[%s374 + $0x52] sm:$0xff]
      %v1815 = vld [vmem:[%s374 + $0x62] sm:$0xff]
      %v1816 = vld [vmem:[%s374 + $0x6a] sm:$0xff]
      %v1817 = vld [vmem:[%s374 + $0x7a] sm:$0xff]
      %v1818 = vld [vmem:[%s374 + $0x82] sm:$0xff]
      %v1819 = vld [vmem:[%s374 + $0x92] sm:$0xff]
      %v1820 = vld [vmem:[%s374 + $0x9a] sm:$0xff]
      %v1821 = vld [vmem:[%s374 + $0xaa] sm:$0xff]
      %v1822 = vld [vmem:[%s374 + $0xb2] sm:$0xff]
      %v1823 = vld [vmem:[%s374 + $0xc2] sm:$0xff]
      %v1824 = vld [vmem:[%s374 + $0xca] sm:$0xff]
      %v1825 = vld [vmem:[%s374 + $0xda] sm:$0xff]
      %v1826 = vld [vmem:[%s374 + $0xe2] sm:$0xff]
      %v1827 = vld [vmem:[%s374 + $0xf2] sm:$0xff]
      %v1828 = vld [vmem:[%s374 + $0xfa] sm:$0xff]
      %v1829 = vld [vmem:[%s374 + $0x10a] sm:$0xff]
      %v1830 = vld [vmem:[%s374 + $0x112] sm:$0xff]
      %v1831 = vmax.f32 %v1807, 0.0
      %v1832 = vmax.f32 %v1808, 0.0
      %v1833 = vmax.f32 %v1809, 0.0
      %v1834 = vmax.f32 %v1810, 0.0
      %v1835 = vmax.f32 %v1811, 0.0
      %v1836 = vmax.f32 %v1812, 0.0
      %v1837 = vmax.f32 %v1813, 0.0
      %v1838 = vmax.f32 %v1814, 0.0
      %v1839 = vmax.f32 %v1815, 0.0
      %v1840 = vmax.f32 %v1816, 0.0
      %v1841 = vmax.f32 %v1817, 0.0
      %v1842 = vmax.f32 %v1818, 0.0
      %v1843 = vmax.f32 %v1819, 0.0
      %v1844 = vmax.f32 %v1820, 0.0
      %v1845 = vmax.f32 %v1821, 0.0
      %v1846 = vmax.f32 %v1822, 0.0
      %v1847 = vmax.f32 %v1823, 0.0
      %v1848 = vmax.f32 %v1824, 0.0
      %v1849 = vmax.f32 %v1825, 0.0
      %v1850 = vmax.f32 %v1826, 0.0
      %v1851 = vmax.f32 %v1827, 0.0
      %v1852 = vmax.f32 %v1828, 0.0
      %v1853 = vmax.f32 %v1829, 0.0
      %v1854 = vmax.f32 %v1830, 0.0
      %v1855 = vpack.c.bf16 %v1832, %v1831
      %v1856 = vpack.c.bf16 %v1834, %v1833
      %v1857 = vpack.c.bf16 %v1836, %v1835
      %v1858 = vpack.c.bf16 %v1838, %v1837
      %v1859 = vpack.c.bf16 %v1840, %v1839
      %v1860 = vpack.c.bf16 %v1842, %v1841
      %v1861 = vpack.c.bf16 %v1844, %v1843
      %v1862 = vpack.c.bf16 %v1846, %v1845
      %v1863 = vpack.c.bf16 %v1848, %v1847
      %v1864 = vpack.c.bf16 %v1850, %v1849
      %v1865 = vpack.c.bf16 %v1852, %v1851
      %v1866 = vpack.c.bf16 %v1854, %v1853
      %s1867 = scalar_lea.vmem %s1, 128
      %v1868 = vld [vmem:[%s1867] sm:$0xf]
      %v1869 = vld [vmem:[%s1867 + $0x4] sm:$0xf]
      %v1870 = vld [vmem:[%s1867 + $0x8] sm:$0xf]
      %v1871 = vld [vmem:[%s1867 + $0xc] sm:$0xf]
      %v1872 = vld [vmem:[%s1867 + $0x10] sm:$0xf]
      %v1873 = vld [vmem:[%s1867 + $0x14] sm:$0xf]
      %v1874 = vld [vmem:[%s1867 + $0x18] sm:$0xf]
      %v1875 = vld [vmem:[%s1867 + $0x1c] sm:$0xf]
      %v1876 = vld [vmem:[%s1867 + $0x20] sm:$0xf]
      %v1877 = vld [vmem:[%s1867 + $0x24] sm:$0xf]
      %v1878 = vld [vmem:[%s1867 + $0x28] sm:$0xf]
      %v1879 = vld [vmem:[%s1867 + $0x2c] sm:$0xf]
      %v1880 = vld [vmem:[%s1867 + $0x30] sm:$0xf]
      %v1881 = vld [vmem:[%s1867 + $0x34] sm:$0xf]
      %v1882 = vld [vmem:[%s1867 + $0x38] sm:$0xf]
      %v1883 = vld [vmem:[%s1867 + $0x3c] sm:$0xf]
      %v1900 = vunpack.c.l.b16 %v1868
      %v1901 = vunpack.c.l.b16 %v1869
      %v1902 = vunpack.c.l.b16 %v1870
      %v1903 = vunpack.c.l.b16 %v1871
      %v1904 = vunpack.c.l.b16 %v1872
      %v1905 = vunpack.c.l.b16 %v1873
      %v1906 = vunpack.c.l.b16 %v1874
      %v1907 = vunpack.c.l.b16 %v1875
      %v1908 = vunpack.c.l.b16 %v1876
      %v1909 = vunpack.c.l.b16 %v1877
      %v1910 = vunpack.c.l.b16 %v1878
      %v1911 = vunpack.c.l.b16 %v1879
      %v1912 = vunpack.c.l.b16 %v1880
      %v1913 = vunpack.c.l.b16 %v1881
      %v1914 = vunpack.c.l.b16 %v1882
      %v1915 = vunpack.c.l.b16 %v1883
      %v1916 = vpack.c.b16 %v1901, %v1900
      %v1917 = vpack.c.b16 %v1903, %v1902
      %v1918 = vpack.c.b16 %v1905, %v1904
      %v1919 = vpack.c.b16 %v1907, %v1906
      %v1920 = vpack.c.b16 %v1909, %v1908
      %v1921 = vpack.c.b16 %v1911, %v1910
      %v1922 = vpack.c.b16 %v1913, %v1912
      %v1923 = vpack.c.b16 %v1915, %v1914
      %1932 = vmatprep.subr.bf16.mxu0 0
      %1933 = vmatpush1.bf16.msra.mxu0 %v1923
      %1934 = vmatprep.subr.bf16.mxu0 0
      %1935 = vmatpush1.bf16.msra.mxu0 %v1922
      %1936 = vmatprep.subr.bf16.mxu0 0
      %1937 = vmatpush1.bf16.msra.mxu0 %v1921
      %1938 = vmatprep.subr.bf16.mxu0 0
      %1939 = vmatpush1.bf16.msra.mxu0 %v1920
      %1940 = vmatprep.subr.bf16.mxu0 0
      %1941 = vmatpush1.bf16.msra.mxu0 %v1919
      %1942 = vmatprep.subr.bf16.mxu0 0
      %1943 = vmatpush1.bf16.msra.mxu0 %v1918
      %1944 = vmatprep.subr.bf16.mxu0 0
      %1945 = vmatpush1.bf16.msra.mxu0 %v1917
      %1946 = vmatprep.subr.bf16.mxu0 0
      %1947 = vmatpush1.bf16.msra.mxu0 %v1916
      %1948 = vmatprep.subr.bf16.mxu0 0
      %1949 = vmatpush2.bf16.msra.mxu0 0
      %1950 = vmatprep.subr.bf16.mxu0 0
      %1951 = vmatpush2.bf16.msra.mxu0 0
      %1952 = vmatprep.subr.bf16.mxu0 0
      %1953 = vmatpush2.bf16.msra.mxu0 0
      %1954 = vmatprep.subr.bf16.mxu0 0
      %1955 = vmatpush2.bf16.msra.mxu0 0
      %1956 = vmatprep.subr.bf16.mxu0 0
      %1957 = vmatpush2.bf16.msra.mxu0 0
      %1958 = vmatprep.subr.bf16.mxu0 0
      %1959 = vmatpush2.bf16.msra.mxu0 0
      %1960 = vmatprep.subr.bf16.mxu0 0
      %1961 = vmatpush2.bf16.msra.mxu0 0
      %1962 = vmatprep.subr.bf16.mxu0 0
      %1963 = vmatpush2.bf16.msra.mxu0 0
      %1964 = vmatprep.mubr.bf16.mxu0 0
      %1965 = vmatmul.mubr.bf16.gmra.mxu0 %v1855
      %v1966 = vpop.f32.mrf.mxu0
      %v1967 = vadd.f32 0.0, %v1966
      %v1968 = vpop.f32.mrf.mxu0
      %v1969 = vpop.f32.mrf.mxu0
      %v1970 = vadd.f32 0.0, %v1969
      %v1971 = vpop.f32.mrf.mxu0
      %1972 = vmatprep.mubr.bf16.mxu0 0
      %1973 = vmatmul.mubr.bf16.gmra.mxu0 %v1856
      %v1974 = vpop.f32.mrf.mxu0
      %v1975 = vadd.f32 0.0, %v1974
      %v1976 = vpop.f32.mrf.mxu0
      %v1977 = vpop.f32.mrf.mxu0
      %v1978 = vadd.f32 0.0, %v1977
      %v1979 = vpop.f32.mrf.mxu0
      %1980 = vmatprep.mubr.bf16.mxu0 0
      %1981 = vmatmul.mubr.bf16.gmra.mxu0 %v1857
      %v1982 = vpop.f32.mrf.mxu0
      %v1983 = vadd.f32 0.0, %v1982
      %v1984 = vpop.f32.mrf.mxu0
      %v1985 = vpop.f32.mrf.mxu0
      %v1986 = vadd.f32 0.0, %v1985
      %v1987 = vpop.f32.mrf.mxu0
      %1988 = vmatprep.mubr.bf16.mxu0 0
      %1989 = vmatmul.mubr.bf16.gmra.mxu0 %v1858
      %v1990 = vpop.f32.mrf.mxu0
      %v1991 = vadd.f32 0.0, %v1990
      %v1992 = vpop.f32.mrf.mxu0
      %v1993 = vpop.f32.mrf.mxu0
      %v1994 = vadd.f32 0.0, %v1993
      %v1995 = vpop.f32.mrf.mxu0
      %1996 = vmatprep.mubr.bf16.mxu0 0
      %1997 = vmatmul.mubr.bf16.gmra.mxu0 %v1859
      %v1998 = vpop.f32.mrf.mxu0
      %v1999 = vadd.f32 0.0, %v1998
      %v2000 = vpop.f32.mrf.mxu0
      %v2001 = vpop.f32.mrf.mxu0
      %v2002 = vadd.f32 0.0, %v2001
      %v2003 = vpop.f32.mrf.mxu0
      %2004 = vmatprep.mubr.bf16.mxu0 0
      %2005 = vmatmul.mubr.bf16.gmra.mxu0 %v1860
      %v2006 = vpop.f32.mrf.mxu0
      %v2007 = vadd.f32 0.0, %v2006
      %v2008 = vpop.f32.mrf.mxu0
      %v2009 = vpop.f32.mrf.mxu0
      %v2010 = vadd.f32 0.0, %v2009
      %v2011 = vpop.f32.mrf.mxu0
      %2012 = vmatprep.mubr.bf16.mxu0 0
      %2013 = vmatmul.mubr.bf16.gmra.mxu0 %v1861
      %v2014 = vpop.f32.mrf.mxu0
      %v2015 = vadd.f32 0.0, %v2014
      %v2016 = vpop.f32.mrf.mxu0
      %v2017 = vpop.f32.mrf.mxu0
      %v2018 = vadd.f32 0.0, %v2017
      %v2019 = vpop.f32.mrf.mxu0
      %2020 = vmatprep.mubr.bf16.mxu0 0
      %2021 = vmatmul.mubr.bf16.gmra.mxu0 %v1862
      %v2022 = vpop.f32.mrf.mxu0
      %v2023 = vadd.f32 0.0, %v2022
      %v2024 = vpop.f32.mrf.mxu0
      %v2025 = vpop.f32.mrf.mxu0
      %v2026 = vadd.f32 0.0, %v2025
      %v2027 = vpop.f32.mrf.mxu0
      %2028 = vmatprep.mubr.bf16.mxu0 0
      %2029 = vmatmul.mubr.bf16.gmra.mxu0 %v1863
      %v2030 = vpop.f32.mrf.mxu0
      %v2031 = vadd.f32 0.0, %v2030
      %v2032 = vpop.f32.mrf.mxu0
      %v2033 = vpop.f32.mrf.mxu0
      %v2034 = vadd.f32 0.0, %v2033
      %v2035 = vpop.f32.mrf.mxu0
      %2036 = vmatprep.mubr.bf16.mxu0 0
      %2037 = vmatmul.mubr.bf16.gmra.mxu0 %v1864
      %v2038 = vpop.f32.mrf.mxu0
      %v2039 = vadd.f32 0.0, %v2038
      %v2040 = vpop.f32.mrf.mxu0
      %v2041 = vpop.f32.mrf.mxu0
      %v2042 = vadd.f32 0.0, %v2041
      %v2043 = vpop.f32.mrf.mxu0
      %2044 = vdwg.mxu0
      %v2045 = vadd.f32 %v1787, %v1967
      %v2046 = vadd.f32 %v1788, %v1970
      %v2047 = vadd.f32 %v1789, %v1975
      %v2048 = vadd.f32 %v1790, %v1978
      %v2049 = vadd.f32 %v1791, %v1983
      %v2050 = vadd.f32 %v1792, %v1986
      %v2051 = vadd.f32 %v1793, %v1991
      %v2052 = vadd.f32 %v1794, %v1994
      %v2053 = vadd.f32 %v1795, %v1999
      %v2054 = vadd.f32 %v1796, %v2002
      %v2055 = vadd.f32 %v1797, %v2007
      %v2056 = vadd.f32 %v1798, %v2010
      %v2057 = vadd.f32 %v1799, %v2015
      %v2058 = vadd.f32 %v1800, %v2018
      %v2059 = vadd.f32 %v1801, %v2023
      %v2060 = vadd.f32 %v1802, %v2026
      %v2061 = vadd.f32 %v1803, %v2031
      %v2062 = vadd.f32 %v1804, %v2034
      %v2063 = vadd.f32 %v1805, %v2039
      %v2064 = vadd.f32 %v1806, %v2042
      %s2065 = scalar_lea.vmem %s1, 320
      %v2066 = vld [vmem:[%s2065] sm:$0xf]
      %v2067 = vld [vmem:[%s2065 + $0x4] sm:$0xf]
      %v2068 = vld [vmem:[%s2065 + $0x8] sm:$0xf]
      %v2069 = vld [vmem:[%s2065 + $0xc] sm:$0xf]
      %v2070 = vld [vmem:[%s2065 + $0x10] sm:$0xf]
      %v2071 = vld [vmem:[%s2065 + $0x14] sm:$0xf]
      %v2072 = vld [vmem:[%s2065 + $0x18] sm:$0xf]
      %v2073 = vld [vmem:[%s2065 + $0x1c] sm:$0xf]
      %v2074 = vld [vmem:[%s2065 + $0x20] sm:$0xf]
      %v2075 = vld [vmem:[%s2065 + $0x24] sm:$0xf]
      %v2076 = vld [vmem:[%s2065 + $0x28] sm:$0xf]
      %v2077 = vld [vmem:[%s2065 + $0x2c] sm:$0xf]
      %v2078 = vld [vmem:[%s2065 + $0x30] sm:$0xf]
      %v2079 = vld [vmem:[%s2065 + $0x34] sm:$0xf]
      %v2080 = vld [vmem:[%s2065 + $0x38] sm:$0xf]
      %v2081 = vld [vmem:[%s2065 + $0x3c] sm:$0xf]
      %v2098 = vunpack.c.l.b16 %v2066
      %v2099 = vunpack.c.l.b16 %v2067
      %v2100 = vunpack.c.l.b16 %v2068
      %v2101 = vunpack.c.l.b16 %v2069
      %v2102 = vunpack.c.l.b16 %v2070
      %v2103 = vunpack.c.l.b16 %v2071
      %v2104 = vunpack.c.l.b16 %v2072
      %v2105 = vunpack.c.l.b16 %v2073
      %v2106 = vunpack.c.l.b16 %v2074
      %v2107 = vunpack.c.l.b16 %v2075
      %v2108 = vunpack.c.l.b16 %v2076
      %v2109 = vunpack.c.l.b16 %v2077
      %v2110 = vunpack.c.l.b16 %v2078
      %v2111 = vunpack.c.l.b16 %v2079
      %v2112 = vunpack.c.l.b16 %v2080
      %v2113 = vunpack.c.l.b16 %v2081
      %v2114 = vpack.c.b16 %v2099, %v2098
      %v2115 = vpack.c.b16 %v2101, %v2100
      %v2116 = vpack.c.b16 %v2103, %v2102
      %v2117 = vpack.c.b16 %v2105, %v2104
      %v2118 = vpack.c.b16 %v2107, %v2106
      %v2119 = vpack.c.b16 %v2109, %v2108
      %v2120 = vpack.c.b16 %v2111, %v2110
      %v2121 = vpack.c.b16 %v2113, %v2112
      %2130 = vmatprep.subr.bf16.mxu0 0
      %2131 = vmatpush1.bf16.msra.mxu0 %v2121
      %2132 = vmatprep.subr.bf16.mxu0 0
      %2133 = vmatpush1.bf16.msra.mxu0 %v2120
      %2134 = vmatprep.subr.bf16.mxu0 0
      %2135 = vmatpush1.bf16.msra.mxu0 %v2119
      %2136 = vmatprep.subr.bf16.mxu0 0
      %2137 = vmatpush1.bf16.msra.mxu0 %v2118
      %2138 = vmatprep.subr.bf16.mxu0 0
      %2139 = vmatpush1.bf16.msra.mxu0 %v2117
      %2140 = vmatprep.subr.bf16.mxu0 0
      %2141 = vmatpush1.bf16.msra.mxu0 %v2116
      %2142 = vmatprep.subr.bf16.mxu0 0
      %2143 = vmatpush1.bf16.msra.mxu0 %v2115
      %2144 = vmatprep.subr.bf16.mxu0 0
      %2145 = vmatpush1.bf16.msra.mxu0 %v2114
      %2146 = vmatprep.subr.bf16.mxu0 0
      %2147 = vmatpush2.bf16.msra.mxu0 0
      %2148 = vmatprep.subr.bf16.mxu0 0
      %2149 = vmatpush2.bf16.msra.mxu0 0
      %2150 = vmatprep.subr.bf16.mxu0 0
      %2151 = vmatpush2.bf16.msra.mxu0 0
      %2152 = vmatprep.subr.bf16.mxu0 0
      %2153 = vmatpush2.bf16.msra.mxu0 0
      %2154 = vmatprep.subr.bf16.mxu0 0
      %2155 = vmatpush2.bf16.msra.mxu0 0
      %2156 = vmatprep.subr.bf16.mxu0 0
      %2157 = vmatpush2.bf16.msra.mxu0 0
      %2158 = vmatprep.subr.bf16.mxu0 0
      %2159 = vmatpush2.bf16.msra.mxu0 0
      %2160 = vmatprep.subr.bf16.mxu0 0
      %2161 = vmatpush2.bf16.msra.mxu0 0
      %2162 = vmatprep.mubr.bf16.mxu0 0
      %2163 = vmatmul.mubr.bf16.gmra.mxu0 %v1856
      %v2164 = vpop.f32.mrf.mxu0
      %v2165 = vadd.f32 0.0, %v2164
      %v2166 = vpop.f32.mrf.mxu0
      %v2167 = vpop.f32.mrf.mxu0
      %v2168 = vadd.f32 0.0, %v2167
      %v2169 = vpop.f32.mrf.mxu0
      %2170 = vmatprep.mubr.bf16.mxu0 0
      %2171 = vmatmul.mubr.bf16.gmra.mxu0 %v1857
      %v2172 = vpop.f32.mrf.mxu0
      %v2173 = vadd.f32 0.0, %v2172
      %v2174 = vpop.f32.mrf.mxu0
      %v2175 = vpop.f32.mrf.mxu0
      %v2176 = vadd.f32 0.0, %v2175
      %v2177 = vpop.f32.mrf.mxu0
      %2178 = vmatprep.mubr.bf16.mxu0 0
      %2179 = vmatmul.mubr.bf16.gmra.mxu0 %v1858
      %v2180 = vpop.f32.mrf.mxu0
      %v2181 = vadd.f32 0.0, %v2180
      %v2182 = vpop.f32.mrf.mxu0
      %v2183 = vpop.f32.mrf.mxu0
      %v2184 = vadd.f32 0.0, %v2183
      %v2185 = vpop.f32.mrf.mxu0
      %2186 = vmatprep.mubr.bf16.mxu0 0
      %2187 = vmatmul.mubr.bf16.gmra.mxu0 %v1859
      %v2188 = vpop.f32.mrf.mxu0
      %v2189 = vadd.f32 0.0, %v2188
      %v2190 = vpop.f32.mrf.mxu0
      %v2191 = vpop.f32.mrf.mxu0
      %v2192 = vadd.f32 0.0, %v2191
      %v2193 = vpop.f32.mrf.mxu0
      %2194 = vmatprep.mubr.bf16.mxu0 0
      %2195 = vmatmul.mubr.bf16.gmra.mxu0 %v1860
      %v2196 = vpop.f32.mrf.mxu0
      %v2197 = vadd.f32 0.0, %v2196
      %v2198 = vpop.f32.mrf.mxu0
      %v2199 = vpop.f32.mrf.mxu0
      %v2200 = vadd.f32 0.0, %v2199
      %v2201 = vpop.f32.mrf.mxu0
      %2202 = vmatprep.mubr.bf16.mxu0 0
      %2203 = vmatmul.mubr.bf16.gmra.mxu0 %v1861
      %v2204 = vpop.f32.mrf.mxu0
      %v2205 = vadd.f32 0.0, %v2204
      %v2206 = vpop.f32.mrf.mxu0
      %v2207 = vpop.f32.mrf.mxu0
      %v2208 = vadd.f32 0.0, %v2207
      %v2209 = vpop.f32.mrf.mxu0
      %2210 = vmatprep.mubr.bf16.mxu0 0
      %2211 = vmatmul.mubr.bf16.gmra.mxu0 %v1862
      %v2212 = vpop.f32.mrf.mxu0
      %v2213 = vadd.f32 0.0, %v2212
      %v2214 = vpop.f32.mrf.mxu0
      %v2215 = vpop.f32.mrf.mxu0
      %v2216 = vadd.f32 0.0, %v2215
      %v2217 = vpop.f32.mrf.mxu0
      %2218 = vmatprep.mubr.bf16.mxu0 0
      %2219 = vmatmul.mubr.bf16.gmra.mxu0 %v1863
      %v2220 = vpop.f32.mrf.mxu0
      %v2221 = vadd.f32 0.0, %v2220
      %v2222 = vpop.f32.mrf.mxu0
      %v2223 = vpop.f32.mrf.mxu0
      %v2224 = vadd.f32 0.0, %v2223
      %v2225 = vpop.f32.mrf.mxu0
      %2226 = vmatprep.mubr.bf16.mxu0 0
      %2227 = vmatmul.mubr.bf16.gmra.mxu0 %v1864
      %v2228 = vpop.f32.mrf.mxu0
      %v2229 = vadd.f32 0.0, %v2228
      %v2230 = vpop.f32.mrf.mxu0
      %v2231 = vpop.f32.mrf.mxu0
      %v2232 = vadd.f32 0.0, %v2231
      %v2233 = vpop.f32.mrf.mxu0
      %2234 = vmatprep.mubr.bf16.mxu0 0
      %2235 = vmatmul.mubr.bf16.gmra.mxu0 %v1865
      %v2236 = vpop.f32.mrf.mxu0
      %v2237 = vadd.f32 0.0, %v2236
      %v2238 = vpop.f32.mrf.mxu0
      %v2239 = vpop.f32.mrf.mxu0
      %v2240 = vadd.f32 0.0, %v2239
      %v2241 = vpop.f32.mrf.mxu0
      %2242 = vdwg.mxu0
      %v2243 = vadd.f32 %v2045, %v2165
      %v2244 = vadd.f32 %v2046, %v2168
      %v2245 = vadd.f32 %v2047, %v2173
      %v2246 = vadd.f32 %v2048, %v2176
      %v2247 = vadd.f32 %v2049, %v2181
      %v2248 = vadd.f32 %v2050, %v2184
      %v2249 = vadd.f32 %v2051, %v2189
      %v2250 = vadd.f32 %v2052, %v2192
      %v2251 = vadd.f32 %v2053, %v2197
      %v2252 = vadd.f32 %v2054, %v2200
      %v2253 = vadd.f32 %v2055, %v2205
      %v2254 = vadd.f32 %v2056, %v2208
      %v2255 = vadd.f32 %v2057, %v2213
      %v2256 = vadd.f32 %v2058, %v2216
      %v2257 = vadd.f32 %v2059, %v2221
      %v2258 = vadd.f32 %v2060, %v2224
      %v2259 = vadd.f32 %v2061, %v2229
      %v2260 = vadd.f32 %v2062, %v2232
      %v2261 = vadd.f32 %v2063, %v2237
      %v2262 = vadd.f32 %v2064, %v2240
      %s2263 = scalar_lea.vmem %s1, 512
      %v2264 = vld [vmem:[%s2263] sm:$0xf]
      %v2265 = vld [vmem:[%s2263 + $0x4] sm:$0xf]
      %v2266 = vld [vmem:[%s2263 + $0x8] sm:$0xf]
      %v2267 = vld [vmem:[%s2263 + $0xc] sm:$0xf]
      %v2268 = vld [vmem:[%s2263 + $0x10] sm:$0xf]
      %v2269 = vld [vmem:[%s2263 + $0x14] sm:$0xf]
      %v2270 = vld [vmem:[%s2263 + $0x18] sm:$0xf]
      %v2271 = vld [vmem:[%s2263 + $0x1c] sm:$0xf]
      %v2272 = vld [vmem:[%s2263 + $0x20] sm:$0xf]
      %v2273 = vld [vmem:[%s2263 + $0x24] sm:$0xf]
      %v2274 = vld [vmem:[%s2263 + $0x28] sm:$0xf]
      %v2275 = vld [vmem:[%s2263 + $0x2c] sm:$0xf]
      %v2276 = vld [vmem:[%s2263 + $0x30] sm:$0xf]
      %v2277 = vld [vmem:[%s2263 + $0x34] sm:$0xf]
      %v2278 = vld [vmem:[%s2263 + $0x38] sm:$0xf]
      %v2279 = vld [vmem:[%s2263 + $0x3c] sm:$0xf]
      %v2296 = vunpack.c.l.b16 %v2264
      %v2297 = vunpack.c.l.b16 %v2265
      %v2298 = vunpack.c.l.b16 %v2266
      %v2299 = vunpack.c.l.b16 %v2267
      %v2300 = vunpack.c.l.b16 %v2268
      %v2301 = vunpack.c.l.b16 %v2269
      %v2302 = vunpack.c.l.b16 %v2270
      %v2303 = vunpack.c.l.b16 %v2271
      %v2304 = vunpack.c.l.b16 %v2272
      %v2305 = vunpack.c.l.b16 %v2273
      %v2306 = vunpack.c.l.b16 %v2274
      %v2307 = vunpack.c.l.b16 %v2275
      %v2308 = vunpack.c.l.b16 %v2276
      %v2309 = vunpack.c.l.b16 %v2277
      %v2310 = vunpack.c.l.b16 %v2278
      %v2311 = vunpack.c.l.b16 %v2279
      %v2312 = vpack.c.b16 %v2297, %v2296
      %v2313 = vpack.c.b16 %v2299, %v2298
      %v2314 = vpack.c.b16 %v2301, %v2300
      %v2315 = vpack.c.b16 %v2303, %v2302
      %v2316 = vpack.c.b16 %v2305, %v2304
      %v2317 = vpack.c.b16 %v2307, %v2306
      %v2318 = vpack.c.b16 %v2309, %v2308
      %v2319 = vpack.c.b16 %v2311, %v2310
      %2328 = vmatprep.subr.bf16.mxu0 0
      %2329 = vmatpush1.bf16.msra.mxu0 %v2319
      %2330 = vmatprep.subr.bf16.mxu0 0
      %2331 = vmatpush1.bf16.msra.mxu0 %v2318
      %2332 = vmatprep.subr.bf16.mxu0 0
      %2333 = vmatpush1.bf16.msra.mxu0 %v2317
      %2334 = vmatprep.subr.bf16.mxu0 0
      %2335 = vmatpush1.bf16.msra.mxu0 %v2316
      %2336 = vmatprep.subr.bf16.mxu0 0
      %2337 = vmatpush1.bf16.msra.mxu0 %v2315
      %2338 = vmatprep.subr.bf16.mxu0 0
      %2339 = vmatpush1.bf16.msra.mxu0 %v2314
      %2340 = vmatprep.subr.bf16.mxu0 0
      %2341 = vmatpush1.bf16.msra.mxu0 %v2313
      %2342 = vmatprep.subr.bf16.mxu0 0
      %2343 = vmatpush1.bf16.msra.mxu0 %v2312
      %2344 = vmatprep.subr.bf16.mxu0 0
      %2345 = vmatpush2.bf16.msra.mxu0 0
      %2346 = vmatprep.subr.bf16.mxu0 0
      %2347 = vmatpush2.bf16.msra.mxu0 0
      %2348 = vmatprep.subr.bf16.mxu0 0
      %2349 = vmatpush2.bf16.msra.mxu0 0
      %2350 = vmatprep.subr.bf16.mxu0 0
      %2351 = vmatpush2.bf16.msra.mxu0 0
      %2352 = vmatprep.subr.bf16.mxu0 0
      %2353 = vmatpush2.bf16.msra.mxu0 0
      %2354 = vmatprep.subr.bf16.mxu0 0
      %2355 = vmatpush2.bf16.msra.mxu0 0
      %2356 = vmatprep.subr.bf16.mxu0 0
      %2357 = vmatpush2.bf16.msra.mxu0 0
      %2358 = vmatprep.subr.bf16.mxu0 0
      %2359 = vmatpush2.bf16.msra.mxu0 0
      %2360 = vmatprep.mubr.bf16.mxu0 0
      %2361 = vmatmul.mubr.bf16.gmra.mxu0 %v1857
      %v2362 = vpop.f32.mrf.mxu0
      %v2363 = vadd.f32 0.0, %v2362
      %v2364 = vpop.f32.mrf.mxu0
      %v2365 = vpop.f32.mrf.mxu0
      %v2366 = vadd.f32 0.0, %v2365
      %v2367 = vpop.f32.mrf.mxu0
      %2368 = vmatprep.mubr.bf16.mxu0 0
      %2369 = vmatmul.mubr.bf16.gmra.mxu0 %v1858
      %v2370 = vpop.f32.mrf.mxu0
      %v2371 = vadd.f32 0.0, %v2370
      %v2372 = vpop.f32.mrf.mxu0
      %v2373 = vpop.f32.mrf.mxu0
      %v2374 = vadd.f32 0.0, %v2373
      %v2375 = vpop.f32.mrf.mxu0
      %2376 = vmatprep.mubr.bf16.mxu0 0
      %2377 = vmatmul.mubr.bf16.gmra.mxu0 %v1859
      %v2378 = vpop.f32.mrf.mxu0
      %v2379 = vadd.f32 0.0, %v2378
      %v2380 = vpop.f32.mrf.mxu0
      %v2381 = vpop.f32.mrf.mxu0
      %v2382 = vadd.f32 0.0, %v2381
      %v2383 = vpop.f32.mrf.mxu0
      %2384 = vmatprep.mubr.bf16.mxu0 0
      %2385 = vmatmul.mubr.bf16.gmra.mxu0 %v1860
      %v2386 = vpop.f32.mrf.mxu0
      %v2387 = vadd.f32 0.0, %v2386
      %v2388 = vpop.f32.mrf.mxu0
      %v2389 = vpop.f32.mrf.mxu0
      %v2390 = vadd.f32 0.0, %v2389
      %v2391 = vpop.f32.mrf.mxu0
      %2392 = vmatprep.mubr.bf16.mxu0 0
      %2393 = vmatmul.mubr.bf16.gmra.mxu0 %v1861
      %v2394 = vpop.f32.mrf.mxu0
      %v2395 = vadd.f32 0.0, %v2394
      %v2396 = vpop.f32.mrf.mxu0
      %v2397 = vpop.f32.mrf.mxu0
      %v2398 = vadd.f32 0.0, %v2397
      %v2399 = vpop.f32.mrf.mxu0
      %2400 = vmatprep.mubr.bf16.mxu0 0
      %2401 = vmatmul.mubr.bf16.gmra.mxu0 %v1862
      %v2402 = vpop.f32.mrf.mxu0
      %v2403 = vadd.f32 0.0, %v2402
      %v2404 = vpop.f32.mrf.mxu0
      %v2405 = vpop.f32.mrf.mxu0
      %v2406 = vadd.f32 0.0, %v2405
      %v2407 = vpop.f32.mrf.mxu0
      %2408 = vmatprep.mubr.bf16.mxu0 0
      %2409 = vmatmul.mubr.bf16.gmra.mxu0 %v1863
      %v2410 = vpop.f32.mrf.mxu0
      %v2411 = vadd.f32 0.0, %v2410
      %v2412 = vpop.f32.mrf.mxu0
      %v2413 = vpop.f32.mrf.mxu0
      %v2414 = vadd.f32 0.0, %v2413
      %v2415 = vpop.f32.mrf.mxu0
      %2416 = vmatprep.mubr.bf16.mxu0 0
      %2417 = vmatmul.mubr.bf16.gmra.mxu0 %v1864
      %v2418 = vpop.f32.mrf.mxu0
      %v2419 = vadd.f32 0.0, %v2418
      %v2420 = vpop.f32.mrf.mxu0
      %v2421 = vpop.f32.mrf.mxu0
      %v2422 = vadd.f32 0.0, %v2421
      %v2423 = vpop.f32.mrf.mxu0
      %2424 = vmatprep.mubr.bf16.mxu0 0
      %2425 = vmatmul.mubr.bf16.gmra.mxu0 %v1865
      %v2426 = vpop.f32.mrf.mxu0
      %v2427 = vadd.f32 0.0, %v2426
      %v2428 = vpop.f32.mrf.mxu0
      %v2429 = vpop.f32.mrf.mxu0
      %v2430 = vadd.f32 0.0, %v2429
      %v2431 = vpop.f32.mrf.mxu0
      %2432 = vmatprep.mubr.bf16.mxu0 0
      %2433 = vmatmul.mubr.bf16.gmra.mxu0 %v1866
      %v2434 = vpop.f32.mrf.mxu0
      %v2435 = vadd.f32 0.0, %v2434
      %v2436 = vpop.f32.mrf.mxu0
      %v2437 = vpop.f32.mrf.mxu0
      %v2438 = vadd.f32 0.0, %v2437
      %v2439 = vpop.f32.mrf.mxu0
      %2440 = vdwg.mxu0
      %v2441 = vadd.f32 %v2243, %v2363
      %v2442 = vadd.f32 %v2244, %v2366
      %v2443 = vadd.f32 %v2245, %v2371
      %v2444 = vadd.f32 %v2246, %v2374
      %v2445 = vadd.f32 %v2247, %v2379
      %v2446 = vadd.f32 %v2248, %v2382
      %v2447 = vadd.f32 %v2249, %v2387
      %v2448 = vadd.f32 %v2250, %v2390
      %v2449 = vadd.f32 %v2251, %v2395
      %v2450 = vadd.f32 %v2252, %v2398
      %v2451 = vadd.f32 %v2253, %v2403
      %v2452 = vadd.f32 %v2254, %v2406
      %v2453 = vadd.f32 %v2255, %v2411
      %v2454 = vadd.f32 %v2256, %v2414
      %v2455 = vadd.f32 %v2257, %v2419
      %v2456 = vadd.f32 %v2258, %v2422
      %v2457 = vadd.f32 %v2259, %v2427
      %v2458 = vadd.f32 %v2260, %v2430
      %v2459 = vadd.f32 %v2261, %v2435
      %v2460 = vadd.f32 %v2262, %v2438
      %v2461 = vld [vmem:[%s2] sm:$0x1]
      %v2463 = vlaneseq
      %v2464 = vshrl.u32 %v2463, 7
      %v2465 = vsub.s32 0, %v2464
      %v2466 = vrot.slane %v2461, %v2465
      %v2468 = vadd.f32 %v2441, %v2466
      %v2469 = vadd.f32 %v2442, %v2466
      %v2470 = vadd.f32 %v2443, %v2466
      %v2471 = vadd.f32 %v2444, %v2466
      %v2472 = vadd.f32 %v2445, %v2466
      %v2473 = vadd.f32 %v2446, %v2466
      %v2474 = vadd.f32 %v2447, %v2466
      %v2475 = vadd.f32 %v2448, %v2466
      %v2476 = vadd.f32 %v2449, %v2466
      %v2477 = vadd.f32 %v2450, %v2466
      %v2478 = vadd.f32 %v2451, %v2466
      %v2479 = vadd.f32 %v2452, %v2466
      %v2480 = vadd.f32 %v2453, %v2466
      %v2481 = vadd.f32 %v2454, %v2466
      %v2482 = vadd.f32 %v2455, %v2466
      %v2483 = vadd.f32 %v2456, %v2466
      %v2484 = vadd.f32 %v2457, %v2466
      %v2485 = vadd.f32 %v2458, %v2466
      %v2486 = vadd.f32 %v2459, %v2466
      %v2487 = vadd.f32 %v2460, %v2466
      %v2488 = vmax.f32 %v2468, 0.0
      %v2489 = vmax.f32 %v2469, 0.0
      %v2490 = vmax.f32 %v2470, 0.0
      %v2491 = vmax.f32 %v2471, 0.0
      %v2492 = vmax.f32 %v2472, 0.0
      %v2493 = vmax.f32 %v2473, 0.0
      %v2494 = vmax.f32 %v2474, 0.0
      %v2495 = vmax.f32 %v2475, 0.0
      %v2496 = vmax.f32 %v2476, 0.0
      %v2497 = vmax.f32 %v2477, 0.0
      %v2498 = vmax.f32 %v2478, 0.0
      %v2499 = vmax.f32 %v2479, 0.0
      %v2500 = vmax.f32 %v2480, 0.0
      %v2501 = vmax.f32 %v2481, 0.0
      %v2502 = vmax.f32 %v2482, 0.0
      %v2503 = vmax.f32 %v2483, 0.0
      %v2504 = vmax.f32 %v2484, 0.0
      %v2505 = vmax.f32 %v2485, 0.0
      %v2506 = vmax.f32 %v2486, 0.0
      %v2507 = vmax.f32 %v2487, 0.0
      %v2508 = vpack.c.bf16 %v2489, %v2488
      %v2509 = vpack.c.bf16 %v2491, %v2490
      %v2510 = vpack.c.bf16 %v2493, %v2492
      %v2511 = vpack.c.bf16 %v2495, %v2494
      %v2512 = vpack.c.bf16 %v2497, %v2496
      %v2513 = vpack.c.bf16 %v2499, %v2498
      %v2514 = vpack.c.bf16 %v2501, %v2500
      %v2515 = vpack.c.bf16 %v2503, %v2502
      %v2516 = vpack.c.bf16 %v2505, %v2504
      %v2517 = vpack.c.bf16 %v2507, %v2506
      %v2528 = vunpack.c.l.b16 %v2508
      %v2529 = vunpack.c.h.b16 %v2508
      %v2530 = vunpack.c.l.b16 %v2509
      %v2531 = vunpack.c.h.b16 %v2509
      %v2532 = vunpack.c.l.b16 %v2510
      %v2533 = vunpack.c.h.b16 %v2510
      %v2534 = vunpack.c.l.b16 %v2511
      %v2535 = vunpack.c.h.b16 %v2511
      %v2536 = vunpack.c.l.b16 %v2512
      %v2537 = vunpack.c.h.b16 %v2512
      %v2538 = vunpack.c.l.b16 %v2513
      %v2539 = vunpack.c.h.b16 %v2513
      %v2540 = vunpack.c.l.b16 %v2514
      %v2541 = vunpack.c.h.b16 %v2514
      %v2542 = vunpack.c.l.b16 %v2515
      %v2543 = vunpack.c.h.b16 %v2515
      %v2544 = vunpack.c.l.b16 %v2516
      %v2545 = vunpack.c.h.b16 %v2516
      %v2546 = vunpack.c.l.b16 %v2517
      %v2547 = vunpack.c.h.b16 %v2517
      %v2548 = vpack.c.b16 %v2528, %v2528
      %v2549 = vpack.c.b16 %v2529, %v2529
      %v2550 = vpack.c.b16 %v2530, %v2530
      %v2551 = vpack.c.b16 %v2531, %v2531
      %v2552 = vpack.c.b16 %v2532, %v2532
      %v2553 = vpack.c.b16 %v2533, %v2533
      %v2554 = vpack.c.b16 %v2534, %v2534
      %v2555 = vpack.c.b16 %v2535, %v2535
      %v2556 = vpack.c.b16 %v2536, %v2536
      %v2557 = vpack.c.b16 %v2537, %v2537
      %v2558 = vpack.c.b16 %v2538, %v2538
      %v2559 = vpack.c.b16 %v2539, %v2539
      %v2560 = vpack.c.b16 %v2540, %v2540
      %v2561 = vpack.c.b16 %v2541, %v2541
      %v2562 = vpack.c.b16 %v2542, %v2542
      %v2563 = vpack.c.b16 %v2543, %v2543
      %v2564 = vpack.c.b16 %v2544, %v2544
      %v2565 = vpack.c.b16 %v2545, %v2545
      %v2566 = vpack.c.b16 %v2546, %v2546
      %v2567 = vpack.c.b16 %v2547, %v2547
      %vm2568 = vsmask.f32 256
      %vm2569 = vsmask.f32 4368
      %vm2570 = vmor %vm2568, %vm2569
      %v2572 = vshrl.u32 %v2548, 16
      %v2574 = vrot.slane %v2572, 7
      %v2575 = vshll.u32 %v2548, 16
      %v2577 = vor.u32 %v2574, %v2575
      %v2578 = vrot.slane %v2574, 4
      %v2580 = vshrl.u32 %v2549, 16
      %v2582 = vrot.slane %v2580, 7
      %v2583 = vshll.u32 %v2549, 16
      %v2585 = vor.u32 %v2582, %v2583
      %v2586 = vsel %vm2570, %v2578, %v2585
      %v2587 = vrot.slane %v2582, 4
      %v2589 = vshrl.u32 %v2550, 16
      %v2591 = vrot.slane %v2589, 7
      %v2592 = vshll.u32 %v2550, 16
      %v2594 = vor.u32 %v2591, %v2592
      %v2595 = vrot.slane %v2591, 4
      %v2597 = vshrl.u32 %v2551, 16
      %v2599 = vrot.slane %v2597, 7
      %v2600 = vshll.u32 %v2551, 16
      %v2602 = vor.u32 %v2599, %v2600
      %v2603 = vsel %vm2570, %v2595, %v2602
      %v2604 = vrot.slane %v2599, 4
      %v2606 = vshrl.u32 %v2552, 16
      %v2608 = vrot.slane %v2606, 7
      %v2609 = vshll.u32 %v2552, 16
      %v2611 = vor.u32 %v2608, %v2609
      %v2612 = vrot.slane %v2608, 4
      %v2614 = vshrl.u32 %v2553, 16
      %v2616 = vrot.slane %v2614, 7
      %v2617 = vshll.u32 %v2553, 16
      %v2619 = vor.u32 %v2616, %v2617
      %v2620 = vsel %vm2570, %v2612, %v2619
      %v2621 = vrot.slane %v2616, 4
      %v2623 = vshrl.u32 %v2554, 16
      %v2625 = vrot.slane %v2623, 7
      %v2626 = vshll.u32 %v2554, 16
      %v2628 = vor.u32 %v2625, %v2626
      %v2629 = vrot.slane %v2625, 4
      %v2631 = vshrl.u32 %v2555, 16
      %v2633 = vrot.slane %v2631, 7
      %v2634 = vshll.u32 %v2555, 16
      %v2636 = vor.u32 %v2633, %v2634
      %v2637 = vsel %vm2570, %v2629, %v2636
      %v2638 = vrot.slane %v2633, 4
      %v2640 = vshrl.u32 %v2556, 16
      %v2642 = vrot.slane %v2640, 7
      %v2643 = vshll.u32 %v2556, 16
      %v2645 = vor.u32 %v2642, %v2643
      %v2646 = vrot.slane %v2642, 4
      %v2648 = vshrl.u32 %v2557, 16
      %v2650 = vrot.slane %v2648, 7
      %v2651 = vshll.u32 %v2557, 16
      %v2653 = vor.u32 %v2650, %v2651
      %v2654 = vsel %vm2570, %v2646, %v2653
      %v2655 = vrot.slane %v2650, 4
      %v2657 = vshrl.u32 %v2558, 16
      %v2659 = vrot.slane %v2657, 7
      %v2660 = vshll.u32 %v2558, 16
      %v2662 = vor.u32 %v2659, %v2660
      %v2663 = vrot.slane %v2659, 4
      %v2665 = vshrl.u32 %v2559, 16
      %v2667 = vrot.slane %v2665, 7
      %v2668 = vshll.u32 %v2559, 16
      %v2670 = vor.u32 %v2667, %v2668
      %v2671 = vsel %vm2570, %v2663, %v2670
      %v2672 = vrot.slane %v2667, 4
      %v2674 = vshrl.u32 %v2560, 16
      %v2676 = vrot.slane %v2674, 7
      %v2677 = vshll.u32 %v2560, 16
      %v2679 = vor.u32 %v2676, %v2677
      %v2680 = vrot.slane %v2676, 4
      %v2682 = vshrl.u32 %v2561, 16
      %v2684 = vrot.slane %v2682, 7
      %v2685 = vshll.u32 %v2561, 16
      %v2687 = vor.u32 %v2684, %v2685
      %v2688 = vsel %vm2570, %v2680, %v2687
      %v2689 = vrot.slane %v2684, 4
      %v2691 = vshrl.u32 %v2562, 16
      %v2693 = vrot.slane %v2691, 7
      %v2694 = vshll.u32 %v2562, 16
      %v2696 = vor.u32 %v2693, %v2694
      %v2697 = vrot.slane %v2693, 4
      %v2699 = vshrl.u32 %v2563, 16
      %v2701 = vrot.slane %v2699, 7
      %v2702 = vshll.u32 %v2563, 16
      %v2704 = vor.u32 %v2701, %v2702
      %v2705 = vsel %vm2570, %v2697, %v2704
      %v2706 = vrot.slane %v2701, 4
      %v2708 = vshrl.u32 %v2564, 16
      %v2710 = vrot.slane %v2708, 7
      %v2711 = vshll.u32 %v2564, 16
      %v2713 = vor.u32 %v2710, %v2711
      %v2714 = vrot.slane %v2710, 4
      %v2716 = vshrl.u32 %v2565, 16
      %v2718 = vrot.slane %v2716, 7
      %v2719 = vshll.u32 %v2565, 16
      %v2721 = vor.u32 %v2718, %v2719
      %v2722 = vsel %vm2570, %v2714, %v2721
      %v2723 = vrot.slane %v2718, 4
      %v2725 = vshrl.u32 %v2566, 16
      %v2727 = vrot.slane %v2725, 7
      %v2728 = vshll.u32 %v2566, 16
      %v2730 = vor.u32 %v2727, %v2728
      %v2731 = vrot.slane %v2727, 4
      %v2733 = vshrl.u32 %v2567, 16
      %v2735 = vrot.slane %v2733, 7
      %v2736 = vshll.u32 %v2567, 16
      %v2738 = vor.u32 %v2735, %v2736
      %v2739 = vsel %vm2570, %v2731, %v2738
      %v2740 = vrot.slane %v2735, 4
      %vm2771 = vcmask 1043456
      %vm2772 = vsmask.f32 7938
      %vm2773 = vmand %vm2771, %vm2772
      %v2774 = vld [vmem:[#allocation3] sm:$0xf]
      %v2775 = vsel %vm2773, %v2577, %v2774
      %2776 = vst [vmem:[#allocation3] sm:$0xf] %v2775
      %2777 = vst [vmem:[#allocation3 + $0x4] sm:$0xf] %v2586
      %vm2778 = vcmask 1040384
      %vm2779 = vmand %vm2778, %vm2568
      %v2780 = vld [vmem:[#allocation3 + $0x8] sm:$0x1]
      %v2781 = vsel %vm2779, %v2587, %v2780
      %2782 = vst [vmem:[#allocation3 + $0x8] sm:$0x1] %v2781
      %v2783 = vld [vmem:[#allocation3 + $0xc] sm:$0xf]
      %v2784 = vsel %vm2773, %v2594, %v2783
      %2785 = vst [vmem:[#allocation3 + $0xc] sm:$0xf] %v2784
      %2786 = vst [vmem:[#allocation3 + $0x10] sm:$0xf] %v2603
      %v2787 = vld [vmem:[#allocation3 + $0x14] sm:$0x1]
      %v2788 = vsel %vm2779, %v2604, %v2787
      %2789 = vst [vmem:[#allocation3 + $0x14] sm:$0x1] %v2788
      %v2790 = vld [vmem:[#allocation3 + $0x18] sm:$0xf]
      %v2791 = vsel %vm2773, %v2611, %v2790
      %2792 = vst [vmem:[#allocation3 + $0x18] sm:$0xf] %v2791
      %2793 = vst [vmem:[#allocation3 + $0x1c] sm:$0xf] %v2620
      %v2794 = vld [vmem:[#allocation3 + $0x20] sm:$0x1]
      %v2795 = vsel %vm2779, %v2621, %v2794
      %2796 = vst [vmem:[#allocation3 + $0x20] sm:$0x1] %v2795
      %v2797 = vld [vmem:[#allocation3 + $0x24] sm:$0xf]
      %v2798 = vsel %vm2773, %v2628, %v2797
      %2799 = vst [vmem:[#allocation3 + $0x24] sm:$0xf] %v2798
      %2800 = vst [vmem:[#allocation3 + $0x28] sm:$0xf] %v2637
      %v2801 = vld [vmem:[#allocation3 + $0x2c] sm:$0x1]
      %v2802 = vsel %vm2779, %v2638, %v2801
      %2803 = vst [vmem:[#allocation3 + $0x2c] sm:$0x1] %v2802
      %v2804 = vld [vmem:[#allocation3 + $0x30] sm:$0xf]
      %v2805 = vsel %vm2773, %v2645, %v2804
      %2806 = vst [vmem:[#allocation3 + $0x30] sm:$0xf] %v2805
      %2807 = vst [vmem:[#allocation3 + $0x34] sm:$0xf] %v2654
      %v2808 = vld [vmem:[#allocation3 + $0x38] sm:$0x1]
      %v2809 = vsel %vm2779, %v2655, %v2808
      %2810 = vst [vmem:[#allocation3 + $0x38] sm:$0x1] %v2809
      %v2811 = vld [vmem:[#allocation3 + $0x3c] sm:$0xf]
      %v2812 = vsel %vm2773, %v2662, %v2811
      %2813 = vst [vmem:[#allocation3 + $0x3c] sm:$0xf] %v2812
      %2814 = vst [vmem:[#allocation3 + $0x40] sm:$0xf] %v2671
      %v2815 = vld [vmem:[#allocation3 + $0x44] sm:$0x1]
      %v2816 = vsel %vm2779, %v2672, %v2815
      %2817 = vst [vmem:[#allocation3 + $0x44] sm:$0x1] %v2816
      %v2818 = vld [vmem:[#allocation3 + $0x48] sm:$0xf]
      %v2819 = vsel %vm2773, %v2679, %v2818
      %2820 = vst [vmem:[#allocation3 + $0x48] sm:$0xf] %v2819
      %2821 = vst [vmem:[#allocation3 + $0x4c] sm:$0xf] %v2688
      %v2822 = vld [vmem:[#allocation3 + $0x50] sm:$0x1]
      %v2823 = vsel %vm2779, %v2689, %v2822
      %2824 = vst [vmem:[#allocation3 + $0x50] sm:$0x1] %v2823
      %v2825 = vld [vmem:[#allocation3 + $0x54] sm:$0xf]
      %v2826 = vsel %vm2773, %v2696, %v2825
      %2827 = vst [vmem:[#allocation3 + $0x54] sm:$0xf] %v2826
      %2828 = vst [vmem:[#allocation3 + $0x58] sm:$0xf] %v2705
      %v2829 = vld [vmem:[#allocation3 + $0x5c] sm:$0x1]
      %v2830 = vsel %vm2779, %v2706, %v2829
      %2831 = vst [vmem:[#allocation3 + $0x5c] sm:$0x1] %v2830
      %v2832 = vld [vmem:[#allocation3 + $0x60] sm:$0xf]
      %v2833 = vsel %vm2773, %v2713, %v2832
      %2834 = vst [vmem:[#allocation3 + $0x60] sm:$0xf] %v2833
      %2835 = vst [vmem:[#allocation3 + $0x64] sm:$0xf] %v2722
      %v2836 = vld [vmem:[#allocation3 + $0x68] sm:$0x1]
      %v2837 = vsel %vm2779, %v2723, %v2836
      %2838 = vst [vmem:[#allocation3 + $0x68] sm:$0x1] %v2837
      %v2839 = vld [vmem:[#allocation3 + $0x6c] sm:$0xf]
      %v2840 = vsel %vm2773, %v2730, %v2839
      %2841 = vst [vmem:[#allocation3 + $0x6c] sm:$0xf] %v2840
      %2842 = vst [vmem:[#allocation3 + $0x70] sm:$0xf] %v2739
      %v2843 = vld [vmem:[#allocation3 + $0x74] sm:$0x1]
      %v2844 = vsel %vm2779, %v2740, %v2843
      %2845 = vst [vmem:[#allocation3 + $0x74] sm:$0x1] %v2844
      %v2846 = vld [vmem:[#allocation3] sm:$0x1]
      %v2847 = vsel %vm2779, 0, %v2846
      %2848 = vst [vmem:[#allocation3] sm:$0x1] %v2847
      %v2849 = vld [vmem:[#allocation3 + $0xc] sm:$0x1]
      %v2850 = vsel %vm2779, 0, %v2849
      %2851 = vst [vmem:[#allocation3 + $0xc] sm:$0x1] %v2850
      %v2852 = vld [vmem:[#allocation3 + $0x18] sm:$0x1]
      %v2853 = vsel %vm2779, 0, %v2852
      %2854 = vst [vmem:[#allocation3 + $0x18] sm:$0x1] %v2853
      %v2855 = vld [vmem:[#allocation3 + $0x24] sm:$0x1]
      %v2856 = vsel %vm2779, 0, %v2855
      %2857 = vst [vmem:[#allocation3 + $0x24] sm:$0x1] %v2856
      %v2858 = vld [vmem:[#allocation3 + $0x30] sm:$0x1]
      %v2859 = vsel %vm2779, 0, %v2858
      %2860 = vst [vmem:[#allocation3 + $0x30] sm:$0x1] %v2859
      %v2861 = vld [vmem:[#allocation3 + $0x3c] sm:$0x1]
      %v2862 = vsel %vm2779, 0, %v2861
      %2863 = vst [vmem:[#allocation3 + $0x3c] sm:$0x1] %v2862
      %v2864 = vld [vmem:[#allocation3 + $0x48] sm:$0x1]
      %v2865 = vsel %vm2779, 0, %v2864
      %2866 = vst [vmem:[#allocation3 + $0x48] sm:$0x1] %v2865
      %v2867 = vld [vmem:[#allocation3 + $0x54] sm:$0x1]
      %v2868 = vsel %vm2779, 0, %v2867
      %2869 = vst [vmem:[#allocation3 + $0x54] sm:$0x1] %v2868
      %v2870 = vld [vmem:[#allocation3 + $0x60] sm:$0x1]
      %v2871 = vsel %vm2779, 0, %v2870
      %2872 = vst [vmem:[#allocation3 + $0x60] sm:$0x1] %v2871
      %v2873 = vld [vmem:[#allocation3 + $0x6c] sm:$0x1]
      %v2874 = vsel %vm2779, 0, %v2873
      %2875 = vst [vmem:[#allocation3 + $0x6c] sm:$0x1] %v2874
      %vm2876 = vmand %vm2778, %vm2772
      %v2877 = vld [vmem:[#allocation3 + $0x8] sm:$0x1]
      %v2878 = vsel %vm2876, 0, %v2877
      %2879 = vst [vmem:[#allocation3 + $0x8] sm:$0x1] %v2878
      %v2880 = vld [vmem:[#allocation3 + $0x14] sm:$0x1]
      %v2881 = vsel %vm2876, 0, %v2880
      %2882 = vst [vmem:[#allocation3 + $0x14] sm:$0x1] %v2881
      %v2883 = vld [vmem:[#allocation3 + $0x20] sm:$0x1]
      %v2884 = vsel %vm2876, 0, %v2883
      %2885 = vst [vmem:[#allocation3 + $0x20] sm:$0x1] %v2884
      %v2886 = vld [vmem:[#allocation3 + $0x2c] sm:$0x1]
      %v2887 = vsel %vm2876, 0, %v2886
      %2888 = vst [vmem:[#allocation3 + $0x2c] sm:$0x1] %v2887
      %v2889 = vld [vmem:[#allocation3 + $0x38] sm:$0x1]
      %v2890 = vsel %vm2876, 0, %v2889
      %2891 = vst [vmem:[#allocation3 + $0x38] sm:$0x1] %v2890
      %v2892 = vld [vmem:[#allocation3 + $0x44] sm:$0x1]
      %v2893 = vsel %vm2876, 0, %v2892
      %2894 = vst [vmem:[#allocation3 + $0x44] sm:$0x1] %v2893
      %v2895 = vld [vmem:[#allocation3 + $0x50] sm:$0x1]
      %v2896 = vsel %vm2876, 0, %v2895
      %2897 = vst [vmem:[#allocation3 + $0x50] sm:$0x1] %v2896
      %v2898 = vld [vmem:[#allocation3 + $0x5c] sm:$0x1]
      %v2899 = vsel %vm2876, 0, %v2898
      %2900 = vst [vmem:[#allocation3 + $0x5c] sm:$0x1] %v2899
      %v2901 = vld [vmem:[#allocation3 + $0x68] sm:$0x1]
      %v2902 = vsel %vm2876, 0, %v2901
      %2903 = vst [vmem:[#allocation3 + $0x68] sm:$0x1] %v2902
      %v2904 = vld [vmem:[#allocation3 + $0x74] sm:$0x1]
      %v2905 = vsel %vm2876, 0, %v2904
      %2906 = vst [vmem:[#allocation3 + $0x74] sm:$0x1] %v2905
      // Predicated region
      $region119: #{residual_conv_unit.1} parent=35 // pred_check
        %p2907 = pneg %p217
      $region120: #{residual_conv_unit.1} parent=35 // pred_check_branch
        %2909 = sbr.rel (%p2907) target = $region122
      $region121: #{residual_conv_unit.1} parent=35 // pred_region
        %2910 = vst [vmem:[#allocation3] sm:$0xf] 0
        %2911 = vst [vmem:[#allocation3 + $0x4] sm:$0xf] 0
        %2912 = vst [vmem:[#allocation3 + $0x8] sm:$0x1] 0
      $region122: #{residual_conv_unit.1} parent=35 // pred_fallthru
        _
      %p2913 = scmp.eq.s32.totalorder %s21, 2
      // Predicated region
      $region123: #{residual_conv_unit.1} parent=35 // pred_check
        %p2914 = pneg %p2913
      $region124: #{residual_conv_unit.1} parent=35 // pred_check_branch
        %2916 = sbr.rel (%p2914) target = $region126
      $region125: #{residual_conv_unit.1} parent=35 // pred_region
        %s2917 = scalar_lea.vmem [#allocation3], 60
        %2918 = vst [vmem:[%s2917] sm:$0xf] 0
        %2919 = vst [vmem:[%s2917 + $0x4] sm:$0xf] 0
        %2920 = vst [vmem:[%s2917 + $0x8] sm:$0x1] 0
        %2921 = vst [vmem:[%s2917 + $0xc] sm:$0xf] 0
        %2922 = vst [vmem:[%s2917 + $0x10] sm:$0xf] 0
        %2923 = vst [vmem:[%s2917 + $0x14] sm:$0x1] 0
        %2924 = vst [vmem:[%s2917 + $0x18] sm:$0xf] 0
        %2925 = vst [vmem:[%s2917 + $0x1c] sm:$0xf] 0
        %2926 = vst [vmem:[%s2917 + $0x20] sm:$0x1] 0
        %2927 = vst [vmem:[%s2917 + $0x24] sm:$0xf] 0
        %2928 = vst [vmem:[%s2917 + $0x28] sm:$0xf] 0
        %2929 = vst [vmem:[%s2917 + $0x2c] sm:$0x1] 0
        %2930 = vst [vmem:[%s2917 + $0x30] sm:$0xf] 0
        %2931 = vst [vmem:[%s2917 + $0x34] sm:$0xf] 0
        %2932 = vst [vmem:[%s2917 + $0x38] sm:$0x1] 0
      $region126: #{residual_conv_unit.1} parent=35 // pred_fallthru
        _
      %v2933 = vld [vmem:[#allocation3] sm:$0xf]
      %v2934 = vld [vmem:[#allocation3 + $0x4] sm:$0xf]
      %v2935 = vld [vmem:[#allocation3 + $0xc] sm:$0xf]
      %v2936 = vld [vmem:[#allocation3 + $0x10] sm:$0xf]
      %v2937 = vld [vmem:[#allocation3 + $0x18] sm:$0xf]
      %v2938 = vld [vmem:[#allocation3 + $0x1c] sm:$0xf]
      %v2939 = vld [vmem:[#allocation3 + $0x24] sm:$0xf]
      %v2940 = vld [vmem:[#allocation3 + $0x28] sm:$0xf]
      %v2941 = vld [vmem:[#allocation3 + $0x30] sm:$0xf]
      %v2942 = vld [vmem:[#allocation3 + $0x34] sm:$0xf]
      %v2943 = vld [vmem:[#allocation3 + $0x3c] sm:$0xf]
      %v2944 = vld [vmem:[#allocation3 + $0x40] sm:$0xf]
      %v2945 = vld [vmem:[#allocation3 + $0x48] sm:$0xf]
      %v2946 = vld [vmem:[#allocation3 + $0x4c] sm:$0xf]
      %v2947 = vld [vmem:[#allocation3 + $0x54] sm:$0xf]
      %v2948 = vld [vmem:[#allocation3 + $0x58] sm:$0xf]
      %v2949 = vld [vmem:[#allocation3 + $0x60] sm:$0xf]
      %v2950 = vld [vmem:[#allocation3 + $0x64] sm:$0xf]
      %v2951 = vld [vmem:[#allocation3 + $0x6c] sm:$0xf]
      %v2952 = vld [vmem:[#allocation3 + $0x70] sm:$0xf]
      %v2953 = vld [vmem:[%s3] sm:$0xf]
      %v2954 = vld [vmem:[%s3 + $0x4] sm:$0xf]
      %v2955 = vld [vmem:[%s3 + $0x8] sm:$0xf]
      %v2956 = vld [vmem:[%s3 + $0xc] sm:$0xf]
      %v2957 = vld [vmem:[%s3 + $0x10] sm:$0xf]
      %v2958 = vld [vmem:[%s3 + $0x14] sm:$0xf]
      %v2959 = vld [vmem:[%s3 + $0x18] sm:$0xf]
      %v2960 = vld [vmem:[%s3 + $0x1c] sm:$0xf]
      %v2961 = vld [vmem:[%s3 + $0x20] sm:$0xf]
      %v2962 = vld [vmem:[%s3 + $0x24] sm:$0xf]
      %v2963 = vld [vmem:[%s3 + $0x28] sm:$0xf]
      %v2964 = vld [vmem:[%s3 + $0x2c] sm:$0xf]
      %v2965 = vld [vmem:[%s3 + $0x30] sm:$0xf]
      %v2966 = vld [vmem:[%s3 + $0x34] sm:$0xf]
      %v2967 = vld [vmem:[%s3 + $0x38] sm:$0xf]
      %v2968 = vld [vmem:[%s3 + $0x3c] sm:$0xf]
      %s2969 = scalar_lea.vmem %s3, 192
      %v2970 = vld [vmem:[%s2969] sm:$0xf]
      %v2971 = vld [vmem:[%s2969 + $0x4] sm:$0xf]
      %v2972 = vld [vmem:[%s2969 + $0x8] sm:$0xf]
      %v2973 = vld [vmem:[%s2969 + $0xc] sm:$0xf]
      %v2974 = vld [vmem:[%s2969 + $0x10] sm:$0xf]
      %v2975 = vld [vmem:[%s2969 + $0x14] sm:$0xf]
      %v2976 = vld [vmem:[%s2969 + $0x18] sm:$0xf]
      %v2977 = vld [vmem:[%s2969 + $0x1c] sm:$0xf]
      %v2978 = vld [vmem:[%s2969 + $0x20] sm:$0xf]
      %v2979 = vld [vmem:[%s2969 + $0x24] sm:$0xf]
      %v2980 = vld [vmem:[%s2969 + $0x28] sm:$0xf]
      %v2981 = vld [vmem:[%s2969 + $0x2c] sm:$0xf]
      %v2982 = vld [vmem:[%s2969 + $0x30] sm:$0xf]
      %v2983 = vld [vmem:[%s2969 + $0x34] sm:$0xf]
      %v2984 = vld [vmem:[%s2969 + $0x38] sm:$0xf]
      %v2985 = vld [vmem:[%s2969 + $0x3c] sm:$0xf]
      %v3002 = vunpack.c.l.b16 %v2935
      %v3003 = vunpack.c.l.b16 %v2936
      %v3004 = vunpack.c.l.b16 %v2937
      %v3005 = vunpack.c.l.b16 %v2938
      %v3006 = vunpack.c.l.b16 %v2939
      %v3007 = vunpack.c.l.b16 %v2940
      %v3008 = vunpack.c.l.b16 %v2941
      %v3009 = vunpack.c.l.b16 %v2942
      %v3010 = vunpack.c.l.b16 %v2943
      %v3011 = vunpack.c.l.b16 %v2944
      %v3012 = vunpack.c.l.b16 %v2945
      %v3013 = vunpack.c.l.b16 %v2946
      %v3014 = vunpack.c.l.b16 %v2947
      %v3015 = vunpack.c.l.b16 %v2948
      %v3016 = vunpack.c.l.b16 %v2949
      %v3017 = vunpack.c.l.b16 %v2950
      %v3018 = vpack.c.b16 %v3003, %v3002
      %v3019 = vpack.c.b16 %v3005, %v3004
      %v3020 = vpack.c.b16 %v3007, %v3006
      %v3021 = vpack.c.b16 %v3009, %v3008
      %v3022 = vpack.c.b16 %v3011, %v3010
      %v3023 = vpack.c.b16 %v3013, %v3012
      %v3024 = vpack.c.b16 %v3015, %v3014
      %v3025 = vpack.c.b16 %v3017, %v3016
      %v3050 = vunpack.c.l.b16 %v2970
      %v3051 = vunpack.c.l.b16 %v2971
      %v3052 = vunpack.c.l.b16 %v2972
      %v3053 = vunpack.c.l.b16 %v2973
      %v3054 = vunpack.c.l.b16 %v2974
      %v3055 = vunpack.c.l.b16 %v2975
      %v3056 = vunpack.c.l.b16 %v2976
      %v3057 = vunpack.c.l.b16 %v2977
      %v3058 = vunpack.c.l.b16 %v2978
      %v3059 = vunpack.c.l.b16 %v2979
      %v3060 = vunpack.c.l.b16 %v2980
      %v3061 = vunpack.c.l.b16 %v2981
      %v3062 = vunpack.c.l.b16 %v2982
      %v3063 = vunpack.c.l.b16 %v2983
      %v3064 = vunpack.c.l.b16 %v2984
      %v3065 = vunpack.c.l.b16 %v2985
      %v3066 = vpack.c.b16 %v3051, %v3050
      %v3067 = vpack.c.b16 %v3053, %v3052
      %v3068 = vpack.c.b16 %v3055, %v3054
      %v3069 = vpack.c.b16 %v3057, %v3056
      %v3070 = vpack.c.b16 %v3059, %v3058
      %v3071 = vpack.c.b16 %v3061, %v3060
      %v3072 = vpack.c.b16 %v3063, %v3062
      %v3073 = vpack.c.b16 %v3065, %v3064
      %3082 = vmatprep.subr.bf16.mxu0 0
      %3083 = vmatpush1.bf16.msra.mxu0 %v3073
      %3084 = vmatprep.subr.bf16.mxu0 0
      %3085 = vmatpush1.bf16.msra.mxu0 %v3072
      %3086 = vmatprep.subr.bf16.mxu0 0
      %3087 = vmatpush1.bf16.msra.mxu0 %v3071
      %3088 = vmatprep.subr.bf16.mxu0 0
      %3089 = vmatpush1.bf16.msra.mxu0 %v3070
      %3090 = vmatprep.subr.bf16.mxu0 0
      %3091 = vmatpush1.bf16.msra.mxu0 %v3069
      %3092 = vmatprep.subr.bf16.mxu0 0
      %3093 = vmatpush1.bf16.msra.mxu0 %v3068
      %3094 = vmatprep.subr.bf16.mxu0 0
      %3095 = vmatpush1.bf16.msra.mxu0 %v3067
      %3096 = vmatprep.subr.bf16.mxu0 0
      %3097 = vmatpush1.bf16.msra.mxu0 %v3066
      %3098 = vmatprep.subr.bf16.mxu0 0
      %3099 = vmatpush2.bf16.msra.mxu0 0
      %3100 = vmatprep.subr.bf16.mxu0 0
      %3101 = vmatpush2.bf16.msra.mxu0 0
      %3102 = vmatprep.subr.bf16.mxu0 0
      %3103 = vmatpush2.bf16.msra.mxu0 0
      %3104 = vmatprep.subr.bf16.mxu0 0
      %3105 = vmatpush2.bf16.msra.mxu0 0
      %3106 = vmatprep.subr.bf16.mxu0 0
      %3107 = vmatpush2.bf16.msra.mxu0 0
      %3108 = vmatprep.subr.bf16.mxu0 0
      %3109 = vmatpush2.bf16.msra.mxu0 0
      %3110 = vmatprep.subr.bf16.mxu0 0
      %3111 = vmatpush2.bf16.msra.mxu0 0
      %3112 = vmatprep.subr.bf16.mxu0 0
      %3113 = vmatpush2.bf16.msra.mxu0 0
      %3114 = vmatprep.mubr.bf16.mxu0 0
      %3115 = vmatmul.mubr.bf16.gmra.mxu0 %v3018
      %v3116 = vpop.f32.mrf.mxu0
      %v3117 = vadd.f32 0.0, %v3116
      %v3118 = vpop.f32.mrf.mxu0
      %v3119 = vpop.f32.mrf.mxu0
      %v3120 = vadd.f32 0.0, %v3119
      %v3121 = vpop.f32.mrf.mxu0
      %3122 = vmatprep.mubr.bf16.mxu0 0
      %3123 = vmatmul.mubr.bf16.gmra.mxu0 %v3019
      %v3124 = vpop.f32.mrf.mxu0
      %v3125 = vadd.f32 0.0, %v3124
      %v3126 = vpop.f32.mrf.mxu0
      %v3127 = vpop.f32.mrf.mxu0
      %v3128 = vadd.f32 0.0, %v3127
      %v3129 = vpop.f32.mrf.mxu0
      %3130 = vmatprep.mubr.bf16.mxu0 0
      %3131 = vmatmul.mubr.bf16.gmra.mxu0 %v3020
      %v3132 = vpop.f32.mrf.mxu0
      %v3133 = vadd.f32 0.0, %v3132
      %v3134 = vpop.f32.mrf.mxu0
      %v3135 = vpop.f32.mrf.mxu0
      %v3136 = vadd.f32 0.0, %v3135
      %v3137 = vpop.f32.mrf.mxu0
      %3138 = vmatprep.mubr.bf16.mxu0 0
      %3139 = vmatmul.mubr.bf16.gmra.mxu0 %v3021
      %v3140 = vpop.f32.mrf.mxu0
      %v3141 = vadd.f32 0.0, %v3140
      %v3142 = vpop.f32.mrf.mxu0
      %v3143 = vpop.f32.mrf.mxu0
      %v3144 = vadd.f32 0.0, %v3143
      %v3145 = vpop.f32.mrf.mxu0
      %3146 = vmatprep.mubr.bf16.mxu0 0
      %3147 = vmatmul.mubr.bf16.gmra.mxu0 %v3022
      %v3148 = vpop.f32.mrf.mxu0
      %v3149 = vadd.f32 0.0, %v3148
      %v3150 = vpop.f32.mrf.mxu0
      %v3151 = vpop.f32.mrf.mxu0
      %v3152 = vadd.f32 0.0, %v3151
      %v3153 = vpop.f32.mrf.mxu0
      %3154 = vmatprep.mubr.bf16.mxu0 0
      %3155 = vmatmul.mubr.bf16.gmra.mxu0 %v3023
      %v3156 = vpop.f32.mrf.mxu0
      %v3157 = vadd.f32 0.0, %v3156
      %v3158 = vpop.f32.mrf.mxu0
      %v3159 = vpop.f32.mrf.mxu0
      %v3160 = vadd.f32 0.0, %v3159
      %v3161 = vpop.f32.mrf.mxu0
      %3162 = vmatprep.mubr.bf16.mxu0 0
      %3163 = vmatmul.mubr.bf16.gmra.mxu0 %v3024
      %v3164 = vpop.f32.mrf.mxu0
      %v3165 = vadd.f32 0.0, %v3164
      %v3166 = vpop.f32.mrf.mxu0
      %v3167 = vpop.f32.mrf.mxu0
      %v3168 = vadd.f32 0.0, %v3167
      %v3169 = vpop.f32.mrf.mxu0
      %3170 = vmatprep.mubr.bf16.mxu0 0
      %3171 = vmatmul.mubr.bf16.gmra.mxu0 %v3025
      %v3172 = vpop.f32.mrf.mxu0
      %v3173 = vadd.f32 0.0, %v3172
      %v3174 = vpop.f32.mrf.mxu0
      %v3175 = vpop.f32.mrf.mxu0
      %v3176 = vadd.f32 0.0, %v3175
      %v3177 = vpop.f32.mrf.mxu0
      %3178 = vdwg.mxu0
      %v3181 = vunpack.c.l.b16 %v2933
      %v3182 = vunpack.c.l.b16 %v2934
      %v3183 = vpack.c.b16 %v3182, %v3181
      %v3201 = vunpack.c.l.b16 %v2953
      %v3202 = vunpack.c.l.b16 %v2954
      %v3203 = vunpack.c.l.b16 %v2955
      %v3204 = vunpack.c.l.b16 %v2956
      %v3205 = vunpack.c.l.b16 %v2957
      %v3206 = vunpack.c.l.b16 %v2958
      %v3207 = vunpack.c.l.b16 %v2959
      %v3208 = vunpack.c.l.b16 %v2960
      %v3209 = vunpack.c.l.b16 %v2961
      %v3210 = vunpack.c.l.b16 %v2962
      %v3211 = vunpack.c.l.b16 %v2963
      %v3212 = vunpack.c.l.b16 %v2964
      %v3213 = vunpack.c.l.b16 %v2965
      %v3214 = vunpack.c.l.b16 %v2966
      %v3215 = vunpack.c.l.b16 %v2967
      %v3216 = vunpack.c.l.b16 %v2968
      %v3217 = vpack.c.b16 %v3202, %v3201
      %v3218 = vpack.c.b16 %v3204, %v3203
      %v3219 = vpack.c.b16 %v3206, %v3205
      %v3220 = vpack.c.b16 %v3208, %v3207
      %v3221 = vpack.c.b16 %v3210, %v3209
      %v3222 = vpack.c.b16 %v3212, %v3211
      %v3223 = vpack.c.b16 %v3214, %v3213
      %v3224 = vpack.c.b16 %v3216, %v3215
      %3233 = vmatprep.subr.bf16.mxu0 0
      %3234 = vmatpush1.bf16.msra.mxu0 %v3224
      %3235 = vmatprep.subr.bf16.mxu0 0
      %3236 = vmatpush1.bf16.msra.mxu0 %v3223
      %3237 = vmatprep.subr.bf16.mxu0 0
      %3238 = vmatpush1.bf16.msra.mxu0 %v3222
      %3239 = vmatprep.subr.bf16.mxu0 0
      %3240 = vmatpush1.bf16.msra.mxu0 %v3221
      %3241 = vmatprep.subr.bf16.mxu0 0
      %3242 = vmatpush1.bf16.msra.mxu0 %v3220
      %3243 = vmatprep.subr.bf16.mxu0 0
      %3244 = vmatpush1.bf16.msra.mxu0 %v3219
      %3245 = vmatprep.subr.bf16.mxu0 0
      %3246 = vmatpush1.bf16.msra.mxu0 %v3218
      %3247 = vmatprep.subr.bf16.mxu0 0
      %3248 = vmatpush1.bf16.msra.mxu0 %v3217
      %3249 = vmatprep.subr.bf16.mxu0 0
      %3250 = vmatpush2.bf16.msra.mxu0 0
      %3251 = vmatprep.subr.bf16.mxu0 0
      %3252 = vmatpush2.bf16.msra.mxu0 0
      %3253 = vmatprep.subr.bf16.mxu0 0
      %3254 = vmatpush2.bf16.msra.mxu0 0
      %3255 = vmatprep.subr.bf16.mxu0 0
      %3256 = vmatpush2.bf16.msra.mxu0 0
      %3257 = vmatprep.subr.bf16.mxu0 0
      %3258 = vmatpush2.bf16.msra.mxu0 0
      %3259 = vmatprep.subr.bf16.mxu0 0
      %3260 = vmatpush2.bf16.msra.mxu0 0
      %3261 = vmatprep.subr.bf16.mxu0 0
      %3262 = vmatpush2.bf16.msra.mxu0 0
      %3263 = vmatprep.subr.bf16.mxu0 0
      %3264 = vmatpush2.bf16.msra.mxu0 0
      %3265 = vmatprep.mubr.bf16.mxu0 0
      %3266 = vmatmul.mubr.bf16.gmra.mxu0 %v3183
      %v3267 = vpop.f32.mrf.mxu0
      %v3268 = vadd.f32 %v3117, %v3267
      %v3269 = vpop.f32.mrf.mxu0
      %v3270 = vpop.f32.mrf.mxu0
      %v3271 = vadd.f32 %v3120, %v3270
      %v3272 = vpop.f32.mrf.mxu0
      %3273 = vmatprep.mubr.bf16.mxu0 0
      %3274 = vmatmul.mubr.bf16.gmra.mxu0 %v3018
      %v3275 = vpop.f32.mrf.mxu0
      %v3276 = vadd.f32 %v3125, %v3275
      %v3277 = vpop.f32.mrf.mxu0
      %v3278 = vpop.f32.mrf.mxu0
      %v3279 = vadd.f32 %v3128, %v3278
      %v3280 = vpop.f32.mrf.mxu0
      %3281 = vmatprep.mubr.bf16.mxu0 0
      %3282 = vmatmul.mubr.bf16.gmra.mxu0 %v3019
      %v3283 = vpop.f32.mrf.mxu0
      %v3284 = vadd.f32 %v3133, %v3283
      %v3285 = vpop.f32.mrf.mxu0
      %v3286 = vpop.f32.mrf.mxu0
      %v3287 = vadd.f32 %v3136, %v3286
      %v3288 = vpop.f32.mrf.mxu0
      %3289 = vmatprep.mubr.bf16.mxu0 0
      %3290 = vmatmul.mubr.bf16.gmra.mxu0 %v3020
      %v3291 = vpop.f32.mrf.mxu0
      %v3292 = vadd.f32 %v3141, %v3291
      %v3293 = vpop.f32.mrf.mxu0
      %v3294 = vpop.f32.mrf.mxu0
      %v3295 = vadd.f32 %v3144, %v3294
      %v3296 = vpop.f32.mrf.mxu0
      %3297 = vmatprep.mubr.bf16.mxu0 0
      %3298 = vmatmul.mubr.bf16.gmra.mxu0 %v3021
      %v3299 = vpop.f32.mrf.mxu0
      %v3300 = vadd.f32 %v3149, %v3299
      %v3301 = vpop.f32.mrf.mxu0
      %v3302 = vpop.f32.mrf.mxu0
      %v3303 = vadd.f32 %v3152, %v3302
      %v3304 = vpop.f32.mrf.mxu0
      %3305 = vmatprep.mubr.bf16.mxu0 0
      %3306 = vmatmul.mubr.bf16.gmra.mxu0 %v3022
      %v3307 = vpop.f32.mrf.mxu0
      %v3308 = vadd.f32 %v3157, %v3307
      %v3309 = vpop.f32.mrf.mxu0
      %v3310 = vpop.f32.mrf.mxu0
      %v3311 = vadd.f32 %v3160, %v3310
      %v3312 = vpop.f32.mrf.mxu0
      %3313 = vmatprep.mubr.bf16.mxu0 0
      %3314 = vmatmul.mubr.bf16.gmra.mxu0 %v3023
      %v3315 = vpop.f32.mrf.mxu0
      %v3316 = vadd.f32 %v3165, %v3315
      %v3317 = vpop.f32.mrf.mxu0
      %v3318 = vpop.f32.mrf.mxu0
      %v3319 = vadd.f32 %v3168, %v3318
      %v3320 = vpop.f32.mrf.mxu0
      %3321 = vmatprep.mubr.bf16.mxu0 0
      %3322 = vmatmul.mubr.bf16.gmra.mxu0 %v3024
      %v3323 = vpop.f32.mrf.mxu0
      %v3324 = vadd.f32 %v3173, %v3323
      %v3325 = vpop.f32.mrf.mxu0
      %v3326 = vpop.f32.mrf.mxu0
      %v3327 = vadd.f32 %v3176, %v3326
      %v3328 = vpop.f32.mrf.mxu0
      %3329 = vdwg.mxu0
      %s3330 = scalar_lea.vmem %s3, 384
      %v3331 = vld [vmem:[%s3330] sm:$0xf]
      %v3332 = vld [vmem:[%s3330 + $0x4] sm:$0xf]
      %v3333 = vld [vmem:[%s3330 + $0x8] sm:$0xf]
      %v3334 = vld [vmem:[%s3330 + $0xc] sm:$0xf]
      %v3335 = vld [vmem:[%s3330 + $0x10] sm:$0xf]
      %v3336 = vld [vmem:[%s3330 + $0x14] sm:$0xf]
      %v3337 = vld [vmem:[%s3330 + $0x18] sm:$0xf]
      %v3338 = vld [vmem:[%s3330 + $0x1c] sm:$0xf]
      %v3339 = vld [vmem:[%s3330 + $0x20] sm:$0xf]
      %v3340 = vld [vmem:[%s3330 + $0x24] sm:$0xf]
      %v3341 = vld [vmem:[%s3330 + $0x28] sm:$0xf]
      %v3342 = vld [vmem:[%s3330 + $0x2c] sm:$0xf]
      %v3343 = vld [vmem:[%s3330 + $0x30] sm:$0xf]
      %v3344 = vld [vmem:[%s3330 + $0x34] sm:$0xf]
      %v3345 = vld [vmem:[%s3330 + $0x38] sm:$0xf]
      %v3346 = vld [vmem:[%s3330 + $0x3c] sm:$0xf]
      %v3349 = vunpack.c.l.b16 %v2951
      %v3350 = vunpack.c.l.b16 %v2952
      %v3351 = vpack.c.b16 %v3350, %v3349
      %v3369 = vunpack.c.l.b16 %v3331
      %v3370 = vunpack.c.l.b16 %v3332
      %v3371 = vunpack.c.l.b16 %v3333
      %v3372 = vunpack.c.l.b16 %v3334
      %v3373 = vunpack.c.l.b16 %v3335
      %v3374 = vunpack.c.l.b16 %v3336
      %v3375 = vunpack.c.l.b16 %v3337
      %v3376 = vunpack.c.l.b16 %v3338
      %v3377 = vunpack.c.l.b16 %v3339
      %v3378 = vunpack.c.l.b16 %v3340
      %v3379 = vunpack.c.l.b16 %v3341
      %v3380 = vunpack.c.l.b16 %v3342
      %v3381 = vunpack.c.l.b16 %v3343
      %v3382 = vunpack.c.l.b16 %v3344
      %v3383 = vunpack.c.l.b16 %v3345
      %v3384 = vunpack.c.l.b16 %v3346
      %v3385 = vpack.c.b16 %v3370, %v3369
      %v3386 = vpack.c.b16 %v3372, %v3371
      %v3387 = vpack.c.b16 %v3374, %v3373
      %v3388 = vpack.c.b16 %v3376, %v3375
      %v3389 = vpack.c.b16 %v3378, %v3377
      %v3390 = vpack.c.b16 %v3380, %v3379
      %v3391 = vpack.c.b16 %v3382, %v3381
      %v3392 = vpack.c.b16 %v3384, %v3383
      %3401 = vmatprep.subr.bf16.mxu0 0
      %3402 = vmatpush1.bf16.msra.mxu0 %v3392
      %3403 = vmatprep.subr.bf16.mxu0 0
      %3404 = vmatpush1.bf16.msra.mxu0 %v3391
      %3405 = vmatprep.subr.bf16.mxu0 0
      %3406 = vmatpush1.bf16.msra.mxu0 %v3390
      %3407 = vmatprep.subr.bf16.mxu0 0
      %3408 = vmatpush1.bf16.msra.mxu0 %v3389
      %3409 = vmatprep.subr.bf16.mxu0 0
      %3410 = vmatpush1.bf16.msra.mxu0 %v3388
      %3411 = vmatprep.subr.bf16.mxu0 0
      %3412 = vmatpush1.bf16.msra.mxu0 %v3387
      %3413 = vmatprep.subr.bf16.mxu0 0
      %3414 = vmatpush1.bf16.msra.mxu0 %v3386
      %3415 = vmatprep.subr.bf16.mxu0 0
      %3416 = vmatpush1.bf16.msra.mxu0 %v3385
      %3417 = vmatprep.subr.bf16.mxu0 0
      %3418 = vmatpush2.bf16.msra.mxu0 0
      %3419 = vmatprep.subr.bf16.mxu0 0
      %3420 = vmatpush2.bf16.msra.mxu0 0
      %3421 = vmatprep.subr.bf16.mxu0 0
      %3422 = vmatpush2.bf16.msra.mxu0 0
      %3423 = vmatprep.subr.bf16.mxu0 0
      %3424 = vmatpush2.bf16.msra.mxu0 0
      %3425 = vmatprep.subr.bf16.mxu0 0
      %3426 = vmatpush2.bf16.msra.mxu0 0
      %3427 = vmatprep.subr.bf16.mxu0 0
      %3428 = vmatpush2.bf16.msra.mxu0 0
      %3429 = vmatprep.subr.bf16.mxu0 0
      %3430 = vmatpush2.bf16.msra.mxu0 0
      %3431 = vmatprep.subr.bf16.mxu0 0
      %3432 = vmatpush2.bf16.msra.mxu0 0
      %3433 = vmatprep.mubr.bf16.mxu0 0
      %3434 = vmatmul.mubr.bf16.gmra.mxu0 %v3019
      %v3435 = vpop.f32.mrf.mxu0
      %v3436 = vadd.f32 0.0, %v3435
      %v3437 = vpop.f32.mrf.mxu0
      %v3438 = vpop.f32.mrf.mxu0
      %v3439 = vadd.f32 0.0, %v3438
      %v3440 = vpop.f32.mrf.mxu0
      %3441 = vmatprep.mubr.bf16.mxu0 0
      %3442 = vmatmul.mubr.bf16.gmra.mxu0 %v3020
      %v3443 = vpop.f32.mrf.mxu0
      %v3444 = vadd.f32 0.0, %v3443
      %v3445 = vpop.f32.mrf.mxu0
      %v3446 = vpop.f32.mrf.mxu0
      %v3447 = vadd.f32 0.0, %v3446
      %v3448 = vpop.f32.mrf.mxu0
      %3449 = vmatprep.mubr.bf16.mxu0 0
      %3450 = vmatmul.mubr.bf16.gmra.mxu0 %v3021
      %v3451 = vpop.f32.mrf.mxu0
      %v3452 = vadd.f32 0.0, %v3451
      %v3453 = vpop.f32.mrf.mxu0
      %v3454 = vpop.f32.mrf.mxu0
      %v3455 = vadd.f32 0.0, %v3454
      %v3456 = vpop.f32.mrf.mxu0
      %3457 = vmatprep.mubr.bf16.mxu0 0
      %3458 = vmatmul.mubr.bf16.gmra.mxu0 %v3022
      %v3459 = vpop.f32.mrf.mxu0
      %v3460 = vadd.f32 0.0, %v3459
      %v3461 = vpop.f32.mrf.mxu0
      %v3462 = vpop.f32.mrf.mxu0
      %v3463 = vadd.f32 0.0, %v3462
      %v3464 = vpop.f32.mrf.mxu0
      %3465 = vmatprep.mubr.bf16.mxu0 0
      %3466 = vmatmul.mubr.bf16.gmra.mxu0 %v3023
      %v3467 = vpop.f32.mrf.mxu0
      %v3468 = vadd.f32 0.0, %v3467
      %v3469 = vpop.f32.mrf.mxu0
      %v3470 = vpop.f32.mrf.mxu0
      %v3471 = vadd.f32 0.0, %v3470
      %v3472 = vpop.f32.mrf.mxu0
      %3473 = vmatprep.mubr.bf16.mxu0 0
      %3474 = vmatmul.mubr.bf16.gmra.mxu0 %v3024
      %v3475 = vpop.f32.mrf.mxu0
      %v3476 = vadd.f32 0.0, %v3475
      %v3477 = vpop.f32.mrf.mxu0
      %v3478 = vpop.f32.mrf.mxu0
      %v3479 = vadd.f32 0.0, %v3478
      %v3480 = vpop.f32.mrf.mxu0
      %3481 = vmatprep.mubr.bf16.mxu0 0
      %3482 = vmatmul.mubr.bf16.gmra.mxu0 %v3025
      %v3483 = vpop.f32.mrf.mxu0
      %v3484 = vadd.f32 0.0, %v3483
      %v3485 = vpop.f32.mrf.mxu0
      %v3486 = vpop.f32.mrf.mxu0
      %v3487 = vadd.f32 0.0, %v3486
      %v3488 = vpop.f32.mrf.mxu0
      %3489 = vmatprep.mubr.bf16.mxu0 0
      %3490 = vmatmul.mubr.bf16.gmra.mxu0 %v3351
      %v3491 = vpop.f32.mrf.mxu0
      %v3492 = vadd.f32 0.0, %v3491
      %v3493 = vpop.f32.mrf.mxu0
      %v3494 = vpop.f32.mrf.mxu0
      %v3495 = vadd.f32 0.0, %v3494
      %v3496 = vpop.f32.mrf.mxu0
      %3497 = vdwg.mxu0
      %v3498 = vadd.f32 %v3268, %v3436
      %v3499 = vadd.f32 %v3271, %v3439
      %v3500 = vadd.f32 %v3276, %v3444
      %v3501 = vadd.f32 %v3279, %v3447
      %v3502 = vadd.f32 %v3284, %v3452
      %v3503 = vadd.f32 %v3287, %v3455
      %v3504 = vadd.f32 %v3292, %v3460
      %v3505 = vadd.f32 %v3295, %v3463
      %v3506 = vadd.f32 %v3300, %v3468
      %v3507 = vadd.f32 %v3303, %v3471
      %v3508 = vadd.f32 %v3308, %v3476
      %v3509 = vadd.f32 %v3311, %v3479
      %v3510 = vadd.f32 %v3316, %v3484
      %v3511 = vadd.f32 %v3319, %v3487
      %v3512 = vadd.f32 %v3324, %v3492
      %v3513 = vadd.f32 %v3327, %v3495
      %v3514 = vld [vmem:[#allocation3] sm:$0xf]
      %v3515 = vld [vmem:[#allocation3 + $0x4] sm:$0xf]
      %v3516 = vld [vmem:[#allocation3 + $0x8] sm:$0x1]
      %v3517 = vld [vmem:[#allocation3 + $0xc] sm:$0xf]
      %v3518 = vld [vmem:[#allocation3 + $0x10] sm:$0xf]
      %v3519 = vld [vmem:[#allocation3 + $0x14] sm:$0x1]
      %v3520 = vld [vmem:[#allocation3 + $0x18] sm:$0xf]
      %v3521 = vld [vmem:[#allocation3 + $0x1c] sm:$0xf]
      %v3522 = vld [vmem:[#allocation3 + $0x20] sm:$0x1]
      %v3523 = vld [vmem:[#allocation3 + $0x24] sm:$0xf]
      %v3524 = vld [vmem:[#allocation3 + $0x28] sm:$0xf]
      %v3525 = vld [vmem:[#allocation3 + $0x2c] sm:$0x1]
      %v3526 = vld [vmem:[#allocation3 + $0x30] sm:$0xf]
      %v3527 = vld [vmem:[#allocation3 + $0x34] sm:$0xf]
      %v3528 = vld [vmem:[#allocation3 + $0x38] sm:$0x1]
      %v3529 = vld [vmem:[#allocation3 + $0x3c] sm:$0xf]
      %v3530 = vld [vmem:[#allocation3 + $0x40] sm:$0xf]
      %v3531 = vld [vmem:[#allocation3 + $0x44] sm:$0x1]
      %v3532 = vld [vmem:[#allocation3 + $0x48] sm:$0xf]
      %v3533 = vld [vmem:[#allocation3 + $0x4c] sm:$0xf]
      %v3534 = vld [vmem:[#allocation3 + $0x50] sm:$0x1]
      %v3535 = vld [vmem:[#allocation3 + $0x54] sm:$0xf]
      %v3536 = vld [vmem:[#allocation3 + $0x58] sm:$0xf]
      %v3537 = vld [vmem:[#allocation3 + $0x5c] sm:$0x1]
      %v3538 = vld [vmem:[#allocation3 + $0x60] sm:$0xf]
      %v3539 = vld [vmem:[#allocation3 + $0x64] sm:$0xf]
      %v3540 = vld [vmem:[#allocation3 + $0x68] sm:$0x1]
      %v3541 = vld [vmem:[#allocation3 + $0x6c] sm:$0xf]
      %v3542 = vld [vmem:[#allocation3 + $0x70] sm:$0xf]
      %v3543 = vld [vmem:[#allocation3 + $0x74] sm:$0x1]
      %vm3544 = vsmask.f32 3328
      %vm3545 = vsmask.f32 7440
      %vm3546 = vmor %vm3544, %vm3545
      %v3548 = vshrl.u32 %v3514, 16
      %v3550 = vrot.slane %v3548, 4
      %v3551 = vshll.u32 %v3514, 16
      %v3553 = vrot.slane %v3551, 5
      %v3554 = vor.u32 %v3550, %v3553
      %v3555 = vrot.slane %v3554, 4
      %v3557 = vshll.u32 %v3515, 16
      %v3559 = vrot.slane %v3557, 5
      %v3560 = vsel %vm3546, %v3555, %v3559
      %v3561 = vshrl.u32 %v3515, 16
      %v3563 = vrot.slane %v3561, 4
      %v3564 = vor.u32 %v3563, %v3559
      %v3565 = vrot.slane %v3564, 4
      %v3567 = vshll.u32 %v3516, 16
      %v3569 = vrot.slane %v3567, 5
      %v3570 = vsel %vm3546, %v3565, %v3569
      %v3572 = vshrl.u32 %v3517, 16
      %v3574 = vrot.slane %v3572, 4
      %v3575 = vshll.u32 %v3517, 16
      %v3577 = vrot.slane %v3575, 5
      %v3578 = vor.u32 %v3574, %v3577
      %v3579 = vrot.slane %v3578, 4
      %v3581 = vshll.u32 %v3518, 16
      %v3583 = vrot.slane %v3581, 5
      %v3584 = vsel %vm3546, %v3579, %v3583
      %v3585 = vshrl.u32 %v3518, 16
      %v3587 = vrot.slane %v3585, 4
      %v3588 = vor.u32 %v3587, %v3583
      %v3589 = vrot.slane %v3588, 4
      %v3591 = vshll.u32 %v3519, 16
      %v3593 = vrot.slane %v3591, 5
      %v3594 = vsel %vm3546, %v3589, %v3593
      %v3596 = vshrl.u32 %v3520, 16
      %v3598 = vrot.slane %v3596, 4
      %v3599 = vshll.u32 %v3520, 16
      %v3601 = vrot.slane %v3599, 5
      %v3602 = vor.u32 %v3598, %v3601
      %v3603 = vrot.slane %v3602, 4
      %v3605 = vshll.u32 %v3521, 16
      %v3607 = vrot.slane %v3605, 5
      %v3608 = vsel %vm3546, %v3603, %v3607
      %v3609 = vshrl.u32 %v3521, 16
      %v3611 = vrot.slane %v3609, 4
      %v3612 = vor.u32 %v3611, %v3607
      %v3613 = vrot.slane %v3612, 4
      %v3615 = vshll.u32 %v3522, 16
      %v3617 = vrot.slane %v3615, 5
      %v3618 = vsel %vm3546, %v3613, %v3617
      %v3620 = vshrl.u32 %v3523, 16
      %v3622 = vrot.slane %v3620, 4
      %v3623 = vshll.u32 %v3523, 16
      %v3625 = vrot.slane %v3623, 5
      %v3626 = vor.u32 %v3622, %v3625
      %v3627 = vrot.slane %v3626, 4
      %v3629 = vshll.u32 %v3524, 16
      %v3631 = vrot.slane %v3629, 5
      %v3632 = vsel %vm3546, %v3627, %v3631
      %v3633 = vshrl.u32 %v3524, 16
      %v3635 = vrot.slane %v3633, 4
      %v3636 = vor.u32 %v3635, %v3631
      %v3637 = vrot.slane %v3636, 4
      %v3639 = vshll.u32 %v3525, 16
      %v3641 = vrot.slane %v3639, 5
      %v3642 = vsel %vm3546, %v3637, %v3641
      %v3644 = vshrl.u32 %v3526, 16
      %v3646 = vrot.slane %v3644, 4
      %v3647 = vshll.u32 %v3526, 16
      %v3649 = vrot.slane %v3647, 5
      %v3650 = vor.u32 %v3646, %v3649
      %v3651 = vrot.slane %v3650, 4
      %v3653 = vshll.u32 %v3527, 16
      %v3655 = vrot.slane %v3653, 5
      %v3656 = vsel %vm3546, %v3651, %v3655
      %v3657 = vshrl.u32 %v3527, 16
      %v3659 = vrot.slane %v3657, 4
      %v3660 = vor.u32 %v3659, %v3655
      %v3661 = vrot.slane %v3660, 4
      %v3663 = vshll.u32 %v3528, 16
      %v3665 = vrot.slane %v3663, 5
      %v3666 = vsel %vm3546, %v3661, %v3665
      %v3668 = vshrl.u32 %v3529, 16
      %v3670 = vrot.slane %v3668, 4
      %v3671 = vshll.u32 %v3529, 16
      %v3673 = vrot.slane %v3671, 5
      %v3674 = vor.u32 %v3670, %v3673
      %v3675 = vrot.slane %v3674, 4
      %v3677 = vshll.u32 %v3530, 16
      %v3679 = vrot.slane %v3677, 5
      %v3680 = vsel %vm3546, %v3675, %v3679
      %v3681 = vshrl.u32 %v3530, 16
      %v3683 = vrot.slane %v3681, 4
      %v3684 = vor.u32 %v3683, %v3679
      %v3685 = vrot.slane %v3684, 4
      %v3687 = vshll.u32 %v3531, 16
      %v3689 = vrot.slane %v3687, 5
      %v3690 = vsel %vm3546, %v3685, %v3689
      %v3692 = vshrl.u32 %v3532, 16
      %v3694 = vrot.slane %v3692, 4
      %v3695 = vshll.u32 %v3532, 16
      %v3697 = vrot.slane %v3695, 5
      %v3698 = vor.u32 %v3694, %v3697
      %v3699 = vrot.slane %v3698, 4
      %v3701 = vshll.u32 %v3533, 16
      %v3703 = vrot.slane %v3701, 5
      %v3704 = vsel %vm3546, %v3699, %v3703
      %v3705 = vshrl.u32 %v3533, 16
      %v3707 = vrot.slane %v3705, 4
      %v3708 = vor.u32 %v3707, %v3703
      %v3709 = vrot.slane %v3708, 4
      %v3711 = vshll.u32 %v3534, 16
      %v3713 = vrot.slane %v3711, 5
      %v3714 = vsel %vm3546, %v3709, %v3713
      %v3716 = vshrl.u32 %v3535, 16
      %v3718 = vrot.slane %v3716, 4
      %v3719 = vshll.u32 %v3535, 16
      %v3721 = vrot.slane %v3719, 5
      %v3722 = vor.u32 %v3718, %v3721
      %v3723 = vrot.slane %v3722, 4
      %v3725 = vshll.u32 %v3536, 16
      %v3727 = vrot.slane %v3725, 5
      %v3728 = vsel %vm3546, %v3723, %v3727
      %v3729 = vshrl.u32 %v3536, 16
      %v3731 = vrot.slane %v3729, 4
      %v3732 = vor.u32 %v3731, %v3727
      %v3733 = vrot.slane %v3732, 4
      %v3735 = vshll.u32 %v3537, 16
      %v3737 = vrot.slane %v3735, 5
      %v3738 = vsel %vm3546, %v3733, %v3737
      %s3739 = scalar_lea.vmem %s3, 64
      %v3740 = vld [vmem:[%s3739] sm:$0xf]
      %v3741 = vld [vmem:[%s3739 + $0x4] sm:$0xf]
      %v3742 = vld [vmem:[%s3739 + $0x8] sm:$0xf]
      %v3743 = vld [vmem:[%s3739 + $0xc] sm:$0xf]
      %v3744 = vld [vmem:[%s3739 + $0x10] sm:$0xf]
      %v3745 = vld [vmem:[%s3739 + $0x14] sm:$0xf]
      %v3746 = vld [vmem:[%s3739 + $0x18] sm:$0xf]
      %v3747 = vld [vmem:[%s3739 + $0x1c] sm:$0xf]
      %v3748 = vld [vmem:[%s3739 + $0x20] sm:$0xf]
      %v3749 = vld [vmem:[%s3739 + $0x24] sm:$0xf]
      %v3750 = vld [vmem:[%s3739 + $0x28] sm:$0xf]
      %v3751 = vld [vmem:[%s3739 + $0x2c] sm:$0xf]
      %v3752 = vld [vmem:[%s3739 + $0x30] sm:$0xf]
      %v3753 = vld [vmem:[%s3739 + $0x34] sm:$0xf]
      %v3754 = vld [vmem:[%s3739 + $0x38] sm:$0xf]
      %v3755 = vld [vmem:[%s3739 + $0x3c] sm:$0xf]
      %v3756 = vunpack.c.l.b16 %v3560
      %v3757 = vunpack.c.l.b16 %v3570
      %v3758 = vunpack.c.l.b16 %v3584
      %v3759 = vunpack.c.l.b16 %v3594
      %v3760 = vunpack.c.l.b16 %v3608
      %v3761 = vunpack.c.l.b16 %v3618
      %v3762 = vunpack.c.l.b16 %v3632
      %v3763 = vunpack.c.l.b16 %v3642
      %v3764 = vunpack.c.l.b16 %v3656
      %v3765 = vunpack.c.l.b16 %v3666
      %v3766 = vunpack.c.l.b16 %v3680
      %v3767 = vunpack.c.l.b16 %v3690
      %v3768 = vunpack.c.l.b16 %v3704
      %v3769 = vunpack.c.l.b16 %v3714
      %v3770 = vunpack.c.l.b16 %v3728
      %v3771 = vunpack.c.l.b16 %v3738
      %v3772 = vpack.c.b16 %v3757, %v3756
      %v3773 = vpack.c.b16 %v3759, %v3758
      %v3774 = vpack.c.b16 %v3761, %v3760
      %v3775 = vpack.c.b16 %v3763, %v3762
      %v3776 = vpack.c.b16 %v3765, %v3764
      %v3777 = vpack.c.b16 %v3767, %v3766
      %v3778 = vpack.c.b16 %v3769, %v3768
      %v3779 = vpack.c.b16 %v3771, %v3770
      %v3804 = vunpack.c.l.b16 %v3740
      %v3805 = vunpack.c.l.b16 %v3741
      %v3806 = vunpack.c.l.b16 %v3742
      %v3807 = vunpack.c.l.b16 %v3743
      %v3808 = vunpack.c.l.b16 %v3744
      %v3809 = vunpack.c.l.b16 %v3745
      %v3810 = vunpack.c.l.b16 %v3746
      %v3811 = vunpack.c.l.b16 %v3747
      %v3812 = vunpack.c.l.b16 %v3748
      %v3813 = vunpack.c.l.b16 %v3749
      %v3814 = vunpack.c.l.b16 %v3750
      %v3815 = vunpack.c.l.b16 %v3751
      %v3816 = vunpack.c.l.b16 %v3752
      %v3817 = vunpack.c.l.b16 %v3753
      %v3818 = vunpack.c.l.b16 %v3754
      %v3819 = vunpack.c.l.b16 %v3755
      %v3820 = vpack.c.b16 %v3805, %v3804
      %v3821 = vpack.c.b16 %v3807, %v3806
      %v3822 = vpack.c.b16 %v3809, %v3808
      %v3823 = vpack.c.b16 %v3811, %v3810
      %v3824 = vpack.c.b16 %v3813, %v3812
      %v3825 = vpack.c.b16 %v3815, %v3814
      %v3826 = vpack.c.b16 %v3817, %v3816
      %v3827 = vpack.c.b16 %v3819, %v3818
      %3836 = vmatprep.subr.bf16.mxu0 0
      %3837 = vmatpush1.bf16.msra.mxu0 %v3827
      %3838 = vmatprep.subr.bf16.mxu0 0
      %3839 = vmatpush1.bf16.msra.mxu0 %v3826
      %3840 = vmatprep.subr.bf16.mxu0 0
      %3841 = vmatpush1.bf16.msra.mxu0 %v3825
      %3842 = vmatprep.subr.bf16.mxu0 0
      %3843 = vmatpush1.bf16.msra.mxu0 %v3824
      %3844 = vmatprep.subr.bf16.mxu0 0
      %3845 = vmatpush1.bf16.msra.mxu0 %v3823
      %3846 = vmatprep.subr.bf16.mxu0 0
      %3847 = vmatpush1.bf16.msra.mxu0 %v3822
      %3848 = vmatprep.subr.bf16.mxu0 0
      %3849 = vmatpush1.bf16.msra.mxu0 %v3821
      %3850 = vmatprep.subr.bf16.mxu0 0
      %3851 = vmatpush1.bf16.msra.mxu0 %v3820
      %3852 = vmatprep.subr.bf16.mxu0 0
      %3853 = vmatpush2.bf16.msra.mxu0 0
      %3854 = vmatprep.subr.bf16.mxu0 0
      %3855 = vmatpush2.bf16.msra.mxu0 0
      %3856 = vmatprep.subr.bf16.mxu0 0
      %3857 = vmatpush2.bf16.msra.mxu0 0
      %3858 = vmatprep.subr.bf16.mxu0 0
      %3859 = vmatpush2.bf16.msra.mxu0 0
      %3860 = vmatprep.subr.bf16.mxu0 0
      %3861 = vmatpush2.bf16.msra.mxu0 0
      %3862 = vmatprep.subr.bf16.mxu0 0
      %3863 = vmatpush2.bf16.msra.mxu0 0
      %3864 = vmatprep.subr.bf16.mxu0 0
      %3865 = vmatpush2.bf16.msra.mxu0 0
      %3866 = vmatprep.subr.bf16.mxu0 0
      %3867 = vmatpush2.bf16.msra.mxu0 0
      %3868 = vmatprep.mubr.bf16.mxu0 0
      %3869 = vmatmul.mubr.bf16.gmra.mxu0 %v3772
      %v3870 = vpop.f32.mrf.mxu0
      %v3871 = vadd.f32 0.0, %v3870
      %v3872 = vpop.f32.mrf.mxu0
      %v3873 = vpop.f32.mrf.mxu0
      %v3874 = vadd.f32 0.0, %v3873
      %v3875 = vpop.f32.mrf.mxu0
      %3876 = vmatprep.mubr.bf16.mxu0 0
      %3877 = vmatmul.mubr.bf16.gmra.mxu0 %v3773
      %v3878 = vpop.f32.mrf.mxu0
      %v3879 = vadd.f32 0.0, %v3878
      %v3880 = vpop.f32.mrf.mxu0
      %v3881 = vpop.f32.mrf.mxu0
      %v3882 = vadd.f32 0.0, %v3881
      %v3883 = vpop.f32.mrf.mxu0
      %3884 = vmatprep.mubr.bf16.mxu0 0
      %3885 = vmatmul.mubr.bf16.gmra.mxu0 %v3774
      %v3886 = vpop.f32.mrf.mxu0
      %v3887 = vadd.f32 0.0, %v3886
      %v3888 = vpop.f32.mrf.mxu0
      %v3889 = vpop.f32.mrf.mxu0
      %v3890 = vadd.f32 0.0, %v3889
      %v3891 = vpop.f32.mrf.mxu0
      %3892 = vmatprep.mubr.bf16.mxu0 0
      %3893 = vmatmul.mubr.bf16.gmra.mxu0 %v3775
      %v3894 = vpop.f32.mrf.mxu0
      %v3895 = vadd.f32 0.0, %v3894
      %v3896 = vpop.f32.mrf.mxu0
      %v3897 = vpop.f32.mrf.mxu0
      %v3898 = vadd.f32 0.0, %v3897
      %v3899 = vpop.f32.mrf.mxu0
      %3900 = vmatprep.mubr.bf16.mxu0 0
      %3901 = vmatmul.mubr.bf16.gmra.mxu0 %v3776
      %v3902 = vpop.f32.mrf.mxu0
      %v3903 = vadd.f32 0.0, %v3902
      %v3904 = vpop.f32.mrf.mxu0
      %v3905 = vpop.f32.mrf.mxu0
      %v3906 = vadd.f32 0.0, %v3905
      %v3907 = vpop.f32.mrf.mxu0
      %3908 = vmatprep.mubr.bf16.mxu0 0
      %3909 = vmatmul.mubr.bf16.gmra.mxu0 %v3777
      %v3910 = vpop.f32.mrf.mxu0
      %v3911 = vadd.f32 0.0, %v3910
      %v3912 = vpop.f32.mrf.mxu0
      %v3913 = vpop.f32.mrf.mxu0
      %v3914 = vadd.f32 0.0, %v3913
      %v3915 = vpop.f32.mrf.mxu0
      %3916 = vmatprep.mubr.bf16.mxu0 0
      %3917 = vmatmul.mubr.bf16.gmra.mxu0 %v3778
      %v3918 = vpop.f32.mrf.mxu0
      %v3919 = vadd.f32 0.0, %v3918
      %v3920 = vpop.f32.mrf.mxu0
      %v3921 = vpop.f32.mrf.mxu0
      %v3922 = vadd.f32 0.0, %v3921
      %v3923 = vpop.f32.mrf.mxu0
      %3924 = vmatprep.mubr.bf16.mxu0 0
      %3925 = vmatmul.mubr.bf16.gmra.mxu0 %v3779
      %v3926 = vpop.f32.mrf.mxu0
      %v3927 = vadd.f32 0.0, %v3926
      %v3928 = vpop.f32.mrf.mxu0
      %v3929 = vpop.f32.mrf.mxu0
      %v3930 = vadd.f32 0.0, %v3929
      %v3931 = vpop.f32.mrf.mxu0
      %3932 = vdwg.mxu0
      %v3933 = vadd.f32 %v3498, %v3871
      %v3934 = vadd.f32 %v3499, %v3874
      %v3935 = vadd.f32 %v3500, %v3879
      %v3936 = vadd.f32 %v3501, %v3882
      %v3937 = vadd.f32 %v3502, %v3887
      %v3938 = vadd.f32 %v3503, %v3890
      %v3939 = vadd.f32 %v3504, %v3895
      %v3940 = vadd.f32 %v3505, %v3898
      %v3941 = vadd.f32 %v3506, %v3903
      %v3942 = vadd.f32 %v3507, %v3906
      %v3943 = vadd.f32 %v3508, %v3911
      %v3944 = vadd.f32 %v3509, %v3914
      %v3945 = vadd.f32 %v3510, %v3919
      %v3946 = vadd.f32 %v3511, %v3922
      %v3947 = vadd.f32 %v3512, %v3927
      %v3948 = vadd.f32 %v3513, %v3930
      %v3950 = vshrl.u32 %v3538, 16
      %v3952 = vrot.slane %v3950, 4
      %v3953 = vshll.u32 %v3538, 16
      %v3955 = vrot.slane %v3953, 5
      %v3956 = vor.u32 %v3952, %v3955
      %v3957 = vrot.slane %v3956, 4
      %v3959 = vshll.u32 %v3539, 16
      %v3961 = vrot.slane %v3959, 5
      %v3962 = vsel %vm3546, %v3957, %v3961
      %v3963 = vshrl.u32 %v3539, 16
      %v3965 = vrot.slane %v3963, 4
      %v3966 = vor.u32 %v3965, %v3961
      %v3967 = vrot.slane %v3966, 4
      %v3969 = vshll.u32 %v3540, 16
      %v3971 = vrot.slane %v3969, 5
      %v3972 = vsel %vm3546, %v3967, %v3971
      %s3973 = scalar_lea.vmem %s3, 256
      %v3974 = vld [vmem:[%s3973] sm:$0xf]
      %v3975 = vld [vmem:[%s3973 + $0x4] sm:$0xf]
      %v3976 = vld [vmem:[%s3973 + $0x8] sm:$0xf]
      %v3977 = vld [vmem:[%s3973 + $0xc] sm:$0xf]
      %v3978 = vld [vmem:[%s3973 + $0x10] sm:$0xf]
      %v3979 = vld [vmem:[%s3973 + $0x14] sm:$0xf]
      %v3980 = vld [vmem:[%s3973 + $0x18] sm:$0xf]
      %v3981 = vld [vmem:[%s3973 + $0x1c] sm:$0xf]
      %v3982 = vld [vmem:[%s3973 + $0x20] sm:$0xf]
      %v3983 = vld [vmem:[%s3973 + $0x24] sm:$0xf]
      %v3984 = vld [vmem:[%s3973 + $0x28] sm:$0xf]
      %v3985 = vld [vmem:[%s3973 + $0x2c] sm:$0xf]
      %v3986 = vld [vmem:[%s3973 + $0x30] sm:$0xf]
      %v3987 = vld [vmem:[%s3973 + $0x34] sm:$0xf]
      %v3988 = vld [vmem:[%s3973 + $0x38] sm:$0xf]
      %v3989 = vld [vmem:[%s3973 + $0x3c] sm:$0xf]
      %v3990 = vunpack.c.l.b16 %v3962
      %v3991 = vunpack.c.l.b16 %v3972
      %v3992 = vpack.c.b16 %v3991, %v3990
      %v4010 = vunpack.c.l.b16 %v3974
      %v4011 = vunpack.c.l.b16 %v3975
      %v4012 = vunpack.c.l.b16 %v3976
      %v4013 = vunpack.c.l.b16 %v3977
      %v4014 = vunpack.c.l.b16 %v3978
      %v4015 = vunpack.c.l.b16 %v3979
      %v4016 = vunpack.c.l.b16 %v3980
      %v4017 = vunpack.c.l.b16 %v3981
      %v4018 = vunpack.c.l.b16 %v3982
      %v4019 = vunpack.c.l.b16 %v3983
      %v4020 = vunpack.c.l.b16 %v3984
      %v4021 = vunpack.c.l.b16 %v3985
      %v4022 = vunpack.c.l.b16 %v3986
      %v4023 = vunpack.c.l.b16 %v3987
      %v4024 = vunpack.c.l.b16 %v3988
      %v4025 = vunpack.c.l.b16 %v3989
      %v4026 = vpack.c.b16 %v4011, %v4010
      %v4027 = vpack.c.b16 %v4013, %v4012
      %v4028 = vpack.c.b16 %v4015, %v4014
      %v4029 = vpack.c.b16 %v4017, %v4016
      %v4030 = vpack.c.b16 %v4019, %v4018
      %v4031 = vpack.c.b16 %v4021, %v4020
      %v4032 = vpack.c.b16 %v4023, %v4022
      %v4033 = vpack.c.b16 %v4025, %v4024
      %4042 = vmatprep.subr.bf16.mxu0 0
      %4043 = vmatpush1.bf16.msra.mxu0 %v4033
      %4044 = vmatprep.subr.bf16.mxu0 0
      %4045 = vmatpush1.bf16.msra.mxu0 %v4032
      %4046 = vmatprep.subr.bf16.mxu0 0
      %4047 = vmatpush1.bf16.msra.mxu0 %v4031
      %4048 = vmatprep.subr.bf16.mxu0 0
      %4049 = vmatpush1.bf16.msra.mxu0 %v4030
      %4050 = vmatprep.subr.bf16.mxu0 0
      %4051 = vmatpush1.bf16.msra.mxu0 %v4029
      %4052 = vmatprep.subr.bf16.mxu0 0
      %4053 = vmatpush1.bf16.msra.mxu0 %v4028
      %4054 = vmatprep.subr.bf16.mxu0 0
      %4055 = vmatpush1.bf16.msra.mxu0 %v4027
      %4056 = vmatprep.subr.bf16.mxu0 0
      %4057 = vmatpush1.bf16.msra.mxu0 %v4026
      %4058 = vmatprep.subr.bf16.mxu0 0
      %4059 = vmatpush2.bf16.msra.mxu0 0
      %4060 = vmatprep.subr.bf16.mxu0 0
      %4061 = vmatpush2.bf16.msra.mxu0 0
      %4062 = vmatprep.subr.bf16.mxu0 0
      %4063 = vmatpush2.bf16.msra.mxu0 0
      %4064 = vmatprep.subr.bf16.mxu0 0
      %4065 = vmatpush2.bf16.msra.mxu0 0
      %4066 = vmatprep.subr.bf16.mxu0 0
      %4067 = vmatpush2.bf16.msra.mxu0 0
      %4068 = vmatprep.subr.bf16.mxu0 0
      %4069 = vmatpush2.bf16.msra.mxu0 0
      %4070 = vmatprep.subr.bf16.mxu0 0
      %4071 = vmatpush2.bf16.msra.mxu0 0
      %4072 = vmatprep.subr.bf16.mxu0 0
      %4073 = vmatpush2.bf16.msra.mxu0 0
      %4074 = vmatprep.mubr.bf16.mxu0 0
      %4075 = vmatmul.mubr.bf16.gmra.mxu0 %v3773
      %v4076 = vpop.f32.mrf.mxu0
      %v4077 = vadd.f32 0.0, %v4076
      %v4078 = vpop.f32.mrf.mxu0
      %v4079 = vpop.f32.mrf.mxu0
      %v4080 = vadd.f32 0.0, %v4079
      %v4081 = vpop.f32.mrf.mxu0
      %4082 = vmatprep.mubr.bf16.mxu0 0
      %4083 = vmatmul.mubr.bf16.gmra.mxu0 %v3774
      %v4084 = vpop.f32.mrf.mxu0
      %v4085 = vadd.f32 0.0, %v4084
      %v4086 = vpop.f32.mrf.mxu0
      %v4087 = vpop.f32.mrf.mxu0
      %v4088 = vadd.f32 0.0, %v4087
      %v4089 = vpop.f32.mrf.mxu0
      %4090 = vmatprep.mubr.bf16.mxu0 0
      %4091 = vmatmul.mubr.bf16.gmra.mxu0 %v3775
      %v4092 = vpop.f32.mrf.mxu0
      %v4093 = vadd.f32 0.0, %v4092
      %v4094 = vpop.f32.mrf.mxu0
      %v4095 = vpop.f32.mrf.mxu0
      %v4096 = vadd.f32 0.0, %v4095
      %v4097 = vpop.f32.mrf.mxu0
      %4098 = vmatprep.mubr.bf16.mxu0 0
      %4099 = vmatmul.mubr.bf16.gmra.mxu0 %v3776
      %v4100 = vpop.f32.mrf.mxu0
      %v4101 = vadd.f32 0.0, %v4100
      %v4102 = vpop.f32.mrf.mxu0
      %v4103 = vpop.f32.mrf.mxu0
      %v4104 = vadd.f32 0.0, %v4103
      %v4105 = vpop.f32.mrf.mxu0
      %4106 = vmatprep.mubr.bf16.mxu0 0
      %4107 = vmatmul.mubr.bf16.gmra.mxu0 %v3777
      %v4108 = vpop.f32.mrf.mxu0
      %v4109 = vadd.f32 0.0, %v4108
      %v4110 = vpop.f32.mrf.mxu0
      %v4111 = vpop.f32.mrf.mxu0
      %v4112 = vadd.f32 0.0, %v4111
      %v4113 = vpop.f32.mrf.mxu0
      %4114 = vmatprep.mubr.bf16.mxu0 0
      %4115 = vmatmul.mubr.bf16.gmra.mxu0 %v3778
      %v4116 = vpop.f32.mrf.mxu0
      %v4117 = vadd.f32 0.0, %v4116
      %v4118 = vpop.f32.mrf.mxu0
      %v4119 = vpop.f32.mrf.mxu0
      %v4120 = vadd.f32 0.0, %v4119
      %v4121 = vpop.f32.mrf.mxu0
      %4122 = vmatprep.mubr.bf16.mxu0 0
      %4123 = vmatmul.mubr.bf16.gmra.mxu0 %v3779
      %v4124 = vpop.f32.mrf.mxu0
      %v4125 = vadd.f32 0.0, %v4124
      %v4126 = vpop.f32.mrf.mxu0
      %v4127 = vpop.f32.mrf.mxu0
      %v4128 = vadd.f32 0.0, %v4127
      %v4129 = vpop.f32.mrf.mxu0
      %4130 = vmatprep.mubr.bf16.mxu0 0
      %4131 = vmatmul.mubr.bf16.gmra.mxu0 %v3992
      %v4132 = vpop.f32.mrf.mxu0
      %v4133 = vadd.f32 0.0, %v4132
      %v4134 = vpop.f32.mrf.mxu0
      %v4135 = vpop.f32.mrf.mxu0
      %v4136 = vadd.f32 0.0, %v4135
      %v4137 = vpop.f32.mrf.mxu0
      %4138 = vdwg.mxu0
      %v4139 = vadd.f32 %v3933, %v4077
      %v4140 = vadd.f32 %v3934, %v4080
      %v4141 = vadd.f32 %v3935, %v4085
      %v4142 = vadd.f32 %v3936, %v4088
      %v4143 = vadd.f32 %v3937, %v4093
      %v4144 = vadd.f32 %v3938, %v4096
      %v4145 = vadd.f32 %v3939, %v4101
      %v4146 = vadd.f32 %v3940, %v4104
      %v4147 = vadd.f32 %v3941, %v4109
      %v4148 = vadd.f32 %v3942, %v4112
      %v4149 = vadd.f32 %v3943, %v4117
      %v4150 = vadd.f32 %v3944, %v4120
      %v4151 = vadd.f32 %v3945, %v4125
      %v4152 = vadd.f32 %v3946, %v4128
      %v4153 = vadd.f32 %v3947, %v4133
      %v4154 = vadd.f32 %v3948, %v4136
      %v4156 = vshrl.u32 %v3541, 16
      %v4158 = vrot.slane %v4156, 4
      %v4159 = vshll.u32 %v3541, 16
      %v4161 = vrot.slane %v4159, 5
      %v4162 = vor.u32 %v4158, %v4161
      %v4163 = vrot.slane %v4162, 4
      %v4165 = vshll.u32 %v3542, 16
      %v4167 = vrot.slane %v4165, 5
      %v4168 = vsel %vm3546, %v4163, %v4167
      %v4169 = vshrl.u32 %v3542, 16
      %v4171 = vrot.slane %v4169, 4
      %v4172 = vor.u32 %v4171, %v4167
      %v4173 = vrot.slane %v4172, 4
      %v4175 = vshll.u32 %v3543, 16
      %v4177 = vrot.slane %v4175, 5
      %v4178 = vsel %vm3546, %v4173, %v4177
      %s4179 = scalar_lea.vmem %s3, 448
      %v4180 = vld [vmem:[%s4179] sm:$0xf]
      %v4181 = vld [vmem:[%s4179 + $0x4] sm:$0xf]
      %v4182 = vld [vmem:[%s4179 + $0x8] sm:$0xf]
      %v4183 = vld [vmem:[%s4179 + $0xc] sm:$0xf]
      %v4184 = vld [vmem:[%s4179 + $0x10] sm:$0xf]
      %v4185 = vld [vmem:[%s4179 + $0x14] sm:$0xf]
      %v4186 = vld [vmem:[%s4179 + $0x18] sm:$0xf]
      %v4187 = vld [vmem:[%s4179 + $0x1c] sm:$0xf]
      %v4188 = vld [vmem:[%s4179 + $0x20] sm:$0xf]
      %v4189 = vld [vmem:[%s4179 + $0x24] sm:$0xf]
      %v4190 = vld [vmem:[%s4179 + $0x28] sm:$0xf]
      %v4191 = vld [vmem:[%s4179 + $0x2c] sm:$0xf]
      %v4192 = vld [vmem:[%s4179 + $0x30] sm:$0xf]
      %v4193 = vld [vmem:[%s4179 + $0x34] sm:$0xf]
      %v4194 = vld [vmem:[%s4179 + $0x38] sm:$0xf]
      %v4195 = vld [vmem:[%s4179 + $0x3c] sm:$0xf]
      %v4196 = vunpack.c.l.b16 %v4168
      %v4197 = vunpack.c.l.b16 %v4178
      %v4198 = vpack.c.b16 %v4197, %v4196
      %v4216 = vunpack.c.l.b16 %v4180
      %v4217 = vunpack.c.l.b16 %v4181
      %v4218 = vunpack.c.l.b16 %v4182
      %v4219 = vunpack.c.l.b16 %v4183
      %v4220 = vunpack.c.l.b16 %v4184
      %v4221 = vunpack.c.l.b16 %v4185
      %v4222 = vunpack.c.l.b16 %v4186
      %v4223 = vunpack.c.l.b16 %v4187
      %v4224 = vunpack.c.l.b16 %v4188
      %v4225 = vunpack.c.l.b16 %v4189
      %v4226 = vunpack.c.l.b16 %v4190
      %v4227 = vunpack.c.l.b16 %v4191
      %v4228 = vunpack.c.l.b16 %v4192
      %v4229 = vunpack.c.l.b16 %v4193
      %v4230 = vunpack.c.l.b16 %v4194
      %v4231 = vunpack.c.l.b16 %v4195
      %v4232 = vpack.c.b16 %v4217, %v4216
      %v4233 = vpack.c.b16 %v4219, %v4218
      %v4234 = vpack.c.b16 %v4221, %v4220
      %v4235 = vpack.c.b16 %v4223, %v4222
      %v4236 = vpack.c.b16 %v4225, %v4224
      %v4237 = vpack.c.b16 %v4227, %v4226
      %v4238 = vpack.c.b16 %v4229, %v4228
      %v4239 = vpack.c.b16 %v4231, %v4230
      %4248 = vmatprep.subr.bf16.mxu0 0
      %4249 = vmatpush1.bf16.msra.mxu0 %v4239
      %4250 = vmatprep.subr.bf16.mxu0 0
      %4251 = vmatpush1.bf16.msra.mxu0 %v4238
      %4252 = vmatprep.subr.bf16.mxu0 0
      %4253 = vmatpush1.bf16.msra.mxu0 %v4237
      %4254 = vmatprep.subr.bf16.mxu0 0
      %4255 = vmatpush1.bf16.msra.mxu0 %v4236
      %4256 = vmatprep.subr.bf16.mxu0 0
      %4257 = vmatpush1.bf16.msra.mxu0 %v4235
      %4258 = vmatprep.subr.bf16.mxu0 0
      %4259 = vmatpush1.bf16.msra.mxu0 %v4234
      %4260 = vmatprep.subr.bf16.mxu0 0
      %4261 = vmatpush1.bf16.msra.mxu0 %v4233
      %4262 = vmatprep.subr.bf16.mxu0 0
      %4263 = vmatpush1.bf16.msra.mxu0 %v4232
      %4264 = vmatprep.subr.bf16.mxu0 0
      %4265 = vmatpush2.bf16.msra.mxu0 0
      %4266 = vmatprep.subr.bf16.mxu0 0
      %4267 = vmatpush2.bf16.msra.mxu0 0
      %4268 = vmatprep.subr.bf16.mxu0 0
      %4269 = vmatpush2.bf16.msra.mxu0 0
      %4270 = vmatprep.subr.bf16.mxu0 0
      %4271 = vmatpush2.bf16.msra.mxu0 0
      %4272 = vmatprep.subr.bf16.mxu0 0
      %4273 = vmatpush2.bf16.msra.mxu0 0
      %4274 = vmatprep.subr.bf16.mxu0 0
      %4275 = vmatpush2.bf16.msra.mxu0 0
      %4276 = vmatprep.subr.bf16.mxu0 0
      %4277 = vmatpush2.bf16.msra.mxu0 0
      %4278 = vmatprep.subr.bf16.mxu0 0
      %4279 = vmatpush2.bf16.msra.mxu0 0
      %4280 = vmatprep.mubr.bf16.mxu0 0
      %4281 = vmatmul.mubr.bf16.gmra.mxu0 %v3774
      %v4282 = vpop.f32.mrf.mxu0
      %v4283 = vadd.f32 0.0, %v4282
      %v4284 = vpop.f32.mrf.mxu0
      %v4285 = vpop.f32.mrf.mxu0
      %v4286 = vadd.f32 0.0, %v4285
      %v4287 = vpop.f32.mrf.mxu0
      %4288 = vmatprep.mubr.bf16.mxu0 0
      %4289 = vmatmul.mubr.bf16.gmra.mxu0 %v3775
      %v4290 = vpop.f32.mrf.mxu0
      %v4291 = vadd.f32 0.0, %v4290
      %v4292 = vpop.f32.mrf.mxu0
      %v4293 = vpop.f32.mrf.mxu0
      %v4294 = vadd.f32 0.0, %v4293
      %v4295 = vpop.f32.mrf.mxu0
      %4296 = vmatprep.mubr.bf16.mxu0 0
      %4297 = vmatmul.mubr.bf16.gmra.mxu0 %v3776
      %v4298 = vpop.f32.mrf.mxu0
      %v4299 = vadd.f32 0.0, %v4298
      %v4300 = vpop.f32.mrf.mxu0
      %v4301 = vpop.f32.mrf.mxu0
      %v4302 = vadd.f32 0.0, %v4301
      %v4303 = vpop.f32.mrf.mxu0
      %4304 = vmatprep.mubr.bf16.mxu0 0
      %4305 = vmatmul.mubr.bf16.gmra.mxu0 %v3777
      %v4306 = vpop.f32.mrf.mxu0
      %v4307 = vadd.f32 0.0, %v4306
      %v4308 = vpop.f32.mrf.mxu0
      %v4309 = vpop.f32.mrf.mxu0
      %v4310 = vadd.f32 0.0, %v4309
      %v4311 = vpop.f32.mrf.mxu0
      %4312 = vmatprep.mubr.bf16.mxu0 0
      %4313 = vmatmul.mubr.bf16.gmra.mxu0 %v3778
      %v4314 = vpop.f32.mrf.mxu0
      %v4315 = vadd.f32 0.0, %v4314
      %v4316 = vpop.f32.mrf.mxu0
      %v4317 = vpop.f32.mrf.mxu0
      %v4318 = vadd.f32 0.0, %v4317
      %v4319 = vpop.f32.mrf.mxu0
      %4320 = vmatprep.mubr.bf16.mxu0 0
      %4321 = vmatmul.mubr.bf16.gmra.mxu0 %v3779
      %v4322 = vpop.f32.mrf.mxu0
      %v4323 = vadd.f32 0.0, %v4322
      %v4324 = vpop.f32.mrf.mxu0
      %v4325 = vpop.f32.mrf.mxu0
      %v4326 = vadd.f32 0.0, %v4325
      %v4327 = vpop.f32.mrf.mxu0
      %4328 = vmatprep.mubr.bf16.mxu0 0
      %4329 = vmatmul.mubr.bf16.gmra.mxu0 %v3992
      %v4330 = vpop.f32.mrf.mxu0
      %v4331 = vadd.f32 0.0, %v4330
      %v4332 = vpop.f32.mrf.mxu0
      %v4333 = vpop.f32.mrf.mxu0
      %v4334 = vadd.f32 0.0, %v4333
      %v4335 = vpop.f32.mrf.mxu0
      %4336 = vmatprep.mubr.bf16.mxu0 0
      %4337 = vmatmul.mubr.bf16.gmra.mxu0 %v4198
      %v4338 = vpop.f32.mrf.mxu0
      %v4339 = vadd.f32 0.0, %v4338
      %v4340 = vpop.f32.mrf.mxu0
      %v4341 = vpop.f32.mrf.mxu0
      %v4342 = vadd.f32 0.0, %v4341
      %v4343 = vpop.f32.mrf.mxu0
      %4344 = vdwg.mxu0
      %v4345 = vadd.f32 %v4139, %v4283
      %v4346 = vadd.f32 %v4140, %v4286
      %v4347 = vadd.f32 %v4141, %v4291
      %v4348 = vadd.f32 %v4142, %v4294
      %v4349 = vadd.f32 %v4143, %v4299
      %v4350 = vadd.f32 %v4144, %v4302
      %v4351 = vadd.f32 %v4145, %v4307
      %v4352 = vadd.f32 %v4146, %v4310
      %v4353 = vadd.f32 %v4147, %v4315
      %v4354 = vadd.f32 %v4148, %v4318
      %v4355 = vadd.f32 %v4149, %v4323
      %v4356 = vadd.f32 %v4150, %v4326
      %v4357 = vadd.f32 %v4151, %v4331
      %v4358 = vadd.f32 %v4152, %v4334
      %v4359 = vadd.f32 %v4153, %v4339
      %v4360 = vadd.f32 %v4154, %v4342
      %v4361 = vld [vmem:[#allocation3] sm:$0xe]
      %v4362 = vld [vmem:[#allocation3 + $0xc] sm:$0xe]
      %v4363 = vld [vmem:[#allocation3 + $0x18] sm:$0xe]
      %v4364 = vld [vmem:[#allocation3 + $0x24] sm:$0xe]
      %v4365 = vld [vmem:[#allocation3 + $0x30] sm:$0xe]
      %v4366 = vld [vmem:[#allocation3 + $0x3c] sm:$0xe]
      %v4367 = vld [vmem:[#allocation3 + $0x48] sm:$0xe]
      %v4368 = vld [vmem:[#allocation3 + $0x54] sm:$0xe]
      %v4369 = vld [vmem:[#allocation3 + $0x60] sm:$0xe]
      %v4370 = vld [vmem:[#allocation3 + $0x6c] sm:$0xe]
      %vm4395 = vcmask 1042432
      %vm4396 = vcmask 1046532
      %vm4397 = vmor %vm4395, %vm4396
      %v4398 = vrot.slane %v4361, 5
      %v4399 = vrot.slane %v4398, 4
      %v4400 = vrot.slane %v3515, 5
      %v4401 = vsel %vm4397, %v4399, %v4400
      %v4402 = vrot.slane %v4400, 4
      %v4403 = vrot.slane %v3516, 5
      %v4404 = vsel %vm4397, %v4402, %v4403
      %v4405 = vrot.slane %v4362, 5
      %v4406 = vrot.slane %v4405, 4
      %v4407 = vrot.slane %v3518, 5
      %v4408 = vsel %vm4397, %v4406, %v4407
      %v4409 = vrot.slane %v4407, 4
      %v4410 = vrot.slane %v3519, 5
      %v4411 = vsel %vm4397, %v4409, %v4410
      %v4412 = vrot.slane %v4363, 5
      %v4413 = vrot.slane %v4412, 4
      %v4414 = vrot.slane %v3521, 5
      %v4415 = vsel %vm4397, %v4413, %v4414
      %v4416 = vrot.slane %v4414, 4
      %v4417 = vrot.slane %v3522, 5
      %v4418 = vsel %vm4397, %v4416, %v4417
      %v4419 = vrot.slane %v4364, 5
      %v4420 = vrot.slane %v4419, 4
      %v4421 = vrot.slane %v3524, 5
      %v4422 = vsel %vm4397, %v4420, %v4421
      %v4423 = vrot.slane %v4421, 4
      %v4424 = vrot.slane %v3525, 5
      %v4425 = vsel %vm4397, %v4423, %v4424
      %v4426 = vrot.slane %v4365, 5
      %v4427 = vrot.slane %v4426, 4
      %v4428 = vrot.slane %v3527, 5
      %v4429 = vsel %vm4397, %v4427, %v4428
      %v4430 = vrot.slane %v4428, 4
      %v4431 = vrot.slane %v3528, 5
      %v4432 = vsel %vm4397, %v4430, %v4431
      %v4433 = vrot.slane %v4366, 5
      %v4434 = vrot.slane %v4433, 4
      %v4435 = vrot.slane %v3530, 5
      %v4436 = vsel %vm4397, %v4434, %v4435
      %v4437 = vrot.slane %v4435, 4
      %v4438 = vrot.slane %v3531, 5
      %v4439 = vsel %vm4397, %v4437, %v4438
      %v4440 = vrot.slane %v4367, 5
      %v4441 = vrot.slane %v4440, 4
      %v4442 = vrot.slane %v3533, 5
      %v4443 = vsel %vm4397, %v4441, %v4442
      %v4444 = vrot.slane %v4442, 4
      %v4445 = vrot.slane %v3534, 5
      %v4446 = vsel %vm4397, %v4444, %v4445
      %v4447 = vrot.slane %v4368, 5
      %v4448 = vrot.slane %v4447, 4
      %v4449 = vrot.slane %v3536, 5
      %v4450 = vsel %vm4397, %v4448, %v4449
      %v4451 = vrot.slane %v4449, 4
      %v4452 = vrot.slane %v3537, 5
      %v4453 = vsel %vm4397, %v4451, %v4452
      %s4454 = scalar_lea.vmem %s3, 128
      %v4455 = vld [vmem:[%s4454] sm:$0xf]
      %v4456 = vld [vmem:[%s4454 + $0x4] sm:$0xf]
      %v4457 = vld [vmem:[%s4454 + $0x8] sm:$0xf]
      %v4458 = vld [vmem:[%s4454 + $0xc] sm:$0xf]
      %v4459 = vld [vmem:[%s4454 + $0x10] sm:$0xf]
      %v4460 = vld [vmem:[%s4454 + $0x14] sm:$0xf]
      %v4461 = vld [vmem:[%s4454 + $0x18] sm:$0xf]
      %v4462 = vld [vmem:[%s4454 + $0x1c] sm:$0xf]
      %v4463 = vld [vmem:[%s4454 + $0x20] sm:$0xf]
      %v4464 = vld [vmem:[%s4454 + $0x24] sm:$0xf]
      %v4465 = vld [vmem:[%s4454 + $0x28] sm:$0xf]
      %v4466 = vld [vmem:[%s4454 + $0x2c] sm:$0xf]
      %v4467 = vld [vmem:[%s4454 + $0x30] sm:$0xf]
      %v4468 = vld [vmem:[%s4454 + $0x34] sm:$0xf]
      %v4469 = vld [vmem:[%s4454 + $0x38] sm:$0xf]
      %v4470 = vld [vmem:[%s4454 + $0x3c] sm:$0xf]
      %v4471 = vunpack.c.l.b16 %v4401
      %v4472 = vunpack.c.l.b16 %v4404
      %v4473 = vunpack.c.l.b16 %v4408
      %v4474 = vunpack.c.l.b16 %v4411
      %v4475 = vunpack.c.l.b16 %v4415
      %v4476 = vunpack.c.l.b16 %v4418
      %v4477 = vunpack.c.l.b16 %v4422
      %v4478 = vunpack.c.l.b16 %v4425
      %v4479 = vunpack.c.l.b16 %v4429
      %v4480 = vunpack.c.l.b16 %v4432
      %v4481 = vunpack.c.l.b16 %v4436
      %v4482 = vunpack.c.l.b16 %v4439
      %v4483 = vunpack.c.l.b16 %v4443
      %v4484 = vunpack.c.l.b16 %v4446
      %v4485 = vunpack.c.l.b16 %v4450
      %v4486 = vunpack.c.l.b16 %v4453
      %v4487 = vpack.c.b16 %v4472, %v4471
      %v4488 = vpack.c.b16 %v4474, %v4473
      %v4489 = vpack.c.b16 %v4476, %v4475
      %v4490 = vpack.c.b16 %v4478, %v4477
      %v4491 = vpack.c.b16 %v4480, %v4479
      %v4492 = vpack.c.b16 %v4482, %v4481
      %v4493 = vpack.c.b16 %v4484, %v4483
      %v4494 = vpack.c.b16 %v4486, %v4485
      %v4519 = vunpack.c.l.b16 %v4455
      %v4520 = vunpack.c.l.b16 %v4456
      %v4521 = vunpack.c.l.b16 %v4457
      %v4522 = vunpack.c.l.b16 %v4458
      %v4523 = vunpack.c.l.b16 %v4459
      %v4524 = vunpack.c.l.b16 %v4460
      %v4525 = vunpack.c.l.b16 %v4461
      %v4526 = vunpack.c.l.b16 %v4462
      %v4527 = vunpack.c.l.b16 %v4463
      %v4528 = vunpack.c.l.b16 %v4464
      %v4529 = vunpack.c.l.b16 %v4465
      %v4530 = vunpack.c.l.b16 %v4466
      %v4531 = vunpack.c.l.b16 %v4467
      %v4532 = vunpack.c.l.b16 %v4468
      %v4533 = vunpack.c.l.b16 %v4469
      %v4534 = vunpack.c.l.b16 %v4470
      %v4535 = vpack.c.b16 %v4520, %v4519
      %v4536 = vpack.c.b16 %v4522, %v4521
      %v4537 = vpack.c.b16 %v4524, %v4523
      %v4538 = vpack.c.b16 %v4526, %v4525
      %v4539 = vpack.c.b16 %v4528, %v4527
      %v4540 = vpack.c.b16 %v4530, %v4529
      %v4541 = vpack.c.b16 %v4532, %v4531
      %v4542 = vpack.c.b16 %v4534, %v4533
      %4551 = vmatprep.subr.bf16.mxu0 0
      %4552 = vmatpush1.bf16.msra.mxu0 %v4542
      %4553 = vmatprep.subr.bf16.mxu0 0
      %4554 = vmatpush1.bf16.msra.mxu0 %v4541
      %4555 = vmatprep.subr.bf16.mxu0 0
      %4556 = vmatpush1.bf16.msra.mxu0 %v4540
      %4557 = vmatprep.subr.bf16.mxu0 0
      %4558 = vmatpush1.bf16.msra.mxu0 %v4539
      %4559 = vmatprep.subr.bf16.mxu0 0
      %4560 = vmatpush1.bf16.msra.mxu0 %v4538
      %4561 = vmatprep.subr.bf16.mxu0 0
      %4562 = vmatpush1.bf16.msra.mxu0 %v4537
      %4563 = vmatprep.subr.bf16.mxu0 0
      %4564 = vmatpush1.bf16.msra.mxu0 %v4536
      %4565 = vmatprep.subr.bf16.mxu0 0
      %4566 = vmatpush1.bf16.msra.mxu0 %v4535
      %4567 = vmatprep.subr.bf16.mxu0 0
      %4568 = vmatpush2.bf16.msra.mxu0 0
      %4569 = vmatprep.subr.bf16.mxu0 0
      %4570 = vmatpush2.bf16.msra.mxu0 0
      %4571 = vmatprep.subr.bf16.mxu0 0
      %4572 = vmatpush2.bf16.msra.mxu0 0
      %4573 = vmatprep.subr.bf16.mxu0 0
      %4574 = vmatpush2.bf16.msra.mxu0 0
      %4575 = vmatprep.subr.bf16.mxu0 0
      %4576 = vmatpush2.bf16.msra.mxu0 0
      %4577 = vmatprep.subr.bf16.mxu0 0
      %4578 = vmatpush2.bf16.msra.mxu0 0
      %4579 = vmatprep.subr.bf16.mxu0 0
      %4580 = vmatpush2.bf16.msra.mxu0 0
      %4581 = vmatprep.subr.bf16.mxu0 0
      %4582 = vmatpush2.bf16.msra.mxu0 0
      %4583 = vmatprep.mubr.bf16.mxu0 0
      %4584 = vmatmul.mubr.bf16.gmra.mxu0 %v4487
      %v4585 = vpop.f32.mrf.mxu0
      %v4586 = vadd.f32 0.0, %v4585
      %v4587 = vpop.f32.mrf.mxu0
      %v4588 = vpop.f32.mrf.mxu0
      %v4589 = vadd.f32 0.0, %v4588
      %v4590 = vpop.f32.mrf.mxu0
      %4591 = vmatprep.mubr.bf16.mxu0 0
      %4592 = vmatmul.mubr.bf16.gmra.mxu0 %v4488
      %v4593 = vpop.f32.mrf.mxu0
      %v4594 = vadd.f32 0.0, %v4593
      %v4595 = vpop.f32.mrf.mxu0
      %v4596 = vpop.f32.mrf.mxu0
      %v4597 = vadd.f32 0.0, %v4596
      %v4598 = vpop.f32.mrf.mxu0
      %4599 = vmatprep.mubr.bf16.mxu0 0
      %4600 = vmatmul.mubr.bf16.gmra.mxu0 %v4489
      %v4601 = vpop.f32.mrf.mxu0
      %v4602 = vadd.f32 0.0, %v4601
      %v4603 = vpop.f32.mrf.mxu0
      %v4604 = vpop.f32.mrf.mxu0
      %v4605 = vadd.f32 0.0, %v4604
      %v4606 = vpop.f32.mrf.mxu0
      %4607 = vmatprep.mubr.bf16.mxu0 0
      %4608 = vmatmul.mubr.bf16.gmra.mxu0 %v4490
      %v4609 = vpop.f32.mrf.mxu0
      %v4610 = vadd.f32 0.0, %v4609
      %v4611 = vpop.f32.mrf.mxu0
      %v4612 = vpop.f32.mrf.mxu0
      %v4613 = vadd.f32 0.0, %v4612
      %v4614 = vpop.f32.mrf.mxu0
      %4615 = vmatprep.mubr.bf16.mxu0 0
      %4616 = vmatmul.mubr.bf16.gmra.mxu0 %v4491
      %v4617 = vpop.f32.mrf.mxu0
      %v4618 = vadd.f32 0.0, %v4617
      %v4619 = vpop.f32.mrf.mxu0
      %v4620 = vpop.f32.mrf.mxu0
      %v4621 = vadd.f32 0.0, %v4620
      %v4622 = vpop.f32.mrf.mxu0
      %4623 = vmatprep.mubr.bf16.mxu0 0
      %4624 = vmatmul.mubr.bf16.gmra.mxu0 %v4492
      %v4625 = vpop.f32.mrf.mxu0
      %v4626 = vadd.f32 0.0, %v4625
      %v4627 = vpop.f32.mrf.mxu0
      %v4628 = vpop.f32.mrf.mxu0
      %v4629 = vadd.f32 0.0, %v4628
      %v4630 = vpop.f32.mrf.mxu0
      %4631 = vmatprep.mubr.bf16.mxu0 0
      %4632 = vmatmul.mubr.bf16.gmra.mxu0 %v4493
      %v4633 = vpop.f32.mrf.mxu0
      %v4634 = vadd.f32 0.0, %v4633
      %v4635 = vpop.f32.mrf.mxu0
      %v4636 = vpop.f32.mrf.mxu0
      %v4637 = vadd.f32 0.0, %v4636
      %v4638 = vpop.f32.mrf.mxu0
      %4639 = vmatprep.mubr.bf16.mxu0 0
      %4640 = vmatmul.mubr.bf16.gmra.mxu0 %v4494
      %v4641 = vpop.f32.mrf.mxu0
      %v4642 = vadd.f32 0.0, %v4641
      %v4643 = vpop.f32.mrf.mxu0
      %v4644 = vpop.f32.mrf.mxu0
      %v4645 = vadd.f32 0.0, %v4644
      %v4646 = vpop.f32.mrf.mxu0
      %4647 = vdwg.mxu0
      %v4648 = vadd.f32 %v4345, %v4586
      %v4649 = vadd.f32 %v4346, %v4589
      %v4650 = vadd.f32 %v4347, %v4594
      %v4651 = vadd.f32 %v4348, %v4597
      %v4652 = vadd.f32 %v4349, %v4602
      %v4653 = vadd.f32 %v4350, %v4605
      %v4654 = vadd.f32 %v4351, %v4610
      %v4655 = vadd.f32 %v4352, %v4613
      %v4656 = vadd.f32 %v4353, %v4618
      %v4657 = vadd.f32 %v4354, %v4621
      %v4658 = vadd.f32 %v4355, %v4626
      %v4659 = vadd.f32 %v4356, %v4629
      %v4660 = vadd.f32 %v4357, %v4634
      %v4661 = vadd.f32 %v4358, %v4637
      %v4662 = vadd.f32 %v4359, %v4642
      %v4663 = vadd.f32 %v4360, %v4645
      %v4667 = vrot.slane %v4369, 5
      %v4668 = vrot.slane %v4667, 4
      %v4669 = vrot.slane %v3539, 5
      %v4670 = vsel %vm4397, %v4668, %v4669
      %v4671 = vrot.slane %v4669, 4
      %v4672 = vrot.slane %v3540, 5
      %v4673 = vsel %vm4397, %v4671, %v4672
      %s4674 = scalar_lea.vmem %s3, 320
      %v4675 = vld [vmem:[%s4674] sm:$0xf]
      %v4676 = vld [vmem:[%s4674 + $0x4] sm:$0xf]
      %v4677 = vld [vmem:[%s4674 + $0x8] sm:$0xf]
      %v4678 = vld [vmem:[%s4674 + $0xc] sm:$0xf]
      %v4679 = vld [vmem:[%s4674 + $0x10] sm:$0xf]
      %v4680 = vld [vmem:[%s4674 + $0x14] sm:$0xf]
      %v4681 = vld [vmem:[%s4674 + $0x18] sm:$0xf]
      %v4682 = vld [vmem:[%s4674 + $0x1c] sm:$0xf]
      %v4683 = vld [vmem:[%s4674 + $0x20] sm:$0xf]
      %v4684 = vld [vmem:[%s4674 + $0x24] sm:$0xf]
      %v4685 = vld [vmem:[%s4674 + $0x28] sm:$0xf]
      %v4686 = vld [vmem:[%s4674 + $0x2c] sm:$0xf]
      %v4687 = vld [vmem:[%s4674 + $0x30] sm:$0xf]
      %v4688 = vld [vmem:[%s4674 + $0x34] sm:$0xf]
      %v4689 = vld [vmem:[%s4674 + $0x38] sm:$0xf]
      %v4690 = vld [vmem:[%s4674 + $0x3c] sm:$0xf]
      %v4691 = vunpack.c.l.b16 %v4670
      %v4692 = vunpack.c.l.b16 %v4673
      %v4693 = vpack.c.b16 %v4692, %v4691
      %v4711 = vunpack.c.l.b16 %v4675
      %v4712 = vunpack.c.l.b16 %v4676
      %v4713 = vunpack.c.l.b16 %v4677
      %v4714 = vunpack.c.l.b16 %v4678
      %v4715 = vunpack.c.l.b16 %v4679
      %v4716 = vunpack.c.l.b16 %v4680
      %v4717 = vunpack.c.l.b16 %v4681
      %v4718 = vunpack.c.l.b16 %v4682
      %v4719 = vunpack.c.l.b16 %v4683
      %v4720 = vunpack.c.l.b16 %v4684
      %v4721 = vunpack.c.l.b16 %v4685
      %v4722 = vunpack.c.l.b16 %v4686
      %v4723 = vunpack.c.l.b16 %v4687
      %v4724 = vunpack.c.l.b16 %v4688
      %v4725 = vunpack.c.l.b16 %v4689
      %v4726 = vunpack.c.l.b16 %v4690
      %v4727 = vpack.c.b16 %v4712, %v4711
      %v4728 = vpack.c.b16 %v4714, %v4713
      %v4729 = vpack.c.b16 %v4716, %v4715
      %v4730 = vpack.c.b16 %v4718, %v4717
      %v4731 = vpack.c.b16 %v4720, %v4719
      %v4732 = vpack.c.b16 %v4722, %v4721
      %v4733 = vpack.c.b16 %v4724, %v4723
      %v4734 = vpack.c.b16 %v4726, %v4725
      %4743 = vmatprep.subr.bf16.mxu0 0
      %4744 = vmatpush1.bf16.msra.mxu0 %v4734
      %4745 = vmatprep.subr.bf16.mxu0 0
      %4746 = vmatpush1.bf16.msra.mxu0 %v4733
      %4747 = vmatprep.subr.bf16.mxu0 0
      %4748 = vmatpush1.bf16.msra.mxu0 %v4732
      %4749 = vmatprep.subr.bf16.mxu0 0
      %4750 = vmatpush1.bf16.msra.mxu0 %v4731
      %4751 = vmatprep.subr.bf16.mxu0 0
      %4752 = vmatpush1.bf16.msra.mxu0 %v4730
      %4753 = vmatprep.subr.bf16.mxu0 0
      %4754 = vmatpush1.bf16.msra.mxu0 %v4729
      %4755 = vmatprep.subr.bf16.mxu0 0
      %4756 = vmatpush1.bf16.msra.mxu0 %v4728
      %4757 = vmatprep.subr.bf16.mxu0 0
      %4758 = vmatpush1.bf16.msra.mxu0 %v4727
      %4759 = vmatprep.subr.bf16.mxu0 0
      %4760 = vmatpush2.bf16.msra.mxu0 0
      %4761 = vmatprep.subr.bf16.mxu0 0
      %4762 = vmatpush2.bf16.msra.mxu0 0
      %4763 = vmatprep.subr.bf16.mxu0 0
      %4764 = vmatpush2.bf16.msra.mxu0 0
      %4765 = vmatprep.subr.bf16.mxu0 0
      %4766 = vmatpush2.bf16.msra.mxu0 0
      %4767 = vmatprep.subr.bf16.mxu0 0
      %4768 = vmatpush2.bf16.msra.mxu0 0
      %4769 = vmatprep.subr.bf16.mxu0 0
      %4770 = vmatpush2.bf16.msra.mxu0 0
      %4771 = vmatprep.subr.bf16.mxu0 0
      %4772 = vmatpush2.bf16.msra.mxu0 0
      %4773 = vmatprep.subr.bf16.mxu0 0
      %4774 = vmatpush2.bf16.msra.mxu0 0
      %4775 = vmatprep.mubr.bf16.mxu0 0
      %4776 = vmatmul.mubr.bf16.gmra.mxu0 %v4488
      %v4777 = vpop.f32.mrf.mxu0
      %v4778 = vadd.f32 0.0, %v4777
      %v4779 = vpop.f32.mrf.mxu0
      %v4780 = vpop.f32.mrf.mxu0
      %v4781 = vadd.f32 0.0, %v4780
      %v4782 = vpop.f32.mrf.mxu0
      %4783 = vmatprep.mubr.bf16.mxu0 0
      %4784 = vmatmul.mubr.bf16.gmra.mxu0 %v4489
      %v4785 = vpop.f32.mrf.mxu0
      %v4786 = vadd.f32 0.0, %v4785
      %v4787 = vpop.f32.mrf.mxu0
      %v4788 = vpop.f32.mrf.mxu0
      %v4789 = vadd.f32 0.0, %v4788
      %v4790 = vpop.f32.mrf.mxu0
      %4791 = vmatprep.mubr.bf16.mxu0 0
      %4792 = vmatmul.mubr.bf16.gmra.mxu0 %v4490
      %v4793 = vpop.f32.mrf.mxu0
      %v4794 = vadd.f32 0.0, %v4793
      %v4795 = vpop.f32.mrf.mxu0
      %v4796 = vpop.f32.mrf.mxu0
      %v4797 = vadd.f32 0.0, %v4796
      %v4798 = vpop.f32.mrf.mxu0
      %4799 = vmatprep.mubr.bf16.mxu0 0
      %4800 = vmatmul.mubr.bf16.gmra.mxu0 %v4491
      %v4801 = vpop.f32.mrf.mxu0
      %v4802 = vadd.f32 0.0, %v4801
      %v4803 = vpop.f32.mrf.mxu0
      %v4804 = vpop.f32.mrf.mxu0
      %v4805 = vadd.f32 0.0, %v4804
      %v4806 = vpop.f32.mrf.mxu0
      %4807 = vmatprep.mubr.bf16.mxu0 0
      %4808 = vmatmul.mubr.bf16.gmra.mxu0 %v4492
      %v4809 = vpop.f32.mrf.mxu0
      %v4810 = vadd.f32 0.0, %v4809
      %v4811 = vpop.f32.mrf.mxu0
      %v4812 = vpop.f32.mrf.mxu0
      %v4813 = vadd.f32 0.0, %v4812
      %v4814 = vpop.f32.mrf.mxu0
      %4815 = vmatprep.mubr.bf16.mxu0 0
      %4816 = vmatmul.mubr.bf16.gmra.mxu0 %v4493
      %v4817 = vpop.f32.mrf.mxu0
      %v4818 = vadd.f32 0.0, %v4817
      %v4819 = vpop.f32.mrf.mxu0
      %v4820 = vpop.f32.mrf.mxu0
      %v4821 = vadd.f32 0.0, %v4820
      %v4822 = vpop.f32.mrf.mxu0
      %4823 = vmatprep.mubr.bf16.mxu0 0
      %4824 = vmatmul.mubr.bf16.gmra.mxu0 %v4494
      %v4825 = vpop.f32.mrf.mxu0
      %v4826 = vadd.f32 0.0, %v4825
      %v4827 = vpop.f32.mrf.mxu0
      %v4828 = vpop.f32.mrf.mxu0
      %v4829 = vadd.f32 0.0, %v4828
      %v4830 = vpop.f32.mrf.mxu0
      %4831 = vmatprep.mubr.bf16.mxu0 0
      %4832 = vmatmul.mubr.bf16.gmra.mxu0 %v4693
      %v4833 = vpop.f32.mrf.mxu0
      %v4834 = vadd.f32 0.0, %v4833
      %v4835 = vpop.f32.mrf.mxu0
      %v4836 = vpop.f32.mrf.mxu0
      %v4837 = vadd.f32 0.0, %v4836
      %v4838 = vpop.f32.mrf.mxu0
      %4839 = vdwg.mxu0
      %v4840 = vadd.f32 %v4648, %v4778
      %v4841 = vadd.f32 %v4649, %v4781
      %v4842 = vadd.f32 %v4650, %v4786
      %v4843 = vadd.f32 %v4651, %v4789
      %v4844 = vadd.f32 %v4652, %v4794
      %v4845 = vadd.f32 %v4653, %v4797
      %v4846 = vadd.f32 %v4654, %v4802
      %v4847 = vadd.f32 %v4655, %v4805
      %v4848 = vadd.f32 %v4656, %v4810
      %v4849 = vadd.f32 %v4657, %v4813
      %v4850 = vadd.f32 %v4658, %v4818
      %v4851 = vadd.f32 %v4659, %v4821
      %v4852 = vadd.f32 %v4660, %v4826
      %v4853 = vadd.f32 %v4661, %v4829
      %v4854 = vadd.f32 %v4662, %v4834
      %v4855 = vadd.f32 %v4663, %v4837
      %v4859 = vrot.slane %v4370, 5
      %v4860 = vrot.slane %v4859, 4
      %v4861 = vrot.slane %v3542, 5
      %v4862 = vsel %vm4397, %v4860, %v4861
      %v4863 = vrot.slane %v4861, 4
      %v4864 = vrot.slane %v3543, 5
      %v4865 = vsel %vm4397, %v4863, %v4864
      %s4866 = scalar_lea.vmem %s3, 512
      %v4867 = vld [vmem:[%s4866] sm:$0xf]
      %v4868 = vld [vmem:[%s4866 + $0x4] sm:$0xf]
      %v4869 = vld [vmem:[%s4866 + $0x8] sm:$0xf]
      %v4870 = vld [vmem:[%s4866 + $0xc] sm:$0xf]
      %v4871 = vld [vmem:[%s4866 + $0x10] sm:$0xf]
      %v4872 = vld [vmem:[%s4866 + $0x14] sm:$0xf]
      %v4873 = vld [vmem:[%s4866 + $0x18] sm:$0xf]
      %v4874 = vld [vmem:[%s4866 + $0x1c] sm:$0xf]
      %v4875 = vld [vmem:[%s4866 + $0x20] sm:$0xf]
      %v4876 = vld [vmem:[%s4866 + $0x24] sm:$0xf]
      %v4877 = vld [vmem:[%s4866 + $0x28] sm:$0xf]
      %v4878 = vld [vmem:[%s4866 + $0x2c] sm:$0xf]
      %v4879 = vld [vmem:[%s4866 + $0x30] sm:$0xf]
      %v4880 = vld [vmem:[%s4866 + $0x34] sm:$0xf]
      %v4881 = vld [vmem:[%s4866 + $0x38] sm:$0xf]
      %v4882 = vld [vmem:[%s4866 + $0x3c] sm:$0xf]
      %v4883 = vunpack.c.l.b16 %v4862
      %v4884 = vunpack.c.l.b16 %v4865
      %v4885 = vpack.c.b16 %v4884, %v4883
      %v4903 = vunpack.c.l.b16 %v4867
      %v4904 = vunpack.c.l.b16 %v4868
      %v4905 = vunpack.c.l.b16 %v4869
      %v4906 = vunpack.c.l.b16 %v4870
      %v4907 = vunpack.c.l.b16 %v4871
      %v4908 = vunpack.c.l.b16 %v4872
      %v4909 = vunpack.c.l.b16 %v4873
      %v4910 = vunpack.c.l.b16 %v4874
      %v4911 = vunpack.c.l.b16 %v4875
      %v4912 = vunpack.c.l.b16 %v4876
      %v4913 = vunpack.c.l.b16 %v4877
      %v4914 = vunpack.c.l.b16 %v4878
      %v4915 = vunpack.c.l.b16 %v4879
      %v4916 = vunpack.c.l.b16 %v4880
      %v4917 = vunpack.c.l.b16 %v4881
      %v4918 = vunpack.c.l.b16 %v4882
      %v4919 = vpack.c.b16 %v4904, %v4903
      %v4920 = vpack.c.b16 %v4906, %v4905
      %v4921 = vpack.c.b16 %v4908, %v4907
      %v4922 = vpack.c.b16 %v4910, %v4909
      %v4923 = vpack.c.b16 %v4912, %v4911
      %v4924 = vpack.c.b16 %v4914, %v4913
      %v4925 = vpack.c.b16 %v4916, %v4915
      %v4926 = vpack.c.b16 %v4918, %v4917
      %4935 = vmatprep.subr.bf16.mxu0 0
      %4936 = vmatpush1.bf16.msra.mxu0 %v4926
      %4937 = vmatprep.subr.bf16.mxu0 0
      %4938 = vmatpush1.bf16.msra.mxu0 %v4925
      %4939 = vmatprep.subr.bf16.mxu0 0
      %4940 = vmatpush1.bf16.msra.mxu0 %v4924
      %4941 = vmatprep.subr.bf16.mxu0 0
      %4942 = vmatpush1.bf16.msra.mxu0 %v4923
      %4943 = vmatprep.subr.bf16.mxu0 0
      %4944 = vmatpush1.bf16.msra.mxu0 %v4922
      %4945 = vmatprep.subr.bf16.mxu0 0
      %4946 = vmatpush1.bf16.msra.mxu0 %v4921
      %4947 = vmatprep.subr.bf16.mxu0 0
      %4948 = vmatpush1.bf16.msra.mxu0 %v4920
      %4949 = vmatprep.subr.bf16.mxu0 0
      %4950 = vmatpush1.bf16.msra.mxu0 %v4919
      %4951 = vmatprep.subr.bf16.mxu0 0
      %4952 = vmatpush2.bf16.msra.mxu0 0
      %4953 = vmatprep.subr.bf16.mxu0 0
      %4954 = vmatpush2.bf16.msra.mxu0 0
      %4955 = vmatprep.subr.bf16.mxu0 0
      %4956 = vmatpush2.bf16.msra.mxu0 0
      %4957 = vmatprep.subr.bf16.mxu0 0
      %4958 = vmatpush2.bf16.msra.mxu0 0
      %4959 = vmatprep.subr.bf16.mxu0 0
      %4960 = vmatpush2.bf16.msra.mxu0 0
      %4961 = vmatprep.subr.bf16.mxu0 0
      %4962 = vmatpush2.bf16.msra.mxu0 0
      %4963 = vmatprep.subr.bf16.mxu0 0
      %4964 = vmatpush2.bf16.msra.mxu0 0
      %4965 = vmatprep.subr.bf16.mxu0 0
      %4966 = vmatpush2.bf16.msra.mxu0 0
      %4967 = vmatprep.mubr.bf16.mxu0 0
      %4968 = vmatmul.mubr.bf16.gmra.mxu0 %v4489
      %v4969 = vpop.f32.mrf.mxu0
      %v4970 = vadd.f32 0.0, %v4969
      %v4971 = vpop.f32.mrf.mxu0
      %v4972 = vpop.f32.mrf.mxu0
      %v4973 = vadd.f32 0.0, %v4972
      %v4974 = vpop.f32.mrf.mxu0
      %4975 = vmatprep.mubr.bf16.mxu0 0
      %4976 = vmatmul.mubr.bf16.gmra.mxu0 %v4490
      %v4977 = vpop.f32.mrf.mxu0
      %v4978 = vadd.f32 0.0, %v4977
      %v4979 = vpop.f32.mrf.mxu0
      %v4980 = vpop.f32.mrf.mxu0
      %v4981 = vadd.f32 0.0, %v4980
      %v4982 = vpop.f32.mrf.mxu0
      %4983 = vmatprep.mubr.bf16.mxu0 0
      %4984 = vmatmul.mubr.bf16.gmra.mxu0 %v4491
      %v4985 = vpop.f32.mrf.mxu0
      %v4986 = vadd.f32 0.0, %v4985
      %v4987 = vpop.f32.mrf.mxu0
      %v4988 = vpop.f32.mrf.mxu0
      %v4989 = vadd.f32 0.0, %v4988
      %v4990 = vpop.f32.mrf.mxu0
      %4991 = vmatprep.mubr.bf16.mxu0 0
      %4992 = vmatmul.mubr.bf16.gmra.mxu0 %v4492
      %v4993 = vpop.f32.mrf.mxu0
      %v4994 = vadd.f32 0.0, %v4993
      %v4995 = vpop.f32.mrf.mxu0
      %v4996 = vpop.f32.mrf.mxu0
      %v4997 = vadd.f32 0.0, %v4996
      %v4998 = vpop.f32.mrf.mxu0
      %4999 = vmatprep.mubr.bf16.mxu0 0
      %5000 = vmatmul.mubr.bf16.gmra.mxu0 %v4493
      %v5001 = vpop.f32.mrf.mxu0
      %v5002 = vadd.f32 0.0, %v5001
      %v5003 = vpop.f32.mrf.mxu0
      %v5004 = vpop.f32.mrf.mxu0
      %v5005 = vadd.f32 0.0, %v5004
      %v5006 = vpop.f32.mrf.mxu0
      %5007 = vmatprep.mubr.bf16.mxu0 0
      %5008 = vmatmul.mubr.bf16.gmra.mxu0 %v4494
      %v5009 = vpop.f32.mrf.mxu0
      %v5010 = vadd.f32 0.0, %v5009
      %v5011 = vpop.f32.mrf.mxu0
      %v5012 = vpop.f32.mrf.mxu0
      %v5013 = vadd.f32 0.0, %v5012
      %v5014 = vpop.f32.mrf.mxu0
      %5015 = vmatprep.mubr.bf16.mxu0 0
      %5016 = vmatmul.mubr.bf16.gmra.mxu0 %v4693
      %v5017 = vpop.f32.mrf.mxu0
      %v5018 = vadd.f32 0.0, %v5017
      %v5019 = vpop.f32.mrf.mxu0
      %v5020 = vpop.f32.mrf.mxu0
      %v5021 = vadd.f32 0.0, %v5020
      %v5022 = vpop.f32.mrf.mxu0
      %5023 = vmatprep.mubr.bf16.mxu0 0
      %5024 = vmatmul.mubr.bf16.gmra.mxu0 %v4885
      %v5025 = vpop.f32.mrf.mxu0
      %v5026 = vadd.f32 0.0, %v5025
      %v5027 = vpop.f32.mrf.mxu0
      %v5028 = vpop.f32.mrf.mxu0
      %v5029 = vadd.f32 0.0, %v5028
      %v5030 = vpop.f32.mrf.mxu0
      %5031 = vdwg.mxu0
      %v5032 = vadd.f32 %v4840, %v4970
      %v5033 = vadd.f32 %v4841, %v4973
      %v5034 = vadd.f32 %v4842, %v4978
      %v5035 = vadd.f32 %v4843, %v4981
      %v5036 = vadd.f32 %v4844, %v4986
      %v5037 = vadd.f32 %v4845, %v4989
      %v5038 = vadd.f32 %v4846, %v4994
      %v5039 = vadd.f32 %v4847, %v4997
      %v5040 = vadd.f32 %v4848, %v5002
      %v5041 = vadd.f32 %v4849, %v5005
      %v5042 = vadd.f32 %v4850, %v5010
      %v5043 = vadd.f32 %v4851, %v5013
      %v5044 = vadd.f32 %v4852, %v5018
      %v5045 = vadd.f32 %v4853, %v5021
      %v5046 = vadd.f32 %v4854, %v5026
      %v5047 = vadd.f32 %v4855, %v5029
      %v5048 = vld [vmem:[%s4] sm:$0x1]
      %v5050 = vlaneseq
      %v5051 = vshrl.u32 %v5050, 7
      %v5052 = vsub.s32 0, %v5051
      %v5053 = vrot.slane %v5048, %v5052
      %v5055 = vadd.f32 %v5032, %v5053
      %v5056 = vadd.f32 %v5033, %v5053
      %v5057 = vadd.f32 %v5034, %v5053
      %v5058 = vadd.f32 %v5035, %v5053
      %v5059 = vadd.f32 %v5036, %v5053
      %v5060 = vadd.f32 %v5037, %v5053
      %v5061 = vadd.f32 %v5038, %v5053
      %v5062 = vadd.f32 %v5039, %v5053
      %v5063 = vadd.f32 %v5040, %v5053
      %v5064 = vadd.f32 %v5041, %v5053
      %v5065 = vadd.f32 %v5042, %v5053
      %v5066 = vadd.f32 %v5043, %v5053
      %v5067 = vadd.f32 %v5044, %v5053
      %v5068 = vadd.f32 %v5045, %v5053
      %v5069 = vadd.f32 %v5046, %v5053
      %v5070 = vadd.f32 %v5047, %v5053
      %s5071 = sadd.s32 48, %s373
      %s5072 = scalar_lea.vmem [#allocation2], %s5071
      %v5073 = vld [vmem:[%s5072 + $0x1] sm:$0xff]
      %v5074 = vld [vmem:[%s5072 + $0x9] sm:$0xff]
      %v5075 = vld [vmem:[%s5072 + $0x19] sm:$0xff]
      %v5076 = vld [vmem:[%s5072 + $0x21] sm:$0xff]
      %v5077 = vld [vmem:[%s5072 + $0x31] sm:$0xff]
      %v5078 = vld [vmem:[%s5072 + $0x39] sm:$0xff]
      %v5079 = vld [vmem:[%s5072 + $0x49] sm:$0xff]
      %v5080 = vld [vmem:[%s5072 + $0x51] sm:$0xff]
      %v5081 = vld [vmem:[%s5072 + $0x61] sm:$0xff]
      %v5082 = vld [vmem:[%s5072 + $0x69] sm:$0xff]
      %v5083 = vld [vmem:[%s5072 + $0x79] sm:$0xff]
      %v5084 = vld [vmem:[%s5072 + $0x81] sm:$0xff]
      %v5085 = vld [vmem:[%s5072 + $0x91] sm:$0xff]
      %v5086 = vld [vmem:[%s5072 + $0x99] sm:$0xff]
      %v5087 = vld [vmem:[%s5072 + $0xa9] sm:$0xff]
      %v5088 = vld [vmem:[%s5072 + $0xb1] sm:$0xff]
      %v5089 = vadd.f32 %v5055, %v5073
      %v5090 = vadd.f32 %v5056, %v5074
      %v5091 = vadd.f32 %v5057, %v5075
      %v5092 = vadd.f32 %v5058, %v5076
      %v5093 = vadd.f32 %v5059, %v5077
      %v5094 = vadd.f32 %v5060, %v5078
      %v5095 = vadd.f32 %v5061, %v5079
      %v5096 = vadd.f32 %v5062, %v5080
      %v5097 = vadd.f32 %v5063, %v5081
      %v5098 = vadd.f32 %v5064, %v5082
      %v5099 = vadd.f32 %v5065, %v5083
      %v5100 = vadd.f32 %v5066, %v5084
      %v5101 = vadd.f32 %v5067, %v5085
      %v5102 = vadd.f32 %v5068, %v5086
      %v5103 = vadd.f32 %v5069, %v5087
      %v5104 = vadd.f32 %v5070, %v5088
      %5105 = vst [vmem:[%s202] sm:$0xff] %v5089
      %5106 = vst [vmem:[%s202 + $0x8] sm:$0xff] %v5090
      %5107 = vst [vmem:[%s202 + $0x10] sm:$0xff] %v5091
      %5108 = vst [vmem:[%s202 + $0x18] sm:$0xff] %v5092
      %5109 = vst [vmem:[%s202 + $0x20] sm:$0xff] %v5093
      %5110 = vst [vmem:[%s202 + $0x28] sm:$0xff] %v5094
      %5111 = vst [vmem:[%s202 + $0x30] sm:$0xff] %v5095
      %5112 = vst [vmem:[%s202 + $0x38] sm:$0xff] %v5096
      %5113 = vst [vmem:[%s202 + $0x40] sm:$0xff] %v5097
      %5114 = vst [vmem:[%s202 + $0x48] sm:$0xff] %v5098
      %5115 = vst [vmem:[%s202 + $0x50] sm:$0xff] %v5099
      %5116 = vst [vmem:[%s202 + $0x58] sm:$0xff] %v5100
      %5117 = vst [vmem:[%s202 + $0x60] sm:$0xff] %v5101
      %5118 = vst [vmem:[%s202 + $0x68] sm:$0xff] %v5102
      %5119 = vst [vmem:[%s202 + $0x70] sm:$0xff] %v5103
      %5120 = vst [vmem:[%s202 + $0x78] sm:$0xff] %v5104
      %s5121 = smul.u32 8, %s21
      %p5122 = scmp.lt.s32.totalorder %s20, 1
      %s5123 = scalar_select %p5122, %s20, 1
      %p5124 = scmp.lt.s32.totalorder %s5121, 23
      %s5125 = scalar_select %p5124, %s5121, 23
      %s5126 = smul.addr %s5125, 2
      %s5127 = smul.addr %s5123, 48
      %s5128 = sadd.s32 %s5126, %s5127
      %s5129 = smul.addr %s5128, 8
      %s5130 = scalar_lea.vmem %s5, %s5129
      // Predicated region
      $region127: #{residual_conv_unit.1} parent=35 // pred_check
        %p5131 = pneg %p132
      $region128: #{residual_conv_unit.1} parent=35 // pred_check_branch
        %5133 = sbr.rel (%p5131) target = $region130
      $region129: #{residual_conv_unit.1} parent=35 // pred_region
        %s5134 = smul.u32 8, %s21
      $region130: #{residual_conv_unit.1} parent=35 // pred_fallthru
        _
    $region36: #{residual_conv_unit.1} parent=5 // pred_fallthru
      _
    %p5135 = scmp.le.s32.totalorder 2, %s11
    // Predicated region
    $region131: #{residual_conv_unit.1} parent=5 // pred_check
      %p5136 = pneg %p5135
    $region132: #{residual_conv_unit.1} parent=5 // pred_check_branch
      %5138 = sbr.rel (%p5136) target = $region134
    $region133: #{residual_conv_unit.1} parent=5 // pred_region
      %s5139 = ssub.s32 %s11, 2
      // Predicated region
      $region135: #{residual_conv_unit.1} parent=133 // pred_check
        %p5140 = pneg %p138
      $region136: #{residual_conv_unit.1} parent=133 // pred_check_branch
        %5142 = sbr.rel (%p5140) target = $region138
      $region137: #{residual_conv_unit.1} parent=133 // pred_region
        %s5143 = smul.u32 8, %s23
        %p5144 = scmp.lt.s32.totalorder %s22, 1
        %s5145 = scalar_select %p5144, %s22, 1
        %p5146 = scmp.lt.s32.totalorder %s5143, 23
        %s5147 = scalar_select %p5146, %s5143, 23
        %s5148 = smul.addr %s5147, 2
        %s5149 = smul.addr %s5145, 48
        %s5150 = sadd.s32 %s5148, %s5149
        %s5151 = smul.addr %s5150, 8
        %s5152 = scalar_lea.vmem %s5, %s5151
      $region138: #{residual_conv_unit.1} parent=133 // pred_fallthru
        _
    $region134: #{residual_conv_unit.1} parent=5 // pred_fallthru
      _
  $region6: #{residual_conv_unit.1} parent=0 // loop_footer
    %s15 = sadd.s32 1, %s11
  $region7: #{residual_conv_unit.1} parent=0 // loop_footer_branch
    %10 = sbr.rel target = $region3
  $region8: #{residual_conv_unit.1} parent=0 // loop_exit
    _
  %5153 = vsyncmov [#allocation4]
  %s5154 = vpop.sfrf %5153
  %p5155 = scmp.eq.s32.totalorder %s5154, 0
  %p5156 = pneg %p5155
  %5158 = shalt.err (%p5156)
  %s5159 = scalar_lea.sflag [#allocation4], 1
  %5160 = vsyncmov %s5159
  %s5161 = vpop.sfrf %5160
  %p5162 = scmp.eq.s32.totalorder %s5161, 0
  %p5163 = pneg %p5162
  %5165 = shalt.err (%p5163)

</llo_original>
